<compile_context>
chip_gen: v7x
topology: tpu7x:2x2x1
jax: 0.10.0
libtpu: 0.0.40
codegen_flags: <defaults>
</compile_context>

<pallas_src>
import functools

import jax
import jax.numpy as jnp
from jax.experimental import pallas as pl
from jax.experimental.pallas import tpu as pltpu

_VMEM_LIMIT = 64 * 1024 * 1024  # explicit scoped-VMEM budget (fits v5e/v6e/v7x)


# --------------------------- in-kernel cell math --------------------------- #

def _cheb_concat(A, z, K):
    """Chebyshev diffusion terms of z, lane-concatenated into one MXU operand.

    A: (bB, N, N) bf16;  z: (bB, N, C) f32 (recursion carry stays f32).
    Returns (bB*N, (K+1)*C) bf16.
    """
    bB, N, C = z.shape
    terms = [z]
    if K >= 1:
        z1 = jnp.einsum('bij,bjc->bic', A, z.astype(jnp.bfloat16),
                        preferred_element_type=jnp.float32)
        terms.append(z1)
        zkm2, zkm1 = z, z1
        for _ in range(2, K + 1):
            zk = 2.0 * jnp.einsum('bij,bjc->bic', A, zkm1.astype(jnp.bfloat16),
                                  preferred_element_type=jnp.float32) - zkm2
            terms.append(zk)
            zkm2, zkm1 = zkm1, zk
    cat = terms[0] if K == 0 else jnp.concatenate(terms, axis=-1)
    return cat.reshape(bB * N, (K + 1) * C).astype(jnp.bfloat16)


def _dcgru_cell(A, x, h, wg, wc, bias, K, H):
    """One DCGRU cell update for a batch block (inside a kernel).

    A   : (bB, N, N) bf16        x: (bB, N, Cin) f32      h: (bB, N, H) f32
    wg  : ((K+1)*(Cin+H), 3H) bf16  -- fused [r | u | candidate-x] gate weights
    wc  : ((K+1)*H, H) bf16         -- candidate weights on diffused r*h
    bias: (1, 3H) f32               -- fused [1.0 | 1.0 | 0.0] gate biases
    """
    bB, N, _ = h.shape

    # Joint diffusion of [x, h] (linearity of the graph convolution).
    z = jnp.concatenate([x, h], axis=-1)                       # (bB, N, Cin+H)
    zt = _cheb_concat(A, z, K)                                 # (bB*N, (K+1)*(Cin+H))

    # One wide MXU pass for all gates + candidate-x contribution.
    g = jnp.dot(zt, wg, preferred_element_type=jnp.float32) + bias  # (bB*N, 3H)
    r = jax.nn.sigmoid(g[:, :H])
    u = jax.nn.sigmoid(g[:, H:2 * H])
    cx = g[:, 2 * H:]

    # Candidate h-path: diffuse r*h, one MXU pass.
    h_flat = h.reshape(bB * N, H)
    rh = (r * h_flat).reshape(bB, N, H)
    rt = _cheb_concat(A, rh, K)                                # (bB*N, (K+1)*H)
    c = jnp.tanh(cx + jnp.dot(rt, wc, preferred_element_type=jnp.float32))

    h_new = u * h_flat + (1.0 - u) * c
    return h_new.reshape(bB, N, H)


# ----------------------------- Pallas kernels ------------------------------ #

def _encoder_kernel(*refs, K, H, L):
    """All encoder layers, full time recurrence.  grid=(nB, T).

    refs = [sup, x, (wg, wc, bias) * L, h_out]
    The output block (L, bB, N, H) is the persistent recurrent state.
    """
    sup_ref, x_ref = refs[0], refs[1]
    w_refs = refs[2:2 + 3 * L]
    h_ref = refs[2 + 3 * L]
    t = pl.program_id(1)

    @pl.when(t == 0)
    def _():
        h_ref[...] = jnp.zeros_like(h_ref)          # init_hidden: zeros

    A = sup_ref[:, 0].astype(jnp.bfloat16)          # (bB, N, N)
    x = x_ref[:, 0]                                 # (bB, N, Din)
    for l in range(L):
        wg, wc, bias = (r[...] for r in w_refs[3 * l: 3 * l + 3])
        h_new = _dcgru_cell(A, x, h_ref[l], wg, wc, bias, K, H)
        h_ref[l] = h_new
        x = h_new


def _decoder_kernel(*refs, K, H, L, Dout):
    """Full autoregressive decoder: all layers + projection.  grid=(nB, T_out).

    refs = [sup, h0, (wg, wc, bias) * L, proj_w, proj_b, out, h_scr, y_scr]
    """
    sup_ref, h0_ref = refs[0], refs[1]
    w_refs = refs[2:2 + 3 * L]
    proj_w_ref = refs[2 + 3 * L]
    proj_b_ref = refs[3 + 3 * L]
    out_ref = refs[4 + 3 * L]
    h_scr = refs[5 + 3 * L]
    y_scr = refs[6 + 3 * L]
    t = pl.program_id(1)

    @pl.when(t == 0)
    def _():
        h_scr[...] = h0_ref[...]                    # encoder final hiddens
        y_scr[...] = jnp.zeros_like(y_scr)          # GO symbol

    A = sup_ref[:, 0].astype(jnp.bfloat16)          # (bB, N, N)
    x = y_scr[...]                                  # previous projected output
    for l in range(L):
        wg, wc, bias = (r[...] for r in w_refs[3 * l: 3 * l + 3])
        h_new = _dcgru_cell(A, x, h_scr[l], wg, wc, bias, K, H)
        h_scr[l] = h_new
        x = h_new

    # Fused per-node output projection.
    bB, N, _ = x.shape
    y = (jnp.dot(x.reshape(bB * N, H).astype(jnp.bfloat16), proj_w_ref[...],
                 preferred_element_type=jnp.float32)
         + proj_b_ref[...]).reshape(bB, N, Dout)

    out_ref[:, 0] = y
    y_scr[...] = y                                  # autoregressive feedback


# ------------------------------ Pallas wrappers ----------------------------- #

def _wspec(a):
    """Full-array, grid-invariant BlockSpec (weights stay resident in VMEM)."""
    nd = a.ndim
    return pl.BlockSpec(a.shape, lambda b, t, _nd=nd: (0,) * _nd)


def run_encoder(supports, enc_inputs, enc_weights, *, K, H, b_block):
    """All encoder layers in a single pallas_call.

    supports: (B, T, N, N) f32;  enc_inputs: (B, T, N, Din) f32.
    Returns (L, B, N, H) f32 final hidden states (the only thing the decoder
    consumes -- intermediate per-layer sequences never touch HBM).
    """
    B, T, N, Din = enc_inputs.shape
    L = len(enc_weights)
    assert B % b_block == 0
    nB = B // b_block
    flat_w = [w for cell in enc_weights for w in cell]      # 3 * L arrays
    kernel = functools.partial(_encoder_kernel, K=K, H=H, L=L)
    return pl.pallas_call(
        kernel,
        out_shape=jax.ShapeDtypeStruct((L, B, N, H), jnp.float32),
        grid_spec=pltpu.PrefetchScalarGridSpec(
            num_scalar_prefetch=0,
            grid=(nB, T),
            in_specs=[pl.BlockSpec((b_block, 1, N, N), lambda b, t: (b, t, 0, 0)),
                      pl.BlockSpec((b_block, 1, N, Din), lambda b, t: (b, t, 0, 0))]
                     + [_wspec(w) for w in flat_w],
            out_specs=pl.BlockSpec((L, b_block, N, H), lambda b, t: (0, b, 0, 0)),
        ),
        compiler_params=pltpu.CompilerParams(
            dimension_semantics=("parallel", "arbitrary"),
            vmem_limit_bytes=_VMEM_LIMIT),
    )(supports, enc_inputs, *flat_w)


def run_decoder(supports, h0, dec_weights, proj_w, proj_b, *,
                K, H, Dout, T_out, b_block):
    """Full decoder (all layers + projection) in a single pallas_call.

    Returns (B, T_out, N, Dout) f32 directly (no output transpose needed).
    """
    B, T, N, _ = supports.shape
    assert T_out <= T
    L = len(dec_weights)
    assert B % b_block == 0
    nB = B // b_block
    flat_w = [w for cell in dec_weights for w in cell]      # 3 * L arrays
    kernel = functools.partial(_decoder_kernel, K=K, H=H, L=L, Dout=Dout)
    return pl.pallas_call(
        kernel,
        out_shape=jax.ShapeDtypeStruct((B, T_out, N, Dout), jnp.float32),
        grid_spec=pltpu.PrefetchScalarGridSpec(
            num_scalar_prefetch=0,
            grid=(nB, T_out),
            in_specs=[pl.BlockSpec((b_block, 1, N, N), lambda b, t: (b, t, 0, 0)),
                      pl.BlockSpec((L, b_block, N, H), lambda b, t: (0, b, 0, 0))]
                     + [_wspec(w) for w in flat_w]
                     + [_wspec(proj_w), _wspec(proj_b)],
            out_specs=pl.BlockSpec((b_block, 1, N, Dout), lambda b, t: (b, t, 0, 0)),
            scratch_shapes=[pltpu.VMEM((L, b_block, N, H), jnp.float32),
                            pltpu.VMEM((b_block, N, Dout), jnp.float32)],
        ),
        compiler_params=pltpu.CompilerParams(
            dimension_semantics=("parallel", "arbitrary"),
            vmem_limit_bytes=_VMEM_LIMIT),
    )(supports, h0, *flat_w, proj_w, proj_b)


# ------------------------------- Model glue -------------------------------- #

def init_params(key, Din, Dout, H, K, L):
    """Parameters in host-fused form.

    Per cell:
      wg  : ((K+1)*(Cin+H), 3H) bf16  rows ordered (order k major, then
            [x channels, h channels]); cols = [r | u | candidate-x], with the
            h-rows of the candidate-x block zeroed (candidate's h-path uses the
            separate wc applied to diffused r*h).
      wc  : ((K+1)*H, H) bf16
      bias: (1, 3H) f32 = [1.0 (r) | 1.0 (u) | 0.0 (candidate)]  (bias_start)
    """
    num_mat = K + 1

    def cell_params(k, c_in):
        ks = jax.random.split(k, 6)
        scale = 1.0 / jnp.sqrt(jnp.float32((c_in + H) * num_mat))

        def w(kk, rows, cols):
            return jax.random.normal(kk, (num_mat, rows, cols), jnp.float32) * scale

        wrx, wrh = w(ks[0], c_in, H), w(ks[1], H, H)
        wux, wuh = w(ks[2], c_in, H), w(ks[3], H, H)
        wcx, wch = w(ks[4], c_in, H), w(ks[5], H, H)

        wx = jnp.concatenate([wrx, wux, wcx], axis=-1)            # (K+1, c_in, 3H)
        wh = jnp.concatenate([wrh, wuh,
                              jnp.zeros((num_mat, H, H), jnp.float32)], axis=-1)
        wg = jnp.concatenate([wx, wh], axis=1)                    # (K+1, c_in+H, 3H)
        wg = wg.reshape(num_mat * (c_in + H), 3 * H).astype(jnp.bfloat16)
        wc = wch.reshape(num_mat * H, H).astype(jnp.bfloat16)
        bias = jnp.concatenate([jnp.full((H,), 1.0, jnp.float32),
                                jnp.full((H,), 1.0, jnp.float32),
                                jnp.zeros((H,), jnp.float32)]).reshape(1, 3 * H)
        return (wg, wc, bias)

    keys = jax.random.split(key, 2 * L + 1)
    enc = [cell_params(keys[l], Din if l == 0 else H) for l in range(L)]
    dec = [cell_params(keys[L + l], Dout if l == 0 else H) for l in range(L)]
    proj_w = (jax.random.normal(keys[-1], (H, Dout), jnp.float32)
              / jnp.sqrt(jnp.float32(H))).astype(jnp.bfloat16)
    proj_b = jnp.zeros((1, Dout), jnp.float32)
    return {"enc": enc, "dec": dec, "proj_w": proj_w, "proj_b": proj_b}


def dcrnn_next_time_pred(encoder_inputs, decoder_inputs, supports, params, *,
                         K, num_layers, hid_dim, batch_block=None):
    """Forward pass of DCRNNModel_nextTimePred (eval mode).

    encoder_inputs: (B, T_in, N, Din);  decoder_inputs: (B, T_out, N, Dout)
    (unused in eval -- no teacher forcing);  supports: (B, T_in, N, N).
    Returns (B, T_out, N, Dout).
    """
    del num_layers  # implied by params
    B = encoder_inputs.shape[0]
    _, T_out, _, Dout = decoder_inputs.shape
    b_block = B if batch_block is None else batch_block

    # Encoder: single fused pallas_call -> per-layer final hidden states.
    h0 = run_encoder(supports, encoder_inputs, params["enc"],
                     K=K, H=hid_dim, b_block=b_block)

    # Decoder: single fused pallas_call (all layers + projection).
    return run_decoder(supports, h0, params["dec"],
                       params["proj_w"], params["proj_b"],
                       K=K, H=hid_dim, Dout=Dout, T_out=T_out, b_block=b_block)


# ----------------------------------- main ----------------------------------- #

if __name__ == "__main__":
    B, T, N = 2, 8, 16         # batch, seq len (enc == dec), num_nodes
    Din, Dout, H = 4, 4, 32    # input_dim, output_dim, rnn_units
    K = 2                      # max_diffusion_step
    L = 2                      # num_rnn_layers

    key = jax.random.PRNGKey(0)
    k1, k2, k3, kp = jax.random.split(key, 4)
    encoder_inputs = jax.random.normal(k1, (B, T, N, Din), jnp.float32)
    decoder_inputs = jax.random.normal(k2, (B, T, N, Dout), jnp.float32)
    raw = jax.random.uniform(k3, (B, T, N, N), jnp.float32)
    supports = raw / jnp.sum(raw, axis=-1, keepdims=True)   # row-stochastic A

    params = init_params(kp, Din, Dout, H, K, L)

    fwd = jax.jit(functools.partial(dcrnn_next_time_pred,
                                    K=K, num_layers=L, hid_dim=H))
    out = fwd(encoder_inputs, decoder_inputs, supports, params)
    out = jax.block_until_ready(out)
    assert out.shape == (B, T, N, Dout), out.shape
    assert jnp.all(jnp.isfinite(out))
    print("KERNEL_OK")
</pallas_src>

<mosaic_0001>
module attributes {stable_mosaic.version = 11 : i64} {
  func.func @_encoder_kernel(%arg0: i32, %arg1: i32, %arg2: memref<2x1x16x16xf32, #tpu.memory_space<vmem>>, %arg3: memref<2x1x16x4xf32, #tpu.memory_space<vmem>>, %arg4: memref<108x96xbf16, #tpu.memory_space<vmem>>, %arg5: memref<96x32xbf16, #tpu.memory_space<vmem>>, %arg6: memref<1x96xf32, #tpu.memory_space<vmem>>, %arg7: memref<192x96xbf16, #tpu.memory_space<vmem>>, %arg8: memref<96x32xbf16, #tpu.memory_space<vmem>>, %arg9: memref<1x96xf32, #tpu.memory_space<vmem>>, %arg10: memref<2x2x16x32xf32, #tpu.memory_space<vmem>>) attributes {dimension_semantics = [#tpu.dimension_semantics<parallel>, #tpu.dimension_semantics<arbitrary>], iteration_bounds = array<i64: 1, 8>, scalar_prefetch = 0 : i64, scratch_operands = 0 : i64, tpu.core_type = #tpu.core_type<tc>, window_params = [{transform_indices = @transform_0, window_bounds = array<i64: 2, 1, 16, 16>}, {transform_indices = @transform_1, window_bounds = array<i64: 2, 1, 16, 4>}, {pipeline_mode = #tpu.pipeline_mode<synchronous>, transform_indices = @transform_2, window_bounds = array<i64: 108, 96>}, {pipeline_mode = #tpu.pipeline_mode<synchronous>, transform_indices = @transform_3, window_bounds = array<i64: 96, 32>}, {pipeline_mode = #tpu.pipeline_mode<synchronous>, transform_indices = @transform_4, window_bounds = array<i64: 1, 96>}, {pipeline_mode = #tpu.pipeline_mode<synchronous>, transform_indices = @transform_5, window_bounds = array<i64: 192, 96>}, {pipeline_mode = #tpu.pipeline_mode<synchronous>, transform_indices = @transform_6, window_bounds = array<i64: 96, 32>}, {pipeline_mode = #tpu.pipeline_mode<synchronous>, transform_indices = @transform_7, window_bounds = array<i64: 1, 96>}, {transform_indices = @transform_8, window_bounds = array<i64: 2, 2, 16, 32>}]} {
    %c0_i32 = arith.constant 0 : i32
    %0 = arith.cmpi eq, %arg1, %c0_i32 : i32
    %1 = arith.extui %0 : i1 to i32
    %c0_i32_0 = arith.constant 0 : i32
    %2 = arith.cmpi ne, %1, %c0_i32_0 : i32
    scf.if %2 {
      %cst_56 = arith.constant 0.000000e+00 : f32
      %122 = vector.broadcast %cst_56 : f32 to vector<2x2x16x32xf32>
      %c0_57 = arith.constant 0 : index
      %c0_58 = arith.constant 0 : index
      %c0_59 = arith.constant 0 : index
      %c0_60 = arith.constant 0 : index
      %123 = vector.load %arg10[%c0_57, %c0_58, %c0_59, %c0_60] : memref<2x2x16x32xf32, #tpu.memory_space<vmem>>, vector<2x2x16x32xf32>
      tpu.vector_store %arg10[%c0_57, %c0_58, %c0_59, %c0_60], %122 {strides = array<i32>} : memref<2x2x16x32xf32, #tpu.memory_space<vmem>>, vector<2x2x16x32xf32>,
    } else {
    }
    %c0 = arith.constant 0 : index
    %c0_1 = arith.constant 0 : index
    %c0_2 = arith.constant 0 : index
    %c0_3 = arith.constant 0 : index
    %3 = vector.load %arg2[%c0, %c0_1, %c0_2, %c0_3] : memref<2x1x16x16xf32, #tpu.memory_space<vmem>>, vector<2x1x16x16xf32>
    %4 = vector.shape_cast %3 : vector<2x1x16x16xf32> to vector<2x16x16xf32>
    %5 = arith.truncf %4 : vector<2x16x16xf32> to vector<2x16x16xbf16>
    %c0_4 = arith.constant 0 : index
    %c0_5 = arith.constant 0 : index
    %c0_6 = arith.constant 0 : index
    %c0_7 = arith.constant 0 : index
    %6 = vector.load %arg3[%c0_4, %c0_5, %c0_6, %c0_7] : memref<2x1x16x4xf32, #tpu.memory_space<vmem>>, vector<2x1x16x4xf32>
    %7 = vector.shape_cast %6 : vector<2x1x16x4xf32> to vector<2x16x4xf32>
    %c0_8 = arith.constant 0 : index
    %c0_9 = arith.constant 0 : index
    %8 = vector.load %arg4[%c0_8, %c0_9] : memref<108x96xbf16, #tpu.memory_space<vmem>>, vector<108x96xbf16>
    %c0_10 = arith.constant 0 : index
    %c0_11 = arith.constant 0 : index
    %9 = vector.load %arg5[%c0_10, %c0_11] : memref<96x32xbf16, #tpu.memory_space<vmem>>, vector<96x32xbf16>
    %c0_12 = arith.constant 0 : index
    %c0_13 = arith.constant 0 : index
    %10 = vector.load %arg6[%c0_12, %c0_13] : memref<1x96xf32, #tpu.memory_space<vmem>>, vector<1x96xf32>
    %c0_14 = arith.constant 0 : index
    %c0_15 = arith.constant 0 : index
    %c0_16 = arith.constant 0 : index
    %c0_17 = arith.constant 0 : index
    %11 = vector.load %arg10[%c0_14, %c0_15, %c0_16, %c0_17] : memref<2x2x16x32xf32, #tpu.memory_space<vmem>>, vector<1x2x16x32xf32>
    %12 = vector.shape_cast %11 : vector<1x2x16x32xf32> to vector<2x16x32xf32>
    %13 = tpu.concatenate %7, %12 in 2 : vector<2x16x4xf32>, vector<2x16x32xf32> -> vector<2x16x36xf32>
    %14 = arith.truncf %13 : vector<2x16x36xf32> to vector<2x16x36xbf16>
    "tpu.trace_start"() <{level = 10 : i32, message = "bij,bjc->bic"}> : () -> ()
    %cst = arith.constant dense<0.000000e+00> : vector<2x16x36xf32>
    %15 = tpu.matmul %5, %14, %cst {dimension_numbers = #tpu.dot_dimension_numbers<[2], [1], [1], [2], [0, 0, 0, 1, 1, 2], [0], [0]>} : vector<2x16x16xbf16>, vector<2x16x36xbf16>, vector<2x16x36xf32> -> vector<2x16x36xf32>
    "tpu.trace_stop"() : () -> ()
    %16 = arith.truncf %15 : vector<2x16x36xf32> to vector<2x16x36xbf16>
    "tpu.trace_start"() <{level = 10 : i32, message = "bij,bjc->bic"}> : () -> ()
    %cst_18 = arith.constant dense<0.000000e+00> : vector<2x16x36xf32>
    %17 = tpu.matmul %5, %16, %cst_18 {dimension_numbers = #tpu.dot_dimension_numbers<[2], [1], [1], [2], [0, 0, 0, 1, 1, 2], [0], [0]>} : vector<2x16x16xbf16>, vector<2x16x36xbf16>, vector<2x16x36xf32> -> vector<2x16x36xf32>
    "tpu.trace_stop"() : () -> ()
    %cst_19 = arith.constant 2.000000e+00 : f32
    %18 = vector.broadcast %cst_19 : f32 to vector<2x16x36xf32>
    %19 = arith.mulf %18, %17 : vector<2x16x36xf32>
    %20 = arith.subf %19, %13 : vector<2x16x36xf32>
    %21 = tpu.concatenate %13, %15, %20 in 2 : vector<2x16x36xf32>, vector<2x16x36xf32>, vector<2x16x36xf32> -> vector<2x16x108xf32>
    %22 = vector.shape_cast %21 : vector<2x16x108xf32> to vector<32x108xf32>
    %23 = arith.truncf %22 : vector<32x108xf32> to vector<32x108xbf16>
    %cst_20 = arith.constant dense<0.000000e+00> : vector<32x96xf32>
    %24 = tpu.matmul %23, %8, %cst_20 {dimension_numbers = #tpu.dot_dimension_numbers<[1], [0], [0], [1], [0, 0, 1, 1], [], []>} : vector<32x108xbf16>, vector<108x96xbf16>, vector<32x96xf32> -> vector<32x96xf32>
    %25 = vector.broadcast %10 : vector<1x96xf32> to vector<32x96xf32>
    %26 = arith.addf %24, %25 : vector<32x96xf32>
    %27 = vector.extract_strided_slice %26 {offsets = [0, 0], sizes = [32, 32], strides = [1, 1]} : vector<32x96xf32> to vector<32x32xf32>
    %28 = arith.negf %27 : vector<32x32xf32>
    %29 = math.exp %28 : vector<32x32xf32>
    %cst_21 = arith.constant 1.000000e+00 : f32
    %30 = vector.broadcast %cst_21 : f32 to vector<32x32xf32>
    %31 = arith.addf %30, %29 : vector<32x32xf32>
    %32 = arith.divf %30, %31 : vector<32x32xf32>
    %33 = vector.extract_strided_slice %26 {offsets = [0, 32], sizes = [32, 32], strides = [1, 1]} : vector<32x96xf32> to vector<32x32xf32>
    %34 = arith.negf %33 : vector<32x32xf32>
    %35 = math.exp %34 : vector<32x32xf32>
    %cst_22 = arith.constant 1.000000e+00 : f32
    %36 = vector.broadcast %cst_22 : f32 to vector<32x32xf32>
    %37 = arith.addf %36, %35 : vector<32x32xf32>
    %38 = arith.divf %36, %37 : vector<32x32xf32>
    %39 = vector.extract_strided_slice %26 {offsets = [0, 64], sizes = [32, 32], strides = [1, 1]} : vector<32x96xf32> to vector<32x32xf32>
    %40 = vector.shape_cast %12 : vector<2x16x32xf32> to vector<32x32xf32>
    %41 = arith.mulf %32, %40 : vector<32x32xf32>
    %42 = vector.shape_cast %41 : vector<32x32xf32> to vector<2x16x32xf32>
    %43 = arith.truncf %42 : vector<2x16x32xf32> to vector<2x16x32xbf16>
    "tpu.trace_start"() <{level = 10 : i32, message = "bij,bjc->bic"}> : () -> ()
    %cst_23 = arith.constant dense<0.000000e+00> : vector<2x16x32xf32>
    %44 = tpu.matmul %5, %43, %cst_23 {dimension_numbers = #tpu.dot_dimension_numbers<[2], [1], [1], [2], [0, 0, 0, 1, 1, 2], [0], [0]>} : vector<2x16x16xbf16>, vector<2x16x32xbf16>, vector<2x16x32xf32> -> vector<2x16x32xf32>
    "tpu.trace_stop"() : () -> ()
    %45 = arith.truncf %44 : vector<2x16x32xf32> to vector<2x16x32xbf16>
    "tpu.trace_start"() <{level = 10 : i32, message = "bij,bjc->bic"}> : () -> ()
    %cst_24 = arith.constant dense<0.000000e+00> : vector<2x16x32xf32>
    %46 = tpu.matmul %5, %45, %cst_24 {dimension_numbers = #tpu.dot_dimension_numbers<[2], [1], [1], [2], [0, 0, 0, 1, 1, 2], [0], [0]>} : vector<2x16x16xbf16>, vector<2x16x32xbf16>, vector<2x16x32xf32> -> vector<2x16x32xf32>
    "tpu.trace_stop"() : () -> ()
    %cst_25 = arith.constant 2.000000e+00 : f32
    %47 = vector.broadcast %cst_25 : f32 to vector<2x16x32xf32>
    %48 = arith.mulf %47, %46 : vector<2x16x32xf32>
    %49 = arith.subf %48, %42 : vector<2x16x32xf32>
    %50 = tpu.concatenate %42, %44, %49 in 2 : vector<2x16x32xf32>, vector<2x16x32xf32>, vector<2x16x32xf32> -> vector<2x16x96xf32>
    %51 = vector.shape_cast %50 : vector<2x16x96xf32> to vector<32x96xf32>
    %52 = arith.truncf %51 : vector<32x96xf32> to vector<32x96xbf16>
    %cst_26 = arith.constant dense<0.000000e+00> : vector<32x32xf32>
    %53 = tpu.matmul %52, %9, %cst_26 {dimension_numbers = #tpu.dot_dimension_numbers<[1], [0], [0], [1], [0, 0, 1, 1], [], []>} : vector<32x96xbf16>, vector<96x32xbf16>, vector<32x32xf32> -> vector<32x32xf32>
    %54 = arith.addf %39, %53 : vector<32x32xf32>
    %55 = math.tanh %54 : vector<32x32xf32>
    %56 = arith.mulf %38, %40 : vector<32x32xf32>
    %cst_27 = arith.constant 1.000000e+00 : f32
    %57 = vector.broadcast %cst_27 : f32 to vector<32x32xf32>
    %58 = arith.subf %57, %38 : vector<32x32xf32>
    %59 = arith.mulf %58, %55 : vector<32x32xf32>
    %60 = arith.addf %56, %59 : vector<32x32xf32>
    %61 = vector.shape_cast %60 : vector<32x32xf32> to vector<2x16x32xf32>
    %c0_28 = arith.constant 0 : index
    %c0_29 = arith.constant 0 : index
    %c0_30 = arith.constant 0 : index
    %c0_31 = arith.constant 0 : index
    %62 = vector.load %arg10[%c0_28, %c0_29, %c0_30, %c0_31] : memref<2x2x16x32xf32, #tpu.memory_space<vmem>>, vector<1x2x16x32xf32>
    %63 = vector.shape_cast %62 : vector<1x2x16x32xf32> to vector<2x16x32xf32>
    %64 = vector.shape_cast %61 : vector<2x16x32xf32> to vector<1x2x16x32xf32>
    tpu.vector_store %arg10[%c0_28, %c0_29, %c0_30, %c0_31], %64 {strides = array<i32>} : memref<2x2x16x32xf32, #tpu.memory_space<vmem>>, vector<1x2x16x32xf32>,
    %c0_32 = arith.constant 0 : index
    %c0_33 = arith.constant 0 : index
    %65 = vector.load %arg7[%c0_32, %c0_33] : memref<192x96xbf16, #tpu.memory_space<vmem>>, vector<192x96xbf16>
    %c0_34 = arith.constant 0 : index
    %c0_35 = arith.constant 0 : index
    %66 = vector.load %arg8[%c0_34, %c0_35] : memref<96x32xbf16, #tpu.memory_space<vmem>>, vector<96x32xbf16>
    %c0_36 = arith.constant 0 : index
    %c0_37 = arith.constant 0 : index
    %67 = vector.load %arg9[%c0_36, %c0_37] : memref<1x96xf32, #tpu.memory_space<vmem>>, vector<1x96xf32>
    %c1 = arith.constant 1 : index
    %c0_38 = arith.constant 0 : index
    %c0_39 = arith.constant 0 : index
    %c0_40 = arith.constant 0 : index
    %68 = vector.load %arg10[%c1, %c0_38, %c0_39, %c0_40] : memref<2x2x16x32xf32, #tpu.memory_space<vmem>>, vector<1x2x16x32xf32>
    %69 = vector.shape_cast %68 : vector<1x2x16x32xf32> to vector<2x16x32xf32>
    %70 = tpu.concatenate %61, %69 in 2 : vector<2x16x32xf32>, vector<2x16x32xf32> -> vector<2x16x64xf32>
    %71 = arith.truncf %70 : vector<2x16x64xf32> to vector<2x16x64xbf16>
    "tpu.trace_start"() <{level = 10 : i32, message = "bij,bjc->bic"}> : () -> ()
    %cst_41 = arith.constant dense<0.000000e+00> : vector<2x16x64xf32>
    %72 = tpu.matmul %5, %71, %cst_41 {dimension_numbers = #tpu.dot_dimension_numbers<[2], [1], [1], [2], [0, 0, 0, 1, 1, 2], [0], [0]>} : vector<2x16x16xbf16>, vector<2x16x64xbf16>, vector<2x16x64xf32> -> vector<2x16x64xf32>
    "tpu.trace_stop"() : () -> ()
    %73 = arith.truncf %72 : vector<2x16x64xf32> to vector<2x16x64xbf16>
    "tpu.trace_start"() <{level = 10 : i32, message = "bij,bjc->bic"}> : () -> ()
    %cst_42 = arith.constant dense<0.000000e+00> : vector<2x16x64xf32>
    %74 = tpu.matmul %5, %73, %cst_42 {dimension_numbers = #tpu.dot_dimension_numbers<[2], [1], [1], [2], [0, 0, 0, 1, 1, 2], [0], [0]>} : vector<2x16x16xbf16>, vector<2x16x64xbf16>, vector<2x16x64xf32> -> vector<2x16x64xf32>
    "tpu.trace_stop"() : () -> ()
    %cst_43 = arith.constant 2.000000e+00 : f32
    %75 = vector.broadcast %cst_43 : f32 to vector<2x16x64xf32>
    %76 = arith.mulf %75, %74 : vector<2x16x64xf32>
    %77 = arith.subf %76, %70 : vector<2x16x64xf32>
    %78 = tpu.concatenate %70, %72, %77 in 2 : vector<2x16x64xf32>, vector<2x16x64xf32>, vector<2x16x64xf32> -> vector<2x16x192xf32>
    %79 = vector.shape_cast %78 : vector<2x16x192xf32> to vector<32x192xf32>
    %80 = arith.truncf %79 : vector<32x192xf32> to vector<32x192xbf16>
    %cst_44 = arith.constant dense<0.000000e+00> : vector<32x96xf32>
    %81 = tpu.matmul %80, %65, %cst_44 {dimension_numbers = #tpu.dot_dimension_numbers<[1], [0], [0], [1], [0, 0, 1, 1], [], []>} : vector<32x192xbf16>, vector<192x96xbf16>, vector<32x96xf32> -> vector<32x96xf32>
    %82 = vector.broadcast %67 : vector<1x96xf32> to vector<32x96xf32>
    %83 = arith.addf %81, %82 : vector<32x96xf32>
    %84 = vector.extract_strided_slice %83 {offsets = [0, 0], sizes = [32, 32], strides = [1, 1]} : vector<32x96xf32> to vector<32x32xf32>
    %85 = arith.negf %84 : vector<32x32xf32>
    %86 = math.exp %85 : vector<32x32xf32>
    %cst_45 = arith.constant 1.000000e+00 : f32
    %87 = vector.broadcast %cst_45 : f32 to vector<32x32xf32>
    %88 = arith.addf %87, %86 : vector<32x32xf32>
    %89 = arith.divf %87, %88 : vector<32x32xf32>
    %90 = vector.extract_strided_slice %83 {offsets = [0, 32], sizes = [32, 32], strides = [1, 1]} : vector<32x96xf32> to vector<32x32xf32>
    %91 = arith.negf %90 : vector<32x32xf32>
    %92 = math.exp %91 : vector<32x32xf32>
    %cst_46 = arith.constant 1.000000e+00 : f32
    %93 = vector.broadcast %cst_46 : f32 to vector<32x32xf32>
    %94 = arith.addf %93, %92 : vector<32x32xf32>
    %95 = arith.divf %93, %94 : vector<32x32xf32>
    %96 = vector.extract_strided_slice %83 {offsets = [0, 64], sizes = [32, 32], strides = [1, 1]} : vector<32x96xf32> to vector<32x32xf32>
    %97 = vector.shape_cast %69 : vector<2x16x32xf32> to vector<32x32xf32>
    %98 = arith.mulf %89, %97 : vector<32x32xf32>
    %99 = vector.shape_cast %98 : vector<32x32xf32> to vector<2x16x32xf32>
    %100 = arith.truncf %99 : vector<2x16x32xf32> to vector<2x16x32xbf16>
    "tpu.trace_start"() <{level = 10 : i32, message = "bij,bjc->bic"}> : () -> ()
    %cst_47 = arith.constant dense<0.000000e+00> : vector<2x16x32xf32>
    %101 = tpu.matmul %5, %100, %cst_47 {dimension_numbers = #tpu.dot_dimension_numbers<[2], [1], [1], [2], [0, 0, 0, 1, 1, 2], [0], [0]>} : vector<2x16x16xbf16>, vector<2x16x32xbf16>, vector<2x16x32xf32> -> vector<2x16x32xf32>
    "tpu.trace_stop"() : () -> ()
    %102 = arith.truncf %101 : vector<2x16x32xf32> to vector<2x16x32xbf16>
    "tpu.trace_start"() <{level = 10 : i32, message = "bij,bjc->bic"}> : () -> ()
    %cst_48 = arith.constant dense<0.000000e+00> : vector<2x16x32xf32>
    %103 = tpu.matmul %5, %102, %cst_48 {dimension_numbers = #tpu.dot_dimension_numbers<[2], [1], [1], [2], [0, 0, 0, 1, 1, 2], [0], [0]>} : vector<2x16x16xbf16>, vector<2x16x32xbf16>, vector<2x16x32xf32> -> vector<2x16x32xf32>
    "tpu.trace_stop"() : () -> ()
    %cst_49 = arith.constant 2.000000e+00 : f32
    %104 = vector.broadcast %cst_49 : f32 to vector<2x16x32xf32>
    %105 = arith.mulf %104, %103 : vector<2x16x32xf32>
    %106 = arith.subf %105, %99 : vector<2x16x32xf32>
    %107 = tpu.concatenate %99, %101, %106 in 2 : vector<2x16x32xf32>, vector<2x16x32xf32>, vector<2x16x32xf32> -> vector<2x16x96xf32>
    %108 = vector.shape_cast %107 : vector<2x16x96xf32> to vector<32x96xf32>
    %109 = arith.truncf %108 : vector<32x96xf32> to vector<32x96xbf16>
    %cst_50 = arith.constant dense<0.000000e+00> : vector<32x32xf32>
    %110 = tpu.matmul %109, %66, %cst_50 {dimension_numbers = #tpu.dot_dimension_numbers<[1], [0], [0], [1], [0, 0, 1, 1], [], []>} : vector<32x96xbf16>, vector<96x32xbf16>, vector<32x32xf32> -> vector<32x32xf32>
    %111 = arith.addf %96, %110 : vector<32x32xf32>
    %112 = math.tanh %111 : vector<32x32xf32>
    %113 = arith.mulf %95, %97 : vector<32x32xf32>
    %cst_51 = arith.constant 1.000000e+00 : f32
    %114 = vector.broadcast %cst_51 : f32 to vector<32x32xf32>
    %115 = arith.subf %114, %95 : vector<32x32xf32>
    %116 = arith.mulf %115, %112 : vector<32x32xf32>
    %117 = arith.addf %113, %116 : vector<32x32xf32>
    %118 = vector.shape_cast %117 : vector<32x32xf32> to vector<2x16x32xf32>
    %c1_52 = arith.constant 1 : index
    %c0_53 = arith.constant 0 : index
    %c0_54 = arith.constant 0 : index
    %c0_55 = arith.constant 0 : index
    %119 = vector.load %arg10[%c1_52, %c0_53, %c0_54, %c0_55] : memref<2x2x16x32xf32, #tpu.memory_space<vmem>>, vector<1x2x16x32xf32>
    %120 = vector.shape_cast %119 : vector<1x2x16x32xf32> to vector<2x16x32xf32>
    %121 = vector.shape_cast %118 : vector<2x16x32xf32> to vector<1x2x16x32xf32>
    tpu.vector_store %arg10[%c1_52, %c0_53, %c0_54, %c0_55], %121 {strides = array<i32>} : memref<2x2x16x32xf32, #tpu.memory_space<vmem>>, vector<1x2x16x32xf32>,
    return
  }
  func.func @transform_0(%arg0: i32, %arg1: i32) -> (i32, i32, i32, i32) {
    %c0_i32 = arith.constant 0 : i32
    %c0_i32_0 = arith.constant 0 : i32
    %c0_i32_1 = arith.constant 0 : i32
    return %arg0, %arg1, %c0_i32, %c0_i32_0 : i32, i32, i32, i32
  }
  func.func @transform_1(%arg0: i32, %arg1: i32) -> (i32, i32, i32, i32) {
    %c0_i32 = arith.constant 0 : i32
    %c0_i32_0 = arith.constant 0 : i32
    %c0_i32_1 = arith.constant 0 : i32
    return %arg0, %arg1, %c0_i32, %c0_i32_0 : i32, i32, i32, i32
  }
  func.func @transform_2(%arg0: i32, %arg1: i32) -> (i32, i32) {
    %c0_i32 = arith.constant 0 : i32
    %c0_i32_0 = arith.constant 0 : i32
    %c0_i32_1 = arith.constant 0 : i32
    return %c0_i32, %c0_i32_0 : i32, i32
  }
  func.func @transform_3(%arg0: i32, %arg1: i32) -> (i32, i32) {
    %c0_i32 = arith.constant 0 : i32
    %c0_i32_0 = arith.constant 0 : i32
    %c0_i32_1 = arith.constant 0 : i32
    return %c0_i32, %c0_i32_0 : i32, i32
  }
  func.func @transform_4(%arg0: i32, %arg1: i32) -> (i32, i32) {
    %c0_i32 = arith.constant 0 : i32
    %c0_i32_0 = arith.constant 0 : i32
    %c0_i32_1 = arith.constant 0 : i32
    return %c0_i32, %c0_i32_0 : i32, i32
  }
  func.func @transform_5(%arg0: i32, %arg1: i32) -> (i32, i32) {
    %c0_i32 = arith.constant 0 : i32
    %c0_i32_0 = arith.constant 0 : i32
    %c0_i32_1 = arith.constant 0 : i32
    return %c0_i32, %c0_i32_0 : i32, i32
  }
  func.func @transform_6(%arg0: i32, %arg1: i32) -> (i32, i32) {
    %c0_i32 = arith.constant 0 : i32
    %c0_i32_0 = arith.constant 0 : i32
    %c0_i32_1 = arith.constant 0 : i32
    return %c0_i32, %c0_i32_0 : i32, i32
  }
  func.func @transform_7(%arg0: i32, %arg1: i32) -> (i32, i32) {
    %c0_i32 = arith.constant 0 : i32
    %c0_i32_0 = arith.constant 0 : i32
    %c0_i32_1 = arith.constant 0 : i32
    return %c0_i32, %c0_i32_0 : i32, i32
  }
  func.func @transform_8(%arg0: i32, %arg1: i32) -> (i32, i32, i32, i32) {
    %c0_i32 = arith.constant 0 : i32
    %c0_i32_0 = arith.constant 0 : i32
    %c0_i32_1 = arith.constant 0 : i32
    %c0_i32_2 = arith.constant 0 : i32
    return %c0_i32, %arg0, %c0_i32_0, %c0_i32_1 : i32, i32, i32, i32
  }
}

module attributes {stable_mosaic.version = 11 : i64} {
  func.func @_decoder_kernel(%arg0: i32, %arg1: i32, %arg2: memref<2x1x16x16xf32, #tpu.memory_space<vmem>>, %arg3: memref<2x2x16x32xf32, #tpu.memory_space<vmem>>, %arg4: memref<108x96xbf16, #tpu.memory_space<vmem>>, %arg5: memref<96x32xbf16, #tpu.memory_space<vmem>>, %arg6: memref<1x96xf32, #tpu.memory_space<vmem>>, %arg7: memref<192x96xbf16, #tpu.memory_space<vmem>>, %arg8: memref<96x32xbf16, #tpu.memory_space<vmem>>, %arg9: memref<1x96xf32, #tpu.memory_space<vmem>>, %arg10: memref<32x4xbf16, #tpu.memory_space<vmem>>, %arg11: memref<1x4xf32, #tpu.memory_space<vmem>>, %arg12: memref<2x1x16x4xf32, #tpu.memory_space<vmem>>, %arg13: memref<2x2x16x32xf32, #tpu.memory_space<vmem>>, %arg14: memref<2x16x4xf32, #tpu.memory_space<vmem>>) attributes {dimension_semantics = [#tpu.dimension_semantics<parallel>, #tpu.dimension_semantics<arbitrary>], iteration_bounds = array<i64: 1, 8>, scalar_prefetch = 0 : i64, scratch_operands = 2 : i64, tpu.core_type = #tpu.core_type<tc>, window_params = [{transform_indices = @transform_0, window_bounds = array<i64: 2, 1, 16, 16>}, {transform_indices = @transform_1, window_bounds = array<i64: 2, 2, 16, 32>}, {pipeline_mode = #tpu.pipeline_mode<synchronous>, transform_indices = @transform_2, window_bounds = array<i64: 108, 96>}, {pipeline_mode = #tpu.pipeline_mode<synchronous>, transform_indices = @transform_3, window_bounds = array<i64: 96, 32>}, {pipeline_mode = #tpu.pipeline_mode<synchronous>, transform_indices = @transform_4, window_bounds = array<i64: 1, 96>}, {pipeline_mode = #tpu.pipeline_mode<synchronous>, transform_indices = @transform_5, window_bounds = array<i64: 192, 96>}, {pipeline_mode = #tpu.pipeline_mode<synchronous>, transform_indices = @transform_6, window_bounds = array<i64: 96, 32>}, {pipeline_mode = #tpu.pipeline_mode<synchronous>, transform_indices = @transform_7, window_bounds = array<i64: 1, 96>}, {pipeline_mode = #tpu.pipeline_mode<synchronous>, transform_indices = @transform_8, window_bounds = array<i64: 32, 4>}, {pipeline_mode = #tpu.pipeline_mode<synchronous>, transform_indices = @transform_9, window_bounds = array<i64: 1, 4>}, {transform_indices = @transform_10, window_bounds = array<i64: 2, 1, 16, 4>}]} {
    %c0_i32 = arith.constant 0 : i32
    %0 = arith.cmpi eq, %arg1, %c0_i32 : i32
    %1 = arith.extui %0 : i1 to i32
    %c0_i32_0 = arith.constant 0 : i32
    %2 = arith.cmpi ne, %1, %c0_i32_0 : i32
    scf.if %2 {
      %c0_67 = arith.constant 0 : index
      %c0_68 = arith.constant 0 : index
      %c0_69 = arith.constant 0 : index
      %c0_70 = arith.constant 0 : index
      %133 = vector.load %arg3[%c0_67, %c0_68, %c0_69, %c0_70] : memref<2x2x16x32xf32, #tpu.memory_space<vmem>>, vector<2x2x16x32xf32>
      %c0_71 = arith.constant 0 : index
      %c0_72 = arith.constant 0 : index
      %c0_73 = arith.constant 0 : index
      %c0_74 = arith.constant 0 : index
      %134 = vector.load %arg13[%c0_71, %c0_72, %c0_73, %c0_74] : memref<2x2x16x32xf32, #tpu.memory_space<vmem>>, vector<2x2x16x32xf32>
      tpu.vector_store %arg13[%c0_71, %c0_72, %c0_73, %c0_74], %133 {strides = array<i32>} : memref<2x2x16x32xf32, #tpu.memory_space<vmem>>, vector<2x2x16x32xf32>,
      %cst_75 = arith.constant 0.000000e+00 : f32
      %135 = vector.broadcast %cst_75 : f32 to vector<2x16x4xf32>
      %c0_76 = arith.constant 0 : index
      %c0_77 = arith.constant 0 : index
      %c0_78 = arith.constant 0 : index
      %136 = vector.load %arg14[%c0_76, %c0_77, %c0_78] : memref<2x16x4xf32, #tpu.memory_space<vmem>>, vector<2x16x4xf32>
      tpu.vector_store %arg14[%c0_76, %c0_77, %c0_78], %135 {strides = array<i32>} : memref<2x16x4xf32, #tpu.memory_space<vmem>>, vector<2x16x4xf32>,
    } else {
    }
    %c0 = arith.constant 0 : index
    %c0_1 = arith.constant 0 : index
    %c0_2 = arith.constant 0 : index
    %c0_3 = arith.constant 0 : index
    %3 = vector.load %arg2[%c0, %c0_1, %c0_2, %c0_3] : memref<2x1x16x16xf32, #tpu.memory_space<vmem>>, vector<2x1x16x16xf32>
    %4 = vector.shape_cast %3 : vector<2x1x16x16xf32> to vector<2x16x16xf32>
    %5 = arith.truncf %4 : vector<2x16x16xf32> to vector<2x16x16xbf16>
    %c0_4 = arith.constant 0 : index
    %c0_5 = arith.constant 0 : index
    %c0_6 = arith.constant 0 : index
    %6 = vector.load %arg14[%c0_4, %c0_5, %c0_6] : memref<2x16x4xf32, #tpu.memory_space<vmem>>, vector<2x16x4xf32>
    %c0_7 = arith.constant 0 : index
    %c0_8 = arith.constant 0 : index
    %7 = vector.load %arg4[%c0_7, %c0_8] : memref<108x96xbf16, #tpu.memory_space<vmem>>, vector<108x96xbf16>
    %c0_9 = arith.constant 0 : index
    %c0_10 = arith.constant 0 : index
    %8 = vector.load %arg5[%c0_9, %c0_10] : memref<96x32xbf16, #tpu.memory_space<vmem>>, vector<96x32xbf16>
    %c0_11 = arith.constant 0 : index
    %c0_12 = arith.constant 0 : index
    %9 = vector.load %arg6[%c0_11, %c0_12] : memref<1x96xf32, #tpu.memory_space<vmem>>, vector<1x96xf32>
    %c0_13 = arith.constant 0 : index
    %c0_14 = arith.constant 0 : index
    %c0_15 = arith.constant 0 : index
    %c0_16 = arith.constant 0 : index
    %10 = vector.load %arg13[%c0_13, %c0_14, %c0_15, %c0_16] : memref<2x2x16x32xf32, #tpu.memory_space<vmem>>, vector<1x2x16x32xf32>
    %11 = vector.shape_cast %10 : vector<1x2x16x32xf32> to vector<2x16x32xf32>
    %12 = tpu.concatenate %6, %11 in 2 : vector<2x16x4xf32>, vector<2x16x32xf32> -> vector<2x16x36xf32>
    %13 = arith.truncf %12 : vector<2x16x36xf32> to vector<2x16x36xbf16>
    "tpu.trace_start"() <{level = 10 : i32, message = "bij,bjc->bic"}> : () -> ()
    %cst = arith.constant dense<0.000000e+00> : vector<2x16x36xf32>
    %14 = tpu.matmul %5, %13, %cst {dimension_numbers = #tpu.dot_dimension_numbers<[2], [1], [1], [2], [0, 0, 0, 1, 1, 2], [0], [0]>} : vector<2x16x16xbf16>, vector<2x16x36xbf16>, vector<2x16x36xf32> -> vector<2x16x36xf32>
    "tpu.trace_stop"() : () -> ()
    %15 = arith.truncf %14 : vector<2x16x36xf32> to vector<2x16x36xbf16>
    "tpu.trace_start"() <{level = 10 : i32, message = "bij,bjc->bic"}> : () -> ()
    %cst_17 = arith.constant dense<0.000000e+00> : vector<2x16x36xf32>
    %16 = tpu.matmul %5, %15, %cst_17 {dimension_numbers = #tpu.dot_dimension_numbers<[2], [1], [1], [2], [0, 0, 0, 1, 1, 2], [0], [0]>} : vector<2x16x16xbf16>, vector<2x16x36xbf16>, vector<2x16x36xf32> -> vector<2x16x36xf32>
    "tpu.trace_stop"() : () -> ()
    %cst_18 = arith.constant 2.000000e+00 : f32
    %17 = vector.broadcast %cst_18 : f32 to vector<2x16x36xf32>
    %18 = arith.mulf %17, %16 : vector<2x16x36xf32>
    %19 = arith.subf %18, %12 : vector<2x16x36xf32>
    %20 = tpu.concatenate %12, %14, %19 in 2 : vector<2x16x36xf32>, vector<2x16x36xf32>, vector<2x16x36xf32> -> vector<2x16x108xf32>
    %21 = vector.shape_cast %20 : vector<2x16x108xf32> to vector<32x108xf32>
    %22 = arith.truncf %21 : vector<32x108xf32> to vector<32x108xbf16>
    %cst_19 = arith.constant dense<0.000000e+00> : vector<32x96xf32>
    %23 = tpu.matmul %22, %7, %cst_19 {dimension_numbers = #tpu.dot_dimension_numbers<[1], [0], [0], [1], [0, 0, 1, 1], [], []>} : vector<32x108xbf16>, vector<108x96xbf16>, vector<32x96xf32> -> vector<32x96xf32>
    %24 = vector.broadcast %9 : vector<1x96xf32> to vector<32x96xf32>
    %25 = arith.addf %23, %24 : vector<32x96xf32>
    %26 = vector.extract_strided_slice %25 {offsets = [0, 0], sizes = [32, 32], strides = [1, 1]} : vector<32x96xf32> to vector<32x32xf32>
    %27 = arith.negf %26 : vector<32x32xf32>
    %28 = math.exp %27 : vector<32x32xf32>
    %cst_20 = arith.constant 1.000000e+00 : f32
    %29 = vector.broadcast %cst_20 : f32 to vector<32x32xf32>
    %30 = arith.addf %29, %28 : vector<32x32xf32>
    %31 = arith.divf %29, %30 : vector<32x32xf32>
    %32 = vector.extract_strided_slice %25 {offsets = [0, 32], sizes = [32, 32], strides = [1, 1]} : vector<32x96xf32> to vector<32x32xf32>
    %33 = arith.negf %32 : vector<32x32xf32>
    %34 = math.exp %33 : vector<32x32xf32>
    %cst_21 = arith.constant 1.000000e+00 : f32
    %35 = vector.broadcast %cst_21 : f32 to vector<32x32xf32>
    %36 = arith.addf %35, %34 : vector<32x32xf32>
    %37 = arith.divf %35, %36 : vector<32x32xf32>
    %38 = vector.extract_strided_slice %25 {offsets = [0, 64], sizes = [32, 32], strides = [1, 1]} : vector<32x96xf32> to vector<32x32xf32>
    %39 = vector.shape_cast %11 : vector<2x16x32xf32> to vector<32x32xf32>
    %40 = arith.mulf %31, %39 : vector<32x32xf32>
    %41 = vector.shape_cast %40 : vector<32x32xf32> to vector<2x16x32xf32>
    %42 = arith.truncf %41 : vector<2x16x32xf32> to vector<2x16x32xbf16>
    "tpu.trace_start"() <{level = 10 : i32, message = "bij,bjc->bic"}> : () -> ()
    %cst_22 = arith.constant dense<0.000000e+00> : vector<2x16x32xf32>
    %43 = tpu.matmul %5, %42, %cst_22 {dimension_numbers = #tpu.dot_dimension_numbers<[2], [1], [1], [2], [0, 0, 0, 1, 1, 2], [0], [0]>} : vector<2x16x16xbf16>, vector<2x16x32xbf16>, vector<2x16x32xf32> -> vector<2x16x32xf32>
    "tpu.trace_stop"() : () -> ()
    %44 = arith.truncf %43 : vector<2x16x32xf32> to vector<2x16x32xbf16>
    "tpu.trace_start"() <{level = 10 : i32, message = "bij,bjc->bic"}> : () -> ()
    %cst_23 = arith.constant dense<0.000000e+00> : vector<2x16x32xf32>
    %45 = tpu.matmul %5, %44, %cst_23 {dimension_numbers = #tpu.dot_dimension_numbers<[2], [1], [1], [2], [0, 0, 0, 1, 1, 2], [0], [0]>} : vector<2x16x16xbf16>, vector<2x16x32xbf16>, vector<2x16x32xf32> -> vector<2x16x32xf32>
    "tpu.trace_stop"() : () -> ()
    %cst_24 = arith.constant 2.000000e+00 : f32
    %46 = vector.broadcast %cst_24 : f32 to vector<2x16x32xf32>
    %47 = arith.mulf %46, %45 : vector<2x16x32xf32>
    %48 = arith.subf %47, %41 : vector<2x16x32xf32>
    %49 = tpu.concatenate %41, %43, %48 in 2 : vector<2x16x32xf32>, vector<2x16x32xf32>, vector<2x16x32xf32> -> vector<2x16x96xf32>
    %50 = vector.shape_cast %49 : vector<2x16x96xf32> to vector<32x96xf32>
    %51 = arith.truncf %50 : vector<32x96xf32> to vector<32x96xbf16>
    %cst_25 = arith.constant dense<0.000000e+00> : vector<32x32xf32>
    %52 = tpu.matmul %51, %8, %cst_25 {dimension_numbers = #tpu.dot_dimension_numbers<[1], [0], [0], [1], [0, 0, 1, 1], [], []>} : vector<32x96xbf16>, vector<96x32xbf16>, vector<32x32xf32> -> vector<32x32xf32>
    %53 = arith.addf %38, %52 : vector<32x32xf32>
    %54 = math.tanh %53 : vector<32x32xf32>
    %55 = arith.mulf %37, %39 : vector<32x32xf32>
    %cst_26 = arith.constant 1.000000e+00 : f32
    %56 = vector.broadcast %cst_26 : f32 to vector<32x32xf32>
    %57 = arith.subf %56, %37 : vector<32x32xf32>
    %58 = arith.mulf %57, %54 : vector<32x32xf32>
    %59 = arith.addf %55, %58 : vector<32x32xf32>
    %60 = vector.shape_cast %59 : vector<32x32xf32> to vector<2x16x32xf32>
    %c0_27 = arith.constant 0 : index
    %c0_28 = arith.constant 0 : index
    %c0_29 = arith.constant 0 : index
    %c0_30 = arith.constant 0 : index
    %61 = vector.load %arg13[%c0_27, %c0_28, %c0_29, %c0_30] : memref<2x2x16x32xf32, #tpu.memory_space<vmem>>, vector<1x2x16x32xf32>
    %62 = vector.shape_cast %61 : vector<1x2x16x32xf32> to vector<2x16x32xf32>
    %63 = vector.shape_cast %60 : vector<2x16x32xf32> to vector<1x2x16x32xf32>
    tpu.vector_store %arg13[%c0_27, %c0_28, %c0_29, %c0_30], %63 {strides = array<i32>} : memref<2x2x16x32xf32, #tpu.memory_space<vmem>>, vector<1x2x16x32xf32>,
    %c0_31 = arith.constant 0 : index
    %c0_32 = arith.constant 0 : index
    %64 = vector.load %arg7[%c0_31, %c0_32] : memref<192x96xbf16, #tpu.memory_space<vmem>>, vector<192x96xbf16>
    %c0_33 = arith.constant 0 : index
    %c0_34 = arith.constant 0 : index
    %65 = vector.load %arg8[%c0_33, %c0_34] : memref<96x32xbf16, #tpu.memory_space<vmem>>, vector<96x32xbf16>
    %c0_35 = arith.constant 0 : index
    %c0_36 = arith.constant 0 : index
    %66 = vector.load %arg9[%c0_35, %c0_36] : memref<1x96xf32, #tpu.memory_space<vmem>>, vector<1x96xf32>
    %c1 = arith.constant 1 : index
    %c0_37 = arith.constant 0 : index
    %c0_38 = arith.constant 0 : index
    %c0_39 = arith.constant 0 : index
    %67 = vector.load %arg13[%c1, %c0_37, %c0_38, %c0_39] : memref<2x2x16x32xf32, #tpu.memory_space<vmem>>, vector<1x2x16x32xf32>
    %68 = vector.shape_cast %67 : vector<1x2x16x32xf32> to vector<2x16x32xf32>
    %69 = tpu.concatenate %60, %68 in 2 : vector<2x16x32xf32>, vector<2x16x32xf32> -> vector<2x16x64xf32>
    %70 = arith.truncf %69 : vector<2x16x64xf32> to vector<2x16x64xbf16>
    "tpu.trace_start"() <{level = 10 : i32, message = "bij,bjc->bic"}> : () -> ()
    %cst_40 = arith.constant dense<0.000000e+00> : vector<2x16x64xf32>
    %71 = tpu.matmul %5, %70, %cst_40 {dimension_numbers = #tpu.dot_dimension_numbers<[2], [1], [1], [2], [0, 0, 0, 1, 1, 2], [0], [0]>} : vector<2x16x16xbf16>, vector<2x16x64xbf16>, vector<2x16x64xf32> -> vector<2x16x64xf32>
    "tpu.trace_stop"() : () -> ()
    %72 = arith.truncf %71 : vector<2x16x64xf32> to vector<2x16x64xbf16>
    "tpu.trace_start"() <{level = 10 : i32, message = "bij,bjc->bic"}> : () -> ()
    %cst_41 = arith.constant dense<0.000000e+00> : vector<2x16x64xf32>
    %73 = tpu.matmul %5, %72, %cst_41 {dimension_numbers = #tpu.dot_dimension_numbers<[2], [1], [1], [2], [0, 0, 0, 1, 1, 2], [0], [0]>} : vector<2x16x16xbf16>, vector<2x16x64xbf16>, vector<2x16x64xf32> -> vector<2x16x64xf32>
    "tpu.trace_stop"() : () -> ()
    %cst_42 = arith.constant 2.000000e+00 : f32
    %74 = vector.broadcast %cst_42 : f32 to vector<2x16x64xf32>
    %75 = arith.mulf %74, %73 : vector<2x16x64xf32>
    %76 = arith.subf %75, %69 : vector<2x16x64xf32>
    %77 = tpu.concatenate %69, %71, %76 in 2 : vector<2x16x64xf32>, vector<2x16x64xf32>, vector<2x16x64xf32> -> vector<2x16x192xf32>
    %78 = vector.shape_cast %77 : vector<2x16x192xf32> to vector<32x192xf32>
    %79 = arith.truncf %78 : vector<32x192xf32> to vector<32x192xbf16>
    %cst_43 = arith.constant dense<0.000000e+00> : vector<32x96xf32>
    %80 = tpu.matmul %79, %64, %cst_43 {dimension_numbers = #tpu.dot_dimension_numbers<[1], [0], [0], [1], [0, 0, 1, 1], [], []>} : vector<32x192xbf16>, vector<192x96xbf16>, vector<32x96xf32> -> vector<32x96xf32>
    %81 = vector.broadcast %66 : vector<1x96xf32> to vector<32x96xf32>
    %82 = arith.addf %80, %81 : vector<32x96xf32>
    %83 = vector.extract_strided_slice %82 {offsets = [0, 0], sizes = [32, 32], strides = [1, 1]} : vector<32x96xf32> to vector<32x32xf32>
    %84 = arith.negf %83 : vector<32x32xf32>
    %85 = math.exp %84 : vector<32x32xf32>
    %cst_44 = arith.constant 1.000000e+00 : f32
    %86 = vector.broadcast %cst_44 : f32 to vector<32x32xf32>
    %87 = arith.addf %86, %85 : vector<32x32xf32>
    %88 = arith.divf %86, %87 : vector<32x32xf32>
    %89 = vector.extract_strided_slice %82 {offsets = [0, 32], sizes = [32, 32], strides = [1, 1]} : vector<32x96xf32> to vector<32x32xf32>
    %90 = arith.negf %89 : vector<32x32xf32>
    %91 = math.exp %90 : vector<32x32xf32>
    %cst_45 = arith.constant 1.000000e+00 : f32
    %92 = vector.broadcast %cst_45 : f32 to vector<32x32xf32>
    %93 = arith.addf %92, %91 : vector<32x32xf32>
    %94 = arith.divf %92, %93 : vector<32x32xf32>
    %95 = vector.extract_strided_slice %82 {offsets = [0, 64], sizes = [32, 32], strides = [1, 1]} : vector<32x96xf32> to vector<32x32xf32>
    %96 = vector.shape_cast %68 : vector<2x16x32xf32> to vector<32x32xf32>
    %97 = arith.mulf %88, %96 : vector<32x32xf32>
    %98 = vector.shape_cast %97 : vector<32x32xf32> to vector<2x16x32xf32>
    %99 = arith.truncf %98 : vector<2x16x32xf32> to vector<2x16x32xbf16>
    "tpu.trace_start"() <{level = 10 : i32, message = "bij,bjc->bic"}> : () -> ()
    %cst_46 = arith.constant dense<0.000000e+00> : vector<2x16x32xf32>
    %100 = tpu.matmul %5, %99, %cst_46 {dimension_numbers = #tpu.dot_dimension_numbers<[2], [1], [1], [2], [0, 0, 0, 1, 1, 2], [0], [0]>} : vector<2x16x16xbf16>, vector<2x16x32xbf16>, vector<2x16x32xf32> -> vector<2x16x32xf32>
    "tpu.trace_stop"() : () -> ()
    %101 = arith.truncf %100 : vector<2x16x32xf32> to vector<2x16x32xbf16>
    "tpu.trace_start"() <{level = 10 : i32, message = "bij,bjc->bic"}> : () -> ()
    %cst_47 = arith.constant dense<0.000000e+00> : vector<2x16x32xf32>
    %102 = tpu.matmul %5, %101, %cst_47 {dimension_numbers = #tpu.dot_dimension_numbers<[2], [1], [1], [2], [0, 0, 0, 1, 1, 2], [0], [0]>} : vector<2x16x16xbf16>, vector<2x16x32xbf16>, vector<2x16x32xf32> -> vector<2x16x32xf32>
    "tpu.trace_stop"() : () -> ()
    %cst_48 = arith.constant 2.000000e+00 : f32
    %103 = vector.broadcast %cst_48 : f32 to vector<2x16x32xf32>
    %104 = arith.mulf %103, %102 : vector<2x16x32xf32>
    %105 = arith.subf %104, %98 : vector<2x16x32xf32>
    %106 = tpu.concatenate %98, %100, %105 in 2 : vector<2x16x32xf32>, vector<2x16x32xf32>, vector<2x16x32xf32> -> vector<2x16x96xf32>
    %107 = vector.shape_cast %106 : vector<2x16x96xf32> to vector<32x96xf32>
    %108 = arith.truncf %107 : vector<32x96xf32> to vector<32x96xbf16>
    %cst_49 = arith.constant dense<0.000000e+00> : vector<32x32xf32>
    %109 = tpu.matmul %108, %65, %cst_49 {dimension_numbers = #tpu.dot_dimension_numbers<[1], [0], [0], [1], [0, 0, 1, 1], [], []>} : vector<32x96xbf16>, vector<96x32xbf16>, vector<32x32xf32> -> vector<32x32xf32>
    %110 = arith.addf %95, %109 : vector<32x32xf32>
    %111 = math.tanh %110 : vector<32x32xf32>
    %112 = arith.mulf %94, %96 : vector<32x32xf32>
    %cst_50 = arith.constant 1.000000e+00 : f32
    %113 = vector.broadcast %cst_50 : f32 to vector<32x32xf32>
    %114 = arith.subf %113, %94 : vector<32x32xf32>
    %115 = arith.mulf %114, %111 : vector<32x32xf32>
    %116 = arith.addf %112, %115 : vector<32x32xf32>
    %117 = vector.shape_cast %116 : vector<32x32xf32> to vector<2x16x32xf32>
    %c1_51 = arith.constant 1 : index
    %c0_52 = arith.constant 0 : index
    %c0_53 = arith.constant 0 : index
    %c0_54 = arith.constant 0 : index
    %118 = vector.load %arg13[%c1_51, %c0_52, %c0_53, %c0_54] : memref<2x2x16x32xf32, #tpu.memory_space<vmem>>, vector<1x2x16x32xf32>
    %119 = vector.shape_cast %118 : vector<1x2x16x32xf32> to vector<2x16x32xf32>
    %120 = vector.shape_cast %117 : vector<2x16x32xf32> to vector<1x2x16x32xf32>
    tpu.vector_store %arg13[%c1_51, %c0_52, %c0_53, %c0_54], %120 {strides = array<i32>} : memref<2x2x16x32xf32, #tpu.memory_space<vmem>>, vector<1x2x16x32xf32>,
    %121 = vector.shape_cast %117 : vector<2x16x32xf32> to vector<32x32xf32>
    %122 = arith.truncf %121 : vector<32x32xf32> to vector<32x32xbf16>
    %c0_55 = arith.constant 0 : index
    %c0_56 = arith.constant 0 : index
    %123 = vector.load %arg10[%c0_55, %c0_56] : memref<32x4xbf16, #tpu.memory_space<vmem>>, vector<32x4xbf16>
    %cst_57 = arith.constant dense<0.000000e+00> : vector<32x4xf32>
    %124 = tpu.matmul %122, %123, %cst_57 {dimension_numbers = #tpu.dot_dimension_numbers<[1], [0], [0], [1], [0, 0, 1, 1], [], []>} : vector<32x32xbf16>, vector<32x4xbf16>, vector<32x4xf32> -> vector<32x4xf32>
    %c0_58 = arith.constant 0 : index
    %c0_59 = arith.constant 0 : index
    %125 = vector.load %arg11[%c0_58, %c0_59] : memref<1x4xf32, #tpu.memory_space<vmem>>, vector<1x4xf32>
    %126 = vector.broadcast %125 : vector<1x4xf32> to vector<32x4xf32>
    %127 = arith.addf %124, %126 : vector<32x4xf32>
    %128 = vector.shape_cast %127 : vector<32x4xf32> to vector<2x16x4xf32>
    %c0_60 = arith.constant 0 : index
    %c0_61 = arith.constant 0 : index
    %c0_62 = arith.constant 0 : index
    %c0_63 = arith.constant 0 : index
    %129 = vector.load %arg12[%c0_60, %c0_61, %c0_62, %c0_63] : memref<2x1x16x4xf32, #tpu.memory_space<vmem>>, vector<2x1x16x4xf32>
    %130 = vector.shape_cast %129 : vector<2x1x16x4xf32> to vector<2x16x4xf32>
    %131 = vector.shape_cast %128 : vector<2x16x4xf32> to vector<2x1x16x4xf32>
    tpu.vector_store %arg12[%c0_60, %c0_61, %c0_62, %c0_63], %131 {strides = array<i32>} : memref<2x1x16x4xf32, #tpu.memory_space<vmem>>, vector<2x1x16x4xf32>,
    %c0_64 = arith.constant 0 : index
    %c0_65 = arith.constant 0 : index
    %c0_66 = arith.constant 0 : index
    %132 = vector.load %arg14[%c0_64, %c0_65, %c0_66] : memref<2x16x4xf32, #tpu.memory_space<vmem>>, vector<2x16x4xf32>
    tpu.vector_store %arg14[%c0_64, %c0_65, %c0_66], %128 {strides = array<i32>} : memref<2x16x4xf32, #tpu.memory_space<vmem>>, vector<2x16x4xf32>,
    return
  }
  func.func @transform_0(%arg0: i32, %arg1: i32) -> (i32, i32, i32, i32) {
    %c0_i32 = arith.constant 0 : i32
    %c0_i32_0 = arith.constant 0 : i32
    %c0_i32_1 = arith.constant 0 : i32
    return %arg0, %arg1, %c0_i32, %c0_i32_0 : i32, i32, i32, i32
  }
  func.func @transform_1(%arg0: i32, %arg1: i32) -> (i32, i32, i32, i32) {
    %c0_i32 = arith.constant 0 : i32
    %c0_i32_0 = arith.constant 0 : i32
    %c0_i32_1 = arith.constant 0 : i32
    %c0_i32_2 = arith.constant 0 : i32
    return %c0_i32, %arg0, %c0_i32_0, %c0_i32_1 : i32, i32, i32, i32
  }
  func.func @transform_2(%arg0: i32, %arg1: i32) -> (i32, i32) {
    %c0_i32 = arith.constant 0 : i32
    %c0_i32_0 = arith.constant 0 : i32
    %c0_i32_1 = arith.constant 0 : i32
    return %c0_i32, %c0_i32_0 : i32, i32
  }
  func.func @transform_3(%arg0: i32, %arg1: i32) -> (i32, i32) {
    %c0_i32 = arith.constant 0 : i32
    %c0_i32_0 = arith.constant 0 : i32
    %c0_i32_1 = arith.constant 0 : i32
    return %c0_i32, %c0_i32_0 : i32, i32
  }
  func.func @transform_4(%arg0: i32, %arg1: i32) -> (i32, i32) {
    %c0_i32 = arith.constant 0 : i32
    %c0_i32_0 = arith.constant 0 : i32
    %c0_i32_1 = arith.constant 0 : i32
    return %c0_i32, %c0_i32_0 : i32, i32
  }
  func.func @transform_5(%arg0: i32, %arg1: i32) -> (i32, i32) {
    %c0_i32 = arith.constant 0 : i32
    %c0_i32_0 = arith.constant 0 : i32
    %c0_i32_1 = arith.constant 0 : i32
    return %c0_i32, %c0_i32_0 : i32, i32
  }
  func.func @transform_6(%arg0: i32, %arg1: i32) -> (i32, i32) {
    %c0_i32 = arith.constant 0 : i32
    %c0_i32_0 = arith.constant 0 : i32
    %c0_i32_1 = arith.constant 0 : i32
    return %c0_i32, %c0_i32_0 : i32, i32
  }
  func.func @transform_7(%arg0: i32, %arg1: i32) -> (i32, i32) {
    %c0_i32 = arith.constant 0 : i32
    %c0_i32_0 = arith.constant 0 : i32
    %c0_i32_1 = arith.constant 0 : i32
    return %c0_i32, %c0_i32_0 : i32, i32
  }
  func.func @transform_8(%arg0: i32, %arg1: i32) -> (i32, i32) {
    %c0_i32 = arith.constant 0 : i32
    %c0_i32_0 = arith.constant 0 : i32
    %c0_i32_1 = arith.constant 0 : i32
    return %c0_i32, %c0_i32_0 : i32, i32
  }
  func.func @transform_9(%arg0: i32, %arg1: i32) -> (i32, i32) {
    %c0_i32 = arith.constant 0 : i32
    %c0_i32_0 = arith.constant 0 : i32
    %c0_i32_1 = arith.constant 0 : i32
    return %c0_i32, %c0_i32_0 : i32, i32
  }
  func.func @transform_10(%arg0: i32, %arg1: i32) -> (i32, i32, i32, i32) {
    %c0_i32 = arith.constant 0 : i32
    %c0_i32_0 = arith.constant 0 : i32
    %c0_i32_1 = arith.constant 0 : i32
    return %arg0, %arg1, %c0_i32, %c0_i32_0 : i32, i32, i32, i32
  }
}

</mosaic_0001>

<llo_original>
// kernel: dcrnn_next_time_pred.2
$region0: #{dcrnn_next_time_pred.2}
  #allocation0 [shape = 'u32[]', space=smem, size = 0x4, offset = 0x4, fixed_abs, tag = 'smem constant byte address 0x4 - core index']
  #allocation1 [shape = 'u32[144,128]{1,0:T(1,128)}', space=vmem, size = 0x12000, scoped, tag = 'internal scratch']
  #allocation17 [shape = 's32[]', space=sflag, size = 0x4, offset = 0, fixed_abs, tag = 'sflag constant byte address 0x0 - dummy sync flag']
  #allocation19 [shape = 's32[]', space=sflag, size = 0x4, offset = 0, fixed_abs, tag = 'sflag constant byte address 0x0 - dummy sync flag']
  %s0 = inlined_call_operand.hbm [shape: f32[2,8,16,16], index: 0, kind: input, shape index: {}]
  %s1 = inlined_call_operand.hbm [shape: f32[2,8,16,4], index: 1, kind: input, shape index: {}]
  %s2 = inlined_call_operand.hbm [shape: bf16[108,96], index: 2, kind: input, shape index: {}]
  %s3 = inlined_call_operand.hbm [shape: bf16[96,32], index: 3, kind: input, shape index: {}]
  %s4 = inlined_call_operand.hbm [shape: f32[1,96], index: 4, kind: input, shape index: {}]
  %s5 = inlined_call_operand.hbm [shape: bf16[192,96], index: 5, kind: input, shape index: {}]
  %s6 = inlined_call_operand.hbm [shape: bf16[96,32], index: 6, kind: input, shape index: {}]
  %s7 = inlined_call_operand.hbm [shape: f32[1,96], index: 7, kind: input, shape index: {}]
  %s8 = inlined_call_operand.hbm [shape: f32[2,2,16,32], index: 8, kind: output, shape index: {}]
  %s9 = sld [smem:[#allocation0]]
  $region101: #{dcrnn_next_time_pred.2} parent=0
    _
  %s11 = ssub.s32 1, %s9
  %s12 = scalar_select 0, %s11, %s9
  $region1: #{dcrnn_next_time_pred.2} parent=0
    #allocation2 [shape = 'u8[32768]{0}', space=vmem, size = 0x8000, scoped, tag = 'input window, operand 0']
    #allocation3 [shape = 's32[2]{0}', space=sflag, size = 0x8, scoped, tag = 'scoped memory for dcrnn_next_time_pred.2']
    #allocation4 [shape = 's32[2]{0}', space=sflag, size = 0x8, scoped, tag = 'scoped memory for dcrnn_next_time_pred.2']
    #allocation5 [shape = 'u8[32768]{0}', space=vmem, size = 0x8000, scoped, tag = 'input window, operand 1']
    #allocation6 [shape = 's32[2]{0}', space=sflag, size = 0x8, scoped, tag = 'scoped memory for dcrnn_next_time_pred.2']
    #allocation7 [shape = 'u8[28672]{0}', space=vmem, size = 0x7000, scoped, tag = 'input window, operand 2, single buffered']
    #allocation8 [shape = 'u8[24576]{0}', space=vmem, size = 0x6000, scoped, tag = 'input window, operand 3, single buffered']
    #allocation9 [shape = 's32[1]{0}', space=sflag, size = 0x4, scoped, tag = 'scoped memory for dcrnn_next_time_pred.2']
    #allocation10 [shape = 'u8[512]{0}', space=vmem, size = 0x400, scoped, tag = 'input window, operand 4, single buffered']
    #allocation11 [shape = 'u8[49152]{0}', space=vmem, size = 0xc000, scoped, tag = 'input window, operand 5, single buffered']
    #allocation12 [shape = 's32[1]{0}', space=sflag, size = 0x4, scoped, tag = 'scoped memory for dcrnn_next_time_pred.2']
    #allocation13 [shape = 'u8[24576]{0}', space=vmem, size = 0x6000, scoped, tag = 'input window, operand 6, single buffered']
    #allocation14 [shape = 'u8[512]{0}', space=vmem, size = 0x400, scoped, tag = 'input window, operand 7, single buffered']
    #allocation15 [shape = 's32[1]{0}', space=sflag, size = 0x4, scoped, tag = 'scoped memory for dcrnn_next_time_pred.2']
    #allocation16 [shape = 'u8[32768]{0}', space=vmem, size = 0x8000, scoped, tag = 'output window, operand 0, single buffered']
    %13 = vsyncpa [#allocation3], 0
    %s14 = scalar_lea.sflag [#allocation3], 1
    %15 = vsyncpa %s14, 0
    %16 = vsyncpa [#allocation6], 0
    %s17 = scalar_lea.sflag [#allocation6], 1
    %18 = vsyncpa %s17, 0
    %19 = vsyncpa [#allocation9], 0
    %20 = vsyncpa [#allocation12], 0
    %21 = vsyncpa [#allocation15], 0
    %22 = vsyncpa [#allocation4], 0
    loop: start=0, step=1, limit=10
    $region2: #{dcrnn_next_time_pred.2} parent=1 // loop_pre_header
      _
    $region3: #{dcrnn_next_time_pred.2} parent=1 // loop_header
      %s24 = sphi 0, %s28
      %p25 = scmp.ge.s32.totalorder %s24, 10
      %s31 = sphi 0, %s43
      %s32 = sphi 0, %s39
      %s33 = sphi 0, %s31
      %s34 = sphi 0, %s32
      %s35 = sphi 0, %s33
      %s36 = sphi 0, %s34
      %s48 = sphi 0, %s50
      %s51 = sphi 0, %s48
      %s52 = sphi 0, %s51
      %s68 = sphi 0, %s52
      %s76 = sphi 0, %s78
      %s79 = sphi 0, %s76
      %s80 = sphi 0, %s79
      %s96 = sphi 0, %s80
      %s100 = sphi 0, %s100
      %s102 = sphi 0, %s100
      %s103 = sphi 0, %s102
      %s117 = sphi 0, %s103
      %s121 = sphi 0, %s121
      %s123 = sphi 0, %s121
      %s124 = sphi 0, %s123
      %s138 = sphi 0, %s124
      %s142 = sphi 0, %s142
      %s144 = sphi 0, %s142
      %s145 = sphi 0, %s144
      %s159 = sphi 0, %s145
      %s163 = sphi 0, %s163
      %s165 = sphi 0, %s163
      %s166 = sphi 0, %s165
      %s180 = sphi 0, %s166
      %s184 = sphi 0, %s184
      %s186 = sphi 0, %s184
      %s187 = sphi 0, %s186
      %s201 = sphi 0, %s187
      %s205 = sphi 0, %s205
      %s207 = sphi 0, %s205
      %s208 = sphi 0, %s207
      %s222 = sphi 0, %s208
      %s228 = sphi 0, %s230
      %s231 = sphi 0, %s228
      %s232 = sphi 0, %s231
      %s248 = sphi 0, %s232
    $region4: #{dcrnn_next_time_pred.2} parent=1 // loop_header_branch
      %27 = sbr.rel (%p25) target = $region8
    $region5: #{dcrnn_next_time_pred.2} parent=1 // loop_body
      %s29 = ssub.s32 %s24, 1
      %s30 = ssub.s32 %s24, 2
      %s37 = sadd.s32 1, %s32
      %p38 = scmp.ge.s32.totalorder %s37, 8
      %s39 = scalar_select %p38, 0, %s37
      %s40 = sadd.s32 1, %s31
      %s41 = scalar_select %p38, %s40, %s31
      %p42 = scmp.ge.s32.totalorder %s41, 1
      %s43 = scalar_select %p42, 0, %s41
      %s44 = ssub.s32 %s31, %s43
      %s45 = ssub.s32 %s32, %s39
      %s46 = sor.u32 %s44, %s45
      %p47 = scmp.eq.s32.totalorder %s46, 0
      %s49 = sadd.s32 %s48, 1
      %s50 = scalar_select %p47, %s48, %s49
      %p53 = pneg %p47
      %p54 = scmp.eq.s32.totalorder %s24, 7
      %p55 = por %p53, %p54
      %p56 = scmp.ne.s32.totalorder %s48, %s51
      %p57 = scmp.eq.s32.totalorder %s24, 0
      %p58 = por %p56, %p57
      %p59 = scmp.ne.s32.totalorder %s48, %s51
      %p60 = scmp.eq.s32.totalorder %s29, 7
      %p61 = por %p59, %p60
      %p62 = scmp.ne.s32.totalorder %s51, %s52
      %p63 = scmp.eq.s32.totalorder %s29, 0
      %p64 = por %p62, %p63
      %p65 = scmp.ne.s32.totalorder %s51, %s52
      %p66 = scmp.eq.s32.totalorder %s30, 7
      %p67 = por %p65, %p66
      %p69 = scmp.ne.s32.totalorder %s52, %s68
      %p70 = scmp.eq.s32.totalorder %s30, 0
      %p71 = por %p69, %p70
      %s72 = ssub.s32 %s31, %s43
      %s73 = ssub.s32 %s32, %s39
      %s74 = sor.u32 %s72, %s73
      %p75 = scmp.eq.s32.totalorder %s74, 0
      %s77 = sadd.s32 %s76, 1
      %s78 = scalar_select %p75, %s76, %s77
      %p81 = pneg %p75
      %p82 = scmp.eq.s32.totalorder %s24, 7
      %p83 = por %p81, %p82
      %p84 = scmp.ne.s32.totalorder %s76, %s79
      %p85 = scmp.eq.s32.totalorder %s24, 0
      %p86 = por %p84, %p85
      %p87 = scmp.ne.s32.totalorder %s76, %s79
      %p88 = scmp.eq.s32.totalorder %s29, 7
      %p89 = por %p87, %p88
      %p90 = scmp.ne.s32.totalorder %s79, %s80
      %p91 = scmp.eq.s32.totalorder %s29, 0
      %p92 = por %p90, %p91
      %p93 = scmp.ne.s32.totalorder %s79, %s80
      %p94 = scmp.eq.s32.totalorder %s30, 7
      %p95 = por %p93, %p94
      %p97 = scmp.ne.s32.totalorder %s80, %s96
      %p98 = scmp.eq.s32.totalorder %s30, 0
      %p99 = por %p97, %p98
      %s101 = sadd.s32 %s100, 1
      %p104 = scmp.eq.s32.totalorder %s24, 7
      %p105 = scmp.ne.s32.totalorder %s100, %s102
      %p106 = scmp.eq.s32.totalorder %s24, 0
      %p107 = por %p105, %p106
      %p108 = scmp.ne.s32.totalorder %s100, %s102
      %p109 = scmp.eq.s32.totalorder %s29, 7
      %p110 = por %p108, %p109
      %p111 = scmp.ne.s32.totalorder %s102, %s103
      %p112 = scmp.eq.s32.totalorder %s29, 0
      %p113 = por %p111, %p112
      %p114 = scmp.ne.s32.totalorder %s102, %s103
      %p115 = scmp.eq.s32.totalorder %s30, 7
      %p116 = por %p114, %p115
      %p118 = scmp.ne.s32.totalorder %s103, %s117
      %p119 = scmp.eq.s32.totalorder %s30, 0
      %p120 = por %p118, %p119
      %s122 = sadd.s32 %s121, 1
      %p125 = scmp.eq.s32.totalorder %s24, 7
      %p126 = scmp.ne.s32.totalorder %s121, %s123
      %p127 = scmp.eq.s32.totalorder %s24, 0
      %p128 = por %p126, %p127
      %p129 = scmp.ne.s32.totalorder %s121, %s123
      %p130 = scmp.eq.s32.totalorder %s29, 7
      %p131 = por %p129, %p130
      %p132 = scmp.ne.s32.totalorder %s123, %s124
      %p133 = scmp.eq.s32.totalorder %s29, 0
      %p134 = por %p132, %p133
      %p135 = scmp.ne.s32.totalorder %s123, %s124
      %p136 = scmp.eq.s32.totalorder %s30, 7
      %p137 = por %p135, %p136
      %p139 = scmp.ne.s32.totalorder %s124, %s138
      %p140 = scmp.eq.s32.totalorder %s30, 0
      %p141 = por %p139, %p140
      %s143 = sadd.s32 %s142, 1
      %p146 = scmp.eq.s32.totalorder %s24, 7
      %p147 = scmp.ne.s32.totalorder %s142, %s144
      %p148 = scmp.eq.s32.totalorder %s24, 0
      %p149 = por %p147, %p148
      %p150 = scmp.ne.s32.totalorder %s142, %s144
      %p151 = scmp.eq.s32.totalorder %s29, 7
      %p152 = por %p150, %p151
      %p153 = scmp.ne.s32.totalorder %s144, %s145
      %p154 = scmp.eq.s32.totalorder %s29, 0
      %p155 = por %p153, %p154
      %p156 = scmp.ne.s32.totalorder %s144, %s145
      %p157 = scmp.eq.s32.totalorder %s30, 7
      %p158 = por %p156, %p157
      %p160 = scmp.ne.s32.totalorder %s145, %s159
      %p161 = scmp.eq.s32.totalorder %s30, 0
      %p162 = por %p160, %p161
      %s164 = sadd.s32 %s163, 1
      %p167 = scmp.eq.s32.totalorder %s24, 7
      %p168 = scmp.ne.s32.totalorder %s163, %s165
      %p169 = scmp.eq.s32.totalorder %s24, 0
      %p170 = por %p168, %p169
      %p171 = scmp.ne.s32.totalorder %s163, %s165
      %p172 = scmp.eq.s32.totalorder %s29, 7
      %p173 = por %p171, %p172
      %p174 = scmp.ne.s32.totalorder %s165, %s166
      %p175 = scmp.eq.s32.totalorder %s29, 0
      %p176 = por %p174, %p175
      %p177 = scmp.ne.s32.totalorder %s165, %s166
      %p178 = scmp.eq.s32.totalorder %s30, 7
      %p179 = por %p177, %p178
      %p181 = scmp.ne.s32.totalorder %s166, %s180
      %p182 = scmp.eq.s32.totalorder %s30, 0
      %p183 = por %p181, %p182
      %s185 = sadd.s32 %s184, 1
      %p188 = scmp.eq.s32.totalorder %s24, 7
      %p189 = scmp.ne.s32.totalorder %s184, %s186
      %p190 = scmp.eq.s32.totalorder %s24, 0
      %p191 = por %p189, %p190
      %p192 = scmp.ne.s32.totalorder %s184, %s186
      %p193 = scmp.eq.s32.totalorder %s29, 7
      %p194 = por %p192, %p193
      %p195 = scmp.ne.s32.totalorder %s186, %s187
      %p196 = scmp.eq.s32.totalorder %s29, 0
      %p197 = por %p195, %p196
      %p198 = scmp.ne.s32.totalorder %s186, %s187
      %p199 = scmp.eq.s32.totalorder %s30, 7
      %p200 = por %p198, %p199
      %p202 = scmp.ne.s32.totalorder %s187, %s201
      %p203 = scmp.eq.s32.totalorder %s30, 0
      %p204 = por %p202, %p203
      %s206 = sadd.s32 %s205, 1
      %p209 = scmp.eq.s32.totalorder %s24, 7
      %p210 = scmp.ne.s32.totalorder %s205, %s207
      %p211 = scmp.eq.s32.totalorder %s24, 0
      %p212 = por %p210, %p211
      %p213 = scmp.ne.s32.totalorder %s205, %s207
      %p214 = scmp.eq.s32.totalorder %s29, 7
      %p215 = por %p213, %p214
      %p216 = scmp.ne.s32.totalorder %s207, %s208
      %p217 = scmp.eq.s32.totalorder %s29, 0
      %p218 = por %p216, %p217
      %p219 = scmp.ne.s32.totalorder %s207, %s208
      %p220 = scmp.eq.s32.totalorder %s30, 7
      %p221 = por %p219, %p220
      %p223 = scmp.ne.s32.totalorder %s208, %s222
      %p224 = scmp.eq.s32.totalorder %s30, 0
      %p225 = por %p223, %p224
      %s226 = ssub.s32 %s31, %s43
      %p227 = scmp.eq.s32.totalorder %s226, 0
      %s229 = sadd.s32 %s228, 1
      %s230 = scalar_select %p227, %s228, %s229
      %p233 = pneg %p227
      %p234 = scmp.eq.s32.totalorder %s24, 7
      %p235 = por %p233, %p234
      %p236 = scmp.ne.s32.totalorder %s228, %s231
      %p237 = scmp.eq.s32.totalorder %s24, 0
      %p238 = por %p236, %p237
      %p239 = scmp.ne.s32.totalorder %s228, %s231
      %p240 = scmp.eq.s32.totalorder %s29, 7
      %p241 = por %p239, %p240
      %p242 = scmp.ne.s32.totalorder %s231, %s232
      %p243 = scmp.eq.s32.totalorder %s29, 0
      %p244 = por %p242, %p243
      %p245 = scmp.ne.s32.totalorder %s231, %s232
      %p246 = scmp.eq.s32.totalorder %s30, 7
      %p247 = por %p245, %p246
      %p249 = scmp.ne.s32.totalorder %s232, %s248
      %p250 = scmp.eq.s32.totalorder %s30, 0
      %p251 = por %p249, %p250
      %p252 = scmp.le.s32.totalorder 1, %s24
      %p253 = scmp.lt.s32.totalorder %s24, 9
      %p254 = pnand %p252, %p253
      %p255 = pneg %p254
      // Predicated region
      $region9: #{dcrnn_next_time_pred.2} parent=5 // pred_check
        _
      $region10: #{dcrnn_next_time_pred.2} parent=5 // pred_check_branch
        %257 = sbr.rel (%p254) target = $region12
      $region11: #{dcrnn_next_time_pred.2} parent=5 // pred_region
        %s258 = ssub.s32 %s24, 1
        // Predicated region
        $region13: #{dcrnn_next_time_pred.2} parent=11 // pred_check
          %p259 = pneg %p113
        $region14: #{dcrnn_next_time_pred.2} parent=11 // pred_check_branch
          %261 = sbr.rel (%p259) target = $region16
        $region15: #{dcrnn_next_time_pred.2} parent=11 // pred_region
          %s263 = ssub.s32 896, 896
          %264 = vsyncadd [#allocation6], %s263
          %s265 = sshll.u32 [#allocation7], 4
          %s266 = int_to_ptr.vmem [resolvable:$true] %s265
          %271 = dma.hbm_to_vmem [thread:$0]  %s2, 896, %s266, [#allocation6], 64, 64, 4
        $region16: #{dcrnn_next_time_pred.2} parent=11 // pred_fallthru
          _
        // Predicated region
        $region17: #{dcrnn_next_time_pred.2} parent=11 // pred_check
          %p272 = pneg %p134
        $region18: #{dcrnn_next_time_pred.2} parent=11 // pred_check_branch
          %274 = sbr.rel (%p272) target = $region20
        $region19: #{dcrnn_next_time_pred.2} parent=11 // pred_region
          %s276 = ssub.s32 768, 768
          %277 = vsyncadd [#allocation9], %s276
          %s278 = sshll.u32 [#allocation8], 4
          %s279 = int_to_ptr.vmem [resolvable:$true] %s278
          %284 = dma.hbm_to_vmem [thread:$0]  %s3, 768, %s279, [#allocation9], 64, 64, 4
        $region20: #{dcrnn_next_time_pred.2} parent=11 // pred_fallthru
          _
        // Predicated region
        $region21: #{dcrnn_next_time_pred.2} parent=11 // pred_check
          %p285 = pneg %p155
        $region22: #{dcrnn_next_time_pred.2} parent=11 // pred_check_branch
          %287 = sbr.rel (%p285) target = $region24
        $region23: #{dcrnn_next_time_pred.2} parent=11 // pred_region
          %s289 = ssub.s32 16, 16
          %290 = vsyncadd [#allocation9], %s289
          %s292 = sshll.u32 [#allocation10], 4
          %s293 = int_to_ptr.vmem [resolvable:$true] %s292
          %295 = dma.hbm_to_vmem [thread:$0]  %s4, 16, %s293, [#allocation9]
        $region24: #{dcrnn_next_time_pred.2} parent=11 // pred_fallthru
          _
        // Predicated region
        $region25: #{dcrnn_next_time_pred.2} parent=11 // pred_check
          %p296 = pneg %p176
        $region26: #{dcrnn_next_time_pred.2} parent=11 // pred_check_branch
          %298 = sbr.rel (%p296) target = $region28
        $region27: #{dcrnn_next_time_pred.2} parent=11 // pred_region
          %s300 = ssub.s32 1536, 1536
          %301 = vsyncadd [#allocation12], %s300
          %s302 = sshll.u32 [#allocation11], 4
          %s303 = int_to_ptr.vmem [resolvable:$true] %s302
          %308 = dma.hbm_to_vmem [thread:$0]  %s5, 1536, %s303, [#allocation12], 64, 64, 4
        $region28: #{dcrnn_next_time_pred.2} parent=11 // pred_fallthru
          _
        // Predicated region
        $region29: #{dcrnn_next_time_pred.2} parent=11 // pred_check
          %p309 = pneg %p197
        $region30: #{dcrnn_next_time_pred.2} parent=11 // pred_check_branch
          %311 = sbr.rel (%p309) target = $region32
        $region31: #{dcrnn_next_time_pred.2} parent=11 // pred_region
          %s313 = ssub.s32 768, 768
          %314 = vsyncadd [#allocation12], %s313
          %s315 = sshll.u32 [#allocation13], 4
          %s316 = int_to_ptr.vmem [resolvable:$true] %s315
          %321 = dma.hbm_to_vmem [thread:$0]  %s6, 768, %s316, [#allocation12], 64, 64, 4
        $region32: #{dcrnn_next_time_pred.2} parent=11 // pred_fallthru
          _
        // Predicated region
        $region33: #{dcrnn_next_time_pred.2} parent=11 // pred_check
          %p322 = pneg %p218
        $region34: #{dcrnn_next_time_pred.2} parent=11 // pred_check_branch
          %324 = sbr.rel (%p322) target = $region36
        $region35: #{dcrnn_next_time_pred.2} parent=11 // pred_region
          %s326 = ssub.s32 16, 16
          %327 = vsyncadd [#allocation15], %s326
          %s329 = sshll.u32 [#allocation14], 4
          %s330 = int_to_ptr.vmem [resolvable:$true] %s329
          %332 = dma.hbm_to_vmem [thread:$0]  %s7, 16, %s330, [#allocation15]
        $region36: #{dcrnn_next_time_pred.2} parent=11 // pred_fallthru
          _
      $region12: #{dcrnn_next_time_pred.2} parent=5 // pred_fallthru
        _
      %p333 = scmp.lt.s32.totalorder %s24, 8
      // Predicated region
      $region37: #{dcrnn_next_time_pred.2} parent=5 // pred_check
        %p334 = pneg %p333
      $region38: #{dcrnn_next_time_pred.2} parent=5 // pred_check_branch
        %336 = sbr.rel (%p334) target = $region40
      $region39: #{dcrnn_next_time_pred.2} parent=5 // pred_region
        // Predicated region
        $region41: #{dcrnn_next_time_pred.2} parent=39 // pred_check
          %p337 = pneg %p58
        $region42: #{dcrnn_next_time_pred.2} parent=39 // pred_check_branch
          %339 = sbr.rel (%p337) target = $region44
        $region43: #{dcrnn_next_time_pred.2} parent=39 // pred_region
          #allocation18 [shape = 'u32[6]{0}', space=smem, size = 0x18, scoped, tag = 'DMA stride descriptor']
          %s340 = sand.u32 %s48, 1
          %s341 = scalar_lea.sflag [#allocation3], %s340
          %s342 = sand.u32 %s48, 1
          %s343 = smul.addr %s342, 32
          %s344 = scalar_lea.vmem [#allocation2], %s343
          %s345 = smul.u32 2, %s31
          %s347 = ssub.s32 512, 512
          %348 = vsyncadd %s341, %s347
          %s349 = smul.addr %s32, 2
          %s350 = smul.addr %s345, 16
          %s351 = sadd.s32 %s349, %s350
          %s352 = smul.addr %s351, 128
          %s353 = scalar_lea.hbm %s0, %s352
          %s355 = sshll.u32 1, 14
          %s356 = sxor.u32 4294967295, %s355
          %s358 = sld [smem:[#allocation0]]
          %s359 = sadd.s32 2, %s358
          %s361 = sshll.u32 7, 26
          %s362 = sxor.u32 4294967295, %s361
          %s363 = sand.u32 0, %s362
          %s364 = sshll.u32 %s359, 26
          %s365 = sor.u32 %s363, %s364
          %s366 = sshll.u32 %s344, 4
          %s367 = int_to_ptr.vmem [resolvable:$true] %s366
          %373 = sst [smem:[#allocation18]] 2048
          %s374 = scalar_lea.smem [#allocation18], 1
          %375 = sst [smem:[%s374]] 256
          %s376 = scalar_lea.smem [#allocation18], 2
          %377 = sst [smem:[%s376]] 2
          %s378 = scalar_lea.smem [#allocation18], 3
          %379 = sst [smem:[%s378]] 128
          %s380 = scalar_lea.smem [#allocation18], 4
          %381 = sst [smem:[%s380]] 128
          %s382 = scalar_lea.smem [#allocation18], 5
          %383 = sst [smem:[%s382]] 8
          %385 = dma.general %s353, 512, %s367, %s341, [#allocation17], [#allocation18], %s365, 0
        $region44: #{dcrnn_next_time_pred.2} parent=39 // pred_fallthru
          _
        // Predicated region
        $region45: #{dcrnn_next_time_pred.2} parent=39 // pred_check
          %p386 = pneg %p86
        $region46: #{dcrnn_next_time_pred.2} parent=39 // pred_check_branch
          %388 = sbr.rel (%p386) target = $region48
        $region47: #{dcrnn_next_time_pred.2} parent=39 // pred_region
          #allocation20 [shape = 'u32[6]{0}', space=smem, size = 0x18, scoped, tag = 'DMA stride descriptor']
          %s389 = sand.u32 %s24, 1
          %s390 = scalar_lea.sflag [#allocation6], %s389
          %s391 = sand.u32 %s76, 1
          %s392 = smul.addr %s391, 32
          %s393 = scalar_lea.vmem [#allocation5], %s392
          %s394 = smul.u32 2, %s31
          %s396 = ssub.s32 512, 512
          %397 = vsyncadd %s390, %s396
          %s398 = smul.addr %s32, 2
          %s399 = smul.addr %s394, 16
          %s400 = sadd.s32 %s398, %s399
          %s401 = smul.addr %s400, 128
          %s402 = scalar_lea.hbm %s1, %s401
          %s404 = sshll.u32 1, 14
          %s405 = sxor.u32 4294967295, %s404
          %s407 = sld [smem:[#allocation0]]
          %s408 = sadd.s32 2, %s407
          %s410 = sshll.u32 7, 26
          %s411 = sxor.u32 4294967295, %s410
          %s412 = sand.u32 0, %s411
          %s413 = sshll.u32 %s408, 26
          %s414 = sor.u32 %s412, %s413
          %s415 = sshll.u32 %s393, 4
          %s416 = int_to_ptr.vmem [resolvable:$true] %s415
          %422 = sst [smem:[#allocation20]] 2048
          %s423 = scalar_lea.smem [#allocation20], 1
          %424 = sst [smem:[%s423]] 256
          %s425 = scalar_lea.smem [#allocation20], 2
          %426 = sst [smem:[%s425]] 2
          %s427 = scalar_lea.smem [#allocation20], 3
          %428 = sst [smem:[%s427]] 128
          %s429 = scalar_lea.smem [#allocation20], 4
          %430 = sst [smem:[%s429]] 128
          %s431 = scalar_lea.smem [#allocation20], 5
          %432 = sst [smem:[%s431]] 8
          %434 = dma.general %s402, 512, %s416, %s390, [#allocation19], [#allocation20], %s414, 0
        $region48: #{dcrnn_next_time_pred.2} parent=39 // pred_fallthru
          _
      $region40: #{dcrnn_next_time_pred.2} parent=5 // pred_fallthru
        _
      %p435 = scmp.le.s32.totalorder 1, %s24
      %p436 = scmp.lt.s32.totalorder %s24, 9
      %p437 = pnand %p435, %p436
      %p438 = pneg %p437
      // Predicated region
      $region49: #{dcrnn_next_time_pred.2} parent=5 // pred_check
        _
      $region50: #{dcrnn_next_time_pred.2} parent=5 // pred_check_branch
        %440 = sbr.rel (%p437) target = $region52
      $region51: #{dcrnn_next_time_pred.2} parent=5 // pred_region
        %s441 = ssub.s32 %s24, 1
        %s442 = sand.u32 %s51, 1
        %s443 = scalar_lea.sflag [#allocation3], %s442
        %s444 = sand.u32 %s51, 1
        %s445 = smul.addr %s444, 32
        %s446 = scalar_lea.vmem [#allocation2], %s445
        // Predicated region
        $region53: #{dcrnn_next_time_pred.2} parent=51 // pred_check
          %p447 = pneg %p64
        $region54: #{dcrnn_next_time_pred.2} parent=51 // pred_check_branch
          %449 = sbr.rel (%p447) target = $region56
        $region55: #{dcrnn_next_time_pred.2} parent=51 // pred_region
          %450 = dma.done %s443, 512
        $region56: #{dcrnn_next_time_pred.2} parent=51 // pred_fallthru
          _
        %s451 = sand.u32 %s29, 1
        %s452 = scalar_lea.sflag [#allocation6], %s451
        %s453 = sand.u32 %s79, 1
        %s454 = smul.addr %s453, 32
        %s455 = scalar_lea.vmem [#allocation5], %s454
        // Predicated region
        $region57: #{dcrnn_next_time_pred.2} parent=51 // pred_check
          %p456 = pneg %p92
        $region58: #{dcrnn_next_time_pred.2} parent=51 // pred_check_branch
          %458 = sbr.rel (%p456) target = $region60
        $region59: #{dcrnn_next_time_pred.2} parent=51 // pred_region
          %459 = dma.done %s452, 512
        $region60: #{dcrnn_next_time_pred.2} parent=51 // pred_fallthru
          _
        // Predicated region
        $region61: #{dcrnn_next_time_pred.2} parent=51 // pred_check
          %p460 = pneg %p113
        $region62: #{dcrnn_next_time_pred.2} parent=51 // pred_check_branch
          %462 = sbr.rel (%p460) target = $region64
        $region63: #{dcrnn_next_time_pred.2} parent=51 // pred_region
          %463 = dma.done [#allocation6], 896
        $region64: #{dcrnn_next_time_pred.2} parent=51 // pred_fallthru
          _
        // Predicated region
        $region65: #{dcrnn_next_time_pred.2} parent=51 // pred_check
          %p464 = pneg %p134
        $region66: #{dcrnn_next_time_pred.2} parent=51 // pred_check_branch
          %466 = sbr.rel (%p464) target = $region68
        $region67: #{dcrnn_next_time_pred.2} parent=51 // pred_region
          %467 = dma.done [#allocation9], 768
        $region68: #{dcrnn_next_time_pred.2} parent=51 // pred_fallthru
          _
        // Predicated region
        $region69: #{dcrnn_next_time_pred.2} parent=51 // pred_check
          %p468 = pneg %p155
        $region70: #{dcrnn_next_time_pred.2} parent=51 // pred_check_branch
          %470 = sbr.rel (%p468) target = $region72
        $region71: #{dcrnn_next_time_pred.2} parent=51 // pred_region
          %471 = dma.done [#allocation9], 16
        $region72: #{dcrnn_next_time_pred.2} parent=51 // pred_fallthru
          _
        // Predicated region
        $region73: #{dcrnn_next_time_pred.2} parent=51 // pred_check
          %p472 = pneg %p176
        $region74: #{dcrnn_next_time_pred.2} parent=51 // pred_check_branch
          %474 = sbr.rel (%p472) target = $region76
        $region75: #{dcrnn_next_time_pred.2} parent=51 // pred_region
          %475 = dma.done [#allocation12], 1536
        $region76: #{dcrnn_next_time_pred.2} parent=51 // pred_fallthru
          _
        // Predicated region
        $region77: #{dcrnn_next_time_pred.2} parent=51 // pred_check
          %p476 = pneg %p197
        $region78: #{dcrnn_next_time_pred.2} parent=51 // pred_check_branch
          %478 = sbr.rel (%p476) target = $region80
        $region79: #{dcrnn_next_time_pred.2} parent=51 // pred_region
          %479 = dma.done [#allocation12], 768
        $region80: #{dcrnn_next_time_pred.2} parent=51 // pred_fallthru
          _
        // Predicated region
        $region81: #{dcrnn_next_time_pred.2} parent=51 // pred_check
          %p480 = pneg %p218
        $region82: #{dcrnn_next_time_pred.2} parent=51 // pred_check_branch
          %482 = sbr.rel (%p480) target = $region84
        $region83: #{dcrnn_next_time_pred.2} parent=51 // pred_region
          %483 = dma.done [#allocation15], 16
        $region84: #{dcrnn_next_time_pred.2} parent=51 // pred_fallthru
          _
        %s484 = sand.u32 %s51, 1
        %s485 = scalar_lea.sflag [#allocation3], %s484
        %s486 = sand.u32 %s51, 1
        %s487 = smul.addr %s486, 32
        %s488 = scalar_lea.vmem [#allocation2], %s487
        %p489 = pneg %p64
        %p490 = pneg %p61
        %s491 = sand.u32 %s29, 1
        %s492 = scalar_lea.sflag [#allocation6], %s491
        %s493 = sand.u32 %s79, 1
        %s494 = smul.addr %s493, 32
        %s495 = scalar_lea.vmem [#allocation5], %s494
        %p496 = pneg %p92
        %p497 = pneg %p89
        %p498 = pneg %p113
        %p499 = pneg %p110
        %p500 = pneg %p134
        %p501 = pneg %p131
        %p502 = pneg %p155
        %p503 = pneg %p152
        %p504 = pneg %p176
        %p505 = pneg %p173
        %p506 = pneg %p197
        %p507 = pneg %p194
        %p508 = pneg %p218
        %p509 = pneg %p215
        %p510 = pneg %p244
        %p511 = pneg %p241
        %s512 = smul.u32 2, %s33
        %s513 = smul.u32 2, %s33
        %s514 = smul.u32 2, %s33
        %p516 = scmp.eq.s32.totalorder %s34, 0
        // Predicated region
        $region85: #{dcrnn_next_time_pred.2} parent=51 // pred_check
          %p517 = pneg %p516
        $region86: #{dcrnn_next_time_pred.2} parent=51 // pred_check_branch
          %519 = sbr.rel (%p517) target = $region88
        $region87: #{dcrnn_next_time_pred.2} parent=51 // pred_region
          %vm520 = vcmask 261120
          %521 = vst.msk [vmem:[#allocation16] sm:$0xff] %vm520, 0.0
          %522 = vst.msk [vmem:[#allocation16 + $0x8] sm:$0xff] %vm520, 0.0
          %523 = vst.msk [vmem:[#allocation16 + $0x10] sm:$0xff] %vm520, 0.0
          %524 = vst.msk [vmem:[#allocation16 + $0x18] sm:$0xff] %vm520, 0.0
          %525 = vst.msk [vmem:[#allocation16 + $0x20] sm:$0xff] %vm520, 0.0
          %526 = vst.msk [vmem:[#allocation16 + $0x28] sm:$0xff] %vm520, 0.0
          %527 = vst.msk [vmem:[#allocation16 + $0x30] sm:$0xff] %vm520, 0.0
          %528 = vst.msk [vmem:[#allocation16 + $0x38] sm:$0xff] %vm520, 0.0
        $region88: #{dcrnn_next_time_pred.2} parent=51 // pred_fallthru
          _
        %v529 = vld [vmem:[%s446] sm:$0xff]
        %v530 = vld [vmem:[%s446 + $0x8] sm:$0xff]
        %v531 = vld [vmem:[%s446 + $0x10] sm:$0xff]
        %v532 = vld [vmem:[%s446 + $0x18] sm:$0xff]
        %v533 = vpack.c.bf16 %v530, %v529
        %v534 = vpack.c.bf16 %v532, %v531
        %v535 = vld [vmem:[%s455] sm:$0xff]
        %v536 = vld [vmem:[%s455 + $0x8] sm:$0xff]
        %v537 = vld [vmem:[%s455 + $0x10] sm:$0xff]
        %v538 = vld [vmem:[%s455 + $0x18] sm:$0xff]
        %v539 = vld [vmem:[#allocation7] sm:$0xf]
        %v540 = vld [vmem:[#allocation7 + $0x4] sm:$0xf]
        %v541 = vld [vmem:[#allocation7 + $0x8] sm:$0xf]
        %v542 = vld [vmem:[#allocation7 + $0xc] sm:$0xf]
        %v543 = vld [vmem:[#allocation7 + $0x10] sm:$0xf]
        %v544 = vld [vmem:[#allocation7 + $0x14] sm:$0xf]
        %v545 = vld [vmem:[#allocation7 + $0x18] sm:$0xf]
        %v546 = vld [vmem:[#allocation7 + $0x1c] sm:$0xf]
        %v547 = vld [vmem:[#allocation7 + $0x20] sm:$0xf]
        %v548 = vld [vmem:[#allocation7 + $0x24] sm:$0xf]
        %v549 = vld [vmem:[#allocation7 + $0x28] sm:$0xf]
        %v550 = vld [vmem:[#allocation7 + $0x2c] sm:$0xf]
        %v551 = vld [vmem:[#allocation7 + $0x30] sm:$0xf]
        %v552 = vld [vmem:[#allocation7 + $0x34] sm:$0x3]
        %v553 = vld [vmem:[#allocation8] sm:$0xf]
        %v554 = vld [vmem:[#allocation8 + $0x4] sm:$0xf]
        %v555 = vld [vmem:[#allocation8 + $0x8] sm:$0xf]
        %v556 = vld [vmem:[#allocation8 + $0xc] sm:$0xf]
        %v557 = vld [vmem:[#allocation8 + $0x10] sm:$0xf]
        %v558 = vld [vmem:[#allocation8 + $0x14] sm:$0xf]
        %v559 = vld [vmem:[#allocation8 + $0x18] sm:$0xf]
        %v560 = vld [vmem:[#allocation8 + $0x1c] sm:$0xf]
        %v561 = vld [vmem:[#allocation8 + $0x20] sm:$0xf]
        %v562 = vld [vmem:[#allocation8 + $0x24] sm:$0xf]
        %v563 = vld [vmem:[#allocation8 + $0x28] sm:$0xf]
        %v564 = vld [vmem:[#allocation8 + $0x2c] sm:$0xf]
        %v565 = vld [vmem:[#allocation10] sm:$0x1]
        %v566 = vld [vmem:[#allocation16] sm:$0xff]
        %v567 = vld [vmem:[#allocation16 + $0x8] sm:$0xff]
        %v568 = vld [vmem:[#allocation16 + $0x10] sm:$0xff]
        %v569 = vld [vmem:[#allocation16 + $0x18] sm:$0xff]
        %574 = vrot.lane.b32.xlu0 %v566, 4
        %v575 = vpop.permute.xlu0 %574
        %576 = vrot.lane.b32.xlu0 %v567, 4
        %v577 = vpop.permute.xlu0 %576
        %578 = vrot.lane.b32.xlu0 %v568, 4
        %v579 = vpop.permute.xlu0 %578
        %580 = vrot.lane.b32.xlu0 %v569, 4
        %v581 = vpop.permute.xlu0 %580
        %vm586 = vcmask 31744
        %v587 = vsel %vm586, %v535, %v575
        %v588 = vsel %vm586, %v536, %v577
        %v589 = vsel %vm586, %v537, %v579
        %v590 = vsel %vm586, %v538, %v581
        %v591 = vpack.c.bf16 %v588, %v587
        %v592 = vpack.c.bf16 %v590, %v589
        %vm593 = vcmask 130048
        %v595 = vsel %vm593, %v533, 0
        %597 = vmatprep.subr.bf16.mxu0 0
        %598 = vmatpush1.bf16.msra.mxu0 %v591
        %599 = vmatprep.subr.bf16.mxu0 0
        %600 = vmatpush1.bf16.msra.mxu0 0
        %601 = vmatprep.subr.bf16.mxu0 0
        %602 = vmatpush1.bf16.msra.mxu0 0
        %603 = vmatprep.subr.bf16.mxu0 0
        %604 = vmatpush1.bf16.msra.mxu0 0
        %605 = vmatprep.subr.bf16.mxu0 0
        %606 = vmatpush1.bf16.msra.mxu0 0
        %607 = vmatprep.subr.bf16.mxu0 0
        %608 = vmatpush1.bf16.msra.mxu0 0
        %609 = vmatprep.subr.bf16.mxu0 0
        %610 = vmatpush1.bf16.msra.mxu0 0
        %611 = vmatprep.subr.bf16.mxu0 0
        %612 = vmatpush1.bf16.msra.mxu0 0
        %613 = vmatprep.subr.bf16.mxu0 0
        %614 = vmatpush1.bf16.msra.mxu0 0
        %615 = vmatprep.subr.bf16.mxu0 0
        %616 = vmatpush1.bf16.msra.mxu0 0
        %617 = vmatprep.subr.bf16.mxu0 0
        %618 = vmatpush1.bf16.msra.mxu0 0
        %619 = vmatprep.subr.bf16.mxu0 0
        %620 = vmatpush1.bf16.msra.mxu0 0
        %621 = vmatprep.subr.bf16.mxu0 0
        %622 = vmatpush1.bf16.msra.mxu0 0
        %623 = vmatprep.subr.bf16.mxu0 0
        %624 = vmatpush1.bf16.msra.mxu0 0
        %625 = vmatprep.subr.bf16.mxu0 0
        %626 = vmatpush1.bf16.msra.mxu0 0
        %627 = vmatprep.subr.bf16.mxu0 0
        %628 = vmatpush1.bf16.msra.mxu0 0
        %629 = vmatprep.mubr.bf16.mxu0 0
        %630 = vmatmul.mubr.bf16.gmra.mrb[0].mxu0 %v595
        %v631 = vpop.f32.mrb[0].mxu0
        %v632 = vadd.f32 0.0, %v631
        %v633 = vpop.f32.mrb[0].mxu0
        %v634 = vpop.f32.mrb[0].mxu0
        %v635 = vadd.f32 0.0, %v634
        %v636 = vpop.f32.mrb[0].mxu0
        %637 = vdwg.mxu0
        %v639 = vsel %vm593, %v534, 0
        %641 = vmatprep.subr.bf16.mxu0 0
        %642 = vmatpush1.bf16.msra.mxu0 %v592
        %643 = vmatprep.subr.bf16.mxu0 0
        %644 = vmatpush1.bf16.msra.mxu0 0
        %645 = vmatprep.subr.bf16.mxu0 0
        %646 = vmatpush1.bf16.msra.mxu0 0
        %647 = vmatprep.subr.bf16.mxu0 0
        %648 = vmatpush1.bf16.msra.mxu0 0
        %649 = vmatprep.subr.bf16.mxu0 0
        %650 = vmatpush1.bf16.msra.mxu0 0
        %651 = vmatprep.subr.bf16.mxu0 0
        %652 = vmatpush1.bf16.msra.mxu0 0
        %653 = vmatprep.subr.bf16.mxu0 0
        %654 = vmatpush1.bf16.msra.mxu0 0
        %655 = vmatprep.subr.bf16.mxu0 0
        %656 = vmatpush1.bf16.msra.mxu0 0
        %657 = vmatprep.subr.bf16.mxu0 0
        %658 = vmatpush1.bf16.msra.mxu0 0
        %659 = vmatprep.subr.bf16.mxu0 0
        %660 = vmatpush1.bf16.msra.mxu0 0
        %661 = vmatprep.subr.bf16.mxu0 0
        %662 = vmatpush1.bf16.msra.mxu0 0
        %663 = vmatprep.subr.bf16.mxu0 0
        %664 = vmatpush1.bf16.msra.mxu0 0
        %665 = vmatprep.subr.bf16.mxu0 0
        %666 = vmatpush1.bf16.msra.mxu0 0
        %667 = vmatprep.subr.bf16.mxu0 0
        %668 = vmatpush1.bf16.msra.mxu0 0
        %669 = vmatprep.subr.bf16.mxu0 0
        %670 = vmatpush1.bf16.msra.mxu0 0
        %671 = vmatprep.subr.bf16.mxu0 0
        %672 = vmatpush1.bf16.msra.mxu0 0
        %673 = vmatprep.mubr.bf16.mxu0 0
        %674 = vmatmul.mubr.bf16.gmra.mrb[0].mxu0 %v639
        %v675 = vpop.f32.mrb[0].mxu0
        %v676 = vadd.f32 0.0, %v675
        %v677 = vpop.f32.mrb[0].mxu0
        %v678 = vpop.f32.mrb[0].mxu0
        %v679 = vadd.f32 0.0, %v678
        %v680 = vpop.f32.mrb[0].mxu0
        %681 = vdwg.mxu0
        %v682 = vpack.c.bf16 %v635, %v632
        %v683 = vpack.c.bf16 %v679, %v676
        %684 = vmatprep.subr.bf16.mxu0 0
        %685 = vmatpush1.bf16.msra.mxu0 %v682
        %686 = vmatprep.subr.bf16.mxu0 0
        %687 = vmatpush1.bf16.msra.mxu0 0
        %688 = vmatprep.subr.bf16.mxu0 0
        %689 = vmatpush1.bf16.msra.mxu0 0
        %690 = vmatprep.subr.bf16.mxu0 0
        %691 = vmatpush1.bf16.msra.mxu0 0
        %692 = vmatprep.subr.bf16.mxu0 0
        %693 = vmatpush1.bf16.msra.mxu0 0
        %694 = vmatprep.subr.bf16.mxu0 0
        %695 = vmatpush1.bf16.msra.mxu0 0
        %696 = vmatprep.subr.bf16.mxu0 0
        %697 = vmatpush1.bf16.msra.mxu0 0
        %698 = vmatprep.subr.bf16.mxu0 0
        %699 = vmatpush1.bf16.msra.mxu0 0
        %700 = vmatprep.subr.bf16.mxu0 0
        %701 = vmatpush1.bf16.msra.mxu0 0
        %702 = vmatprep.subr.bf16.mxu0 0
        %703 = vmatpush1.bf16.msra.mxu0 0
        %704 = vmatprep.subr.bf16.mxu0 0
        %705 = vmatpush1.bf16.msra.mxu0 0
        %706 = vmatprep.subr.bf16.mxu0 0
        %707 = vmatpush1.bf16.msra.mxu0 0
        %708 = vmatprep.subr.bf16.mxu0 0
        %709 = vmatpush1.bf16.msra.mxu0 0
        %710 = vmatprep.subr.bf16.mxu0 0
        %711 = vmatpush1.bf16.msra.mxu0 0
        %712 = vmatprep.subr.bf16.mxu0 0
        %713 = vmatpush1.bf16.msra.mxu0 0
        %714 = vmatprep.subr.bf16.mxu0 0
        %715 = vmatpush1.bf16.msra.mxu0 0
        %716 = vmatprep.mubr.bf16.mxu0 0
        %717 = vmatmul.mubr.bf16.gmra.mrb[0].mxu0 %v595
        %v718 = vpop.f32.mrb[0].mxu0
        %v719 = vadd.f32 0.0, %v718
        %v720 = vpop.f32.mrb[0].mxu0
        %v721 = vpop.f32.mrb[0].mxu0
        %v722 = vadd.f32 0.0, %v721
        %v723 = vpop.f32.mrb[0].mxu0
        %724 = vdwg.mxu0
        %725 = vmatprep.subr.bf16.mxu0 0
        %726 = vmatpush1.bf16.msra.mxu0 %v683
        %727 = vmatprep.subr.bf16.mxu0 0
        %728 = vmatpush1.bf16.msra.mxu0 0
        %729 = vmatprep.subr.bf16.mxu0 0
        %730 = vmatpush1.bf16.msra.mxu0 0
        %731 = vmatprep.subr.bf16.mxu0 0
        %732 = vmatpush1.bf16.msra.mxu0 0
        %733 = vmatprep.subr.bf16.mxu0 0
        %734 = vmatpush1.bf16.msra.mxu0 0
        %735 = vmatprep.subr.bf16.mxu0 0
        %736 = vmatpush1.bf16.msra.mxu0 0
        %737 = vmatprep.subr.bf16.mxu0 0
        %738 = vmatpush1.bf16.msra.mxu0 0
        %739 = vmatprep.subr.bf16.mxu0 0
        %740 = vmatpush1.bf16.msra.mxu0 0
        %741 = vmatprep.subr.bf16.mxu0 0
        %742 = vmatpush1.bf16.msra.mxu0 0
        %743 = vmatprep.subr.bf16.mxu0 0
        %744 = vmatpush1.bf16.msra.mxu0 0
        %745 = vmatprep.subr.bf16.mxu0 0
        %746 = vmatpush1.bf16.msra.mxu0 0
        %747 = vmatprep.subr.bf16.mxu0 0
        %748 = vmatpush1.bf16.msra.mxu0 0
        %749 = vmatprep.subr.bf16.mxu0 0
        %750 = vmatpush1.bf16.msra.mxu0 0
        %751 = vmatprep.subr.bf16.mxu0 0
        %752 = vmatpush1.bf16.msra.mxu0 0
        %753 = vmatprep.subr.bf16.mxu0 0
        %754 = vmatpush1.bf16.msra.mxu0 0
        %755 = vmatprep.subr.bf16.mxu0 0
        %756 = vmatpush1.bf16.msra.mxu0 0
        %757 = vmatprep.mubr.bf16.mxu0 0
        %758 = vmatmul.mubr.bf16.gmra.mrb[0].mxu0 %v639
        %v759 = vpop.f32.mrb[0].mxu0
        %v760 = vadd.f32 0.0, %v759
        %v761 = vpop.f32.mrb[0].mxu0
        %v762 = vpop.f32.mrb[0].mxu0
        %v763 = vadd.f32 0.0, %v762
        %v764 = vpop.f32.mrb[0].mxu0
        %765 = vdwg.mxu0
        %v766 = vmul.f32 %v719, 2.0
        %v767 = vmul.f32 %v722, 2.0
        %v768 = vmul.f32 %v760, 2.0
        %v769 = vmul.f32 %v763, 2.0
        %v770 = vsub.f32 %v766, %v587
        %v771 = vsub.f32 %v767, %v588
        %v772 = vsub.f32 %v768, %v589
        %v773 = vsub.f32 %v769, %v590
        %778 = vrot.lane.b32.xlu0 %v632, 36
        %v779 = vpop.permute.xlu0 %778
        %780 = vrot.lane.b32.xlu0 %v635, 36
        %v781 = vpop.permute.xlu0 %780
        %782 = vrot.lane.b32.xlu0 %v676, 36
        %v783 = vpop.permute.xlu0 %782
        %784 = vrot.lane.b32.xlu0 %v679, 36
        %v785 = vpop.permute.xlu0 %784
        %794 = vrot.lane.b32.xlu0 %v770, 72
        %v795 = vpop.permute.xlu0 %794
        %796 = vrot.lane.b32.xlu0 %v771, 72
        %v797 = vpop.permute.xlu0 %796
        %798 = vrot.lane.b32.xlu0 %v772, 72
        %v799 = vpop.permute.xlu0 %798
        %800 = vrot.lane.b32.xlu0 %v773, 72
        %v801 = vpop.permute.xlu0 %800
        %vm806 = vcmask 293888
        %v807 = vsel %vm806, %v587, %v779
        %v808 = vsel %vm806, %v588, %v781
        %v809 = vsel %vm806, %v589, %v783
        %v810 = vsel %vm806, %v590, %v785
        %vm811 = vcmask 588800
        %v812 = vsel %vm811, %v807, %v795
        %v813 = vsel %vm811, %v808, %v797
        %v814 = vsel %vm811, %v809, %v799
        %v815 = vsel %vm811, %v810, %v801
        %v816 = vpack.c.bf16 %v813, %v812
        %v817 = vpack.c.bf16 %v815, %v814
        %v819 = vlaneseq
        %v820 = vshrl.u32 %v819, 7
        %v821 = vsub.s32 0, %v820
        %v822 = vrot.slane %v565, %v821
        %v838 = vunpack.c.l.b16 %v539
        %v839 = vunpack.c.l.b16 %v540
        %v840 = vunpack.c.l.b16 %v541
        %v841 = vunpack.c.l.b16 %v542
        %v842 = vunpack.c.l.b16 %v543
        %v843 = vunpack.c.l.b16 %v544
        %v844 = vunpack.c.l.b16 %v545
        %v845 = vunpack.c.l.b16 %v546
        %v846 = vunpack.c.l.b16 %v547
        %v847 = vunpack.c.l.b16 %v548
        %v848 = vunpack.c.l.b16 %v549
        %v849 = vunpack.c.l.b16 %v550
        %v850 = vunpack.c.l.b16 %v551
        %v851 = vunpack.c.l.b16 %v552
        %v852 = vpack.c.b16 %v839, %v838
        %v853 = vpack.c.b16 %v841, %v840
        %v854 = vpack.c.b16 %v843, %v842
        %v855 = vpack.c.b16 %v845, %v844
        %v856 = vpack.c.b16 %v847, %v846
        %v857 = vpack.c.b16 %v849, %v848
        %v858 = vpack.c.b16 %v851, %v850
        %vm865 = vcmask 883712
        %v867 = vsel %vm865, %v816, 0
        %v870 = vsel %vm865, %v817, 0
        %vm872 = vcmask 1045504
        %v874 = vsel %vm872, %v858, 0
        %876 = vmatprep.subr.bf16.mxu0 0
        %877 = vmatpush1.bf16.msra.mxu0 %v852
        %878 = vmatprep.subr.bf16.mxu0 0
        %879 = vmatpush1.bf16.msra.mxu0 %v853
        %880 = vmatprep.subr.bf16.mxu0 0
        %881 = vmatpush1.bf16.msra.mxu0 %v854
        %882 = vmatprep.subr.bf16.mxu0 0
        %883 = vmatpush1.bf16.msra.mxu0 %v855
        %884 = vmatprep.subr.bf16.mxu0 0
        %885 = vmatpush1.bf16.msra.mxu0 %v856
        %886 = vmatprep.subr.bf16.mxu0 0
        %887 = vmatpush1.bf16.msra.mxu0 %v857
        %888 = vmatprep.subr.bf16.mxu0 0
        %889 = vmatpush1.bf16.msra.mxu0 %v874
        %890 = vmatprep.subr.bf16.mxu0 0
        %891 = vmatpush1.bf16.msra.mxu0 0
        %892 = vmatprep.subr.bf16.mxu0 0
        %893 = vmatpush1.bf16.msra.mxu0 0
        %894 = vmatprep.subr.bf16.mxu0 0
        %895 = vmatpush1.bf16.msra.mxu0 0
        %896 = vmatprep.subr.bf16.mxu0 0
        %897 = vmatpush1.bf16.msra.mxu0 0
        %898 = vmatprep.subr.bf16.mxu0 0
        %899 = vmatpush1.bf16.msra.mxu0 0
        %900 = vmatprep.subr.bf16.mxu0 0
        %901 = vmatpush1.bf16.msra.mxu0 0
        %902 = vmatprep.subr.bf16.mxu0 0
        %903 = vmatpush1.bf16.msra.mxu0 0
        %904 = vmatprep.subr.bf16.mxu0 0
        %905 = vmatpush1.bf16.msra.mxu0 0
        %906 = vmatprep.subr.bf16.mxu0 0
        %907 = vmatpush1.bf16.msra.mxu0 0
        %908 = vmatprep.mubr.bf16.mxu0 0
        %909 = vmatmul.mubr.bf16.gmra.mrb[0].mxu0 %v867
        %v910 = vpop.f32.mrb[0].mxu0
        %v911 = vadd.f32 %v822, %v910
        %v912 = vpop.f32.mrb[0].mxu0
        %v913 = vpop.f32.mrb[0].mxu0
        %v914 = vadd.f32 %v822, %v913
        %v915 = vpop.f32.mrb[0].mxu0
        %916 = vmatprep.mubr.bf16.mxu0 0
        %917 = vmatmul.mubr.bf16.gmra.mrb[0].mxu0 %v870
        %v918 = vpop.f32.mrb[0].mxu0
        %v919 = vadd.f32 %v822, %v918
        %v920 = vpop.f32.mrb[0].mxu0
        %v921 = vpop.f32.mrb[0].mxu0
        %v922 = vadd.f32 %v822, %v921
        %v923 = vpop.f32.mrb[0].mxu0
        %924 = vdwg.mxu0
        %v925 = vxor.u32 %v911, 2147483648
        %v926 = vxor.u32 %v914, 2147483648
        %v927 = vxor.u32 %v919, 2147483648
        %v928 = vxor.u32 %v922, 2147483648
        %v929 = vmul.f32 %v925, 1.442695
        %v930 = vpow.pop %v929
        %v931 = vmul.f32 %v926, 1.442695
        %v932 = vpow.pop %v931
        %v933 = vmul.f32 %v927, 1.442695
        %v934 = vpow.pop %v933
        %v935 = vmul.f32 %v928, 1.442695
        %v936 = vpow.pop %v935
        %v937 = vadd.f32 %v930, 1.0
        %v938 = vadd.f32 %v932, 1.0
        %v939 = vadd.f32 %v934, 1.0
        %v940 = vadd.f32 %v936, 1.0
        %v941 = vrcp.pop %v937
        %v942 = vmul.f32 1.0, %v941
        %v943 = vrcp.pop %v938
        %v944 = vmul.f32 1.0, %v943
        %v945 = vrcp.pop %v939
        %v946 = vmul.f32 1.0, %v945
        %v947 = vrcp.pop %v940
        %v948 = vmul.f32 1.0, %v947
        %v949 = vmul.f32 %v942, %v566
        %v950 = vmul.f32 %v944, %v567
        %v951 = vmul.f32 %v946, %v568
        %v952 = vmul.f32 %v948, %v569
        %v953 = vpack.c.bf16 %v950, %v949
        %v954 = vpack.c.bf16 %v952, %v951
        %955 = vmatprep.subr.bf16.mxu0 0
        %956 = vmatpush1.bf16.msra.mxu0 %v953
        %957 = vmatprep.subr.bf16.mxu0 0
        %958 = vmatpush1.bf16.msra.mxu0 0
        %959 = vmatprep.subr.bf16.mxu0 0
        %960 = vmatpush1.bf16.msra.mxu0 0
        %961 = vmatprep.subr.bf16.mxu0 0
        %962 = vmatpush1.bf16.msra.mxu0 0
        %963 = vmatprep.subr.bf16.mxu0 0
        %964 = vmatpush1.bf16.msra.mxu0 0
        %965 = vmatprep.subr.bf16.mxu0 0
        %966 = vmatpush1.bf16.msra.mxu0 0
        %967 = vmatprep.subr.bf16.mxu0 0
        %968 = vmatpush1.bf16.msra.mxu0 0
        %969 = vmatprep.subr.bf16.mxu0 0
        %970 = vmatpush1.bf16.msra.mxu0 0
        %971 = vmatprep.subr.bf16.mxu0 0
        %972 = vmatpush1.bf16.msra.mxu0 0
        %973 = vmatprep.subr.bf16.mxu0 0
        %974 = vmatpush1.bf16.msra.mxu0 0
        %975 = vmatprep.subr.bf16.mxu0 0
        %976 = vmatpush1.bf16.msra.mxu0 0
        %977 = vmatprep.subr.bf16.mxu0 0
        %978 = vmatpush1.bf16.msra.mxu0 0
        %979 = vmatprep.subr.bf16.mxu0 0
        %980 = vmatpush1.bf16.msra.mxu0 0
        %981 = vmatprep.subr.bf16.mxu0 0
        %982 = vmatpush1.bf16.msra.mxu0 0
        %983 = vmatprep.subr.bf16.mxu0 0
        %984 = vmatpush1.bf16.msra.mxu0 0
        %985 = vmatprep.subr.bf16.mxu0 0
        %986 = vmatpush1.bf16.msra.mxu0 0
        %987 = vmatprep.mubr.bf16.mxu0 0
        %988 = vmatmul.mubr.bf16.gmra.mrb[0].mxu0 %v595
        %v989 = vpop.f32.mrb[0].mxu0
        %v990 = vadd.f32 0.0, %v989
        %v991 = vpop.f32.mrb[0].mxu0
        %v992 = vpop.f32.mrb[0].mxu0
        %v993 = vadd.f32 0.0, %v992
        %v994 = vpop.f32.mrb[0].mxu0
        %995 = vdwg.mxu0
        %996 = vmatprep.subr.bf16.mxu0 0
        %997 = vmatpush1.bf16.msra.mxu0 %v954
        %998 = vmatprep.subr.bf16.mxu0 0
        %999 = vmatpush1.bf16.msra.mxu0 0
        %1000 = vmatprep.subr.bf16.mxu0 0
        %1001 = vmatpush1.bf16.msra.mxu0 0
        %1002 = vmatprep.subr.bf16.mxu0 0
        %1003 = vmatpush1.bf16.msra.mxu0 0
        %1004 = vmatprep.subr.bf16.mxu0 0
        %1005 = vmatpush1.bf16.msra.mxu0 0
        %1006 = vmatprep.subr.bf16.mxu0 0
        %1007 = vmatpush1.bf16.msra.mxu0 0
        %1008 = vmatprep.subr.bf16.mxu0 0
        %1009 = vmatpush1.bf16.msra.mxu0 0
        %1010 = vmatprep.subr.bf16.mxu0 0
        %1011 = vmatpush1.bf16.msra.mxu0 0
        %1012 = vmatprep.subr.bf16.mxu0 0
        %1013 = vmatpush1.bf16.msra.mxu0 0
        %1014 = vmatprep.subr.bf16.mxu0 0
        %1015 = vmatpush1.bf16.msra.mxu0 0
        %1016 = vmatprep.subr.bf16.mxu0 0
        %1017 = vmatpush1.bf16.msra.mxu0 0
        %1018 = vmatprep.subr.bf16.mxu0 0
        %1019 = vmatpush1.bf16.msra.mxu0 0
        %1020 = vmatprep.subr.bf16.mxu0 0
        %1021 = vmatpush1.bf16.msra.mxu0 0
        %1022 = vmatprep.subr.bf16.mxu0 0
        %1023 = vmatpush1.bf16.msra.mxu0 0
        %1024 = vmatprep.subr.bf16.mxu0 0
        %1025 = vmatpush1.bf16.msra.mxu0 0
        %1026 = vmatprep.subr.bf16.mxu0 0
        %1027 = vmatpush1.bf16.msra.mxu0 0
        %1028 = vmatprep.mubr.bf16.mxu0 0
        %1029 = vmatmul.mubr.bf16.gmra.mrb[0].mxu0 %v639
        %v1030 = vpop.f32.mrb[0].mxu0
        %v1031 = vadd.f32 0.0, %v1030
        %v1032 = vpop.f32.mrb[0].mxu0
        %v1033 = vpop.f32.mrb[0].mxu0
        %v1034 = vadd.f32 0.0, %v1033
        %v1035 = vpop.f32.mrb[0].mxu0
        %1036 = vdwg.mxu0
        %v1037 = vpack.c.bf16 %v993, %v990
        %v1038 = vpack.c.bf16 %v1034, %v1031
        %1039 = vmatprep.subr.bf16.mxu0 0
        %1040 = vmatpush1.bf16.msra.mxu0 %v1037
        %1041 = vmatprep.subr.bf16.mxu0 0
        %1042 = vmatpush1.bf16.msra.mxu0 0
        %1043 = vmatprep.subr.bf16.mxu0 0
        %1044 = vmatpush1.bf16.msra.mxu0 0
        %1045 = vmatprep.subr.bf16.mxu0 0
        %1046 = vmatpush1.bf16.msra.mxu0 0
        %1047 = vmatprep.subr.bf16.mxu0 0
        %1048 = vmatpush1.bf16.msra.mxu0 0
        %1049 = vmatprep.subr.bf16.mxu0 0
        %1050 = vmatpush1.bf16.msra.mxu0 0
        %1051 = vmatprep.subr.bf16.mxu0 0
        %1052 = vmatpush1.bf16.msra.mxu0 0
        %1053 = vmatprep.subr.bf16.mxu0 0
        %1054 = vmatpush1.bf16.msra.mxu0 0
        %1055 = vmatprep.subr.bf16.mxu0 0
        %1056 = vmatpush1.bf16.msra.mxu0 0
        %1057 = vmatprep.subr.bf16.mxu0 0
        %1058 = vmatpush1.bf16.msra.mxu0 0
        %1059 = vmatprep.subr.bf16.mxu0 0
        %1060 = vmatpush1.bf16.msra.mxu0 0
        %1061 = vmatprep.subr.bf16.mxu0 0
        %1062 = vmatpush1.bf16.msra.mxu0 0
        %1063 = vmatprep.subr.bf16.mxu0 0
        %1064 = vmatpush1.bf16.msra.mxu0 0
        %1065 = vmatprep.subr.bf16.mxu0 0
        %1066 = vmatpush1.bf16.msra.mxu0 0
        %1067 = vmatprep.subr.bf16.mxu0 0
        %1068 = vmatpush1.bf16.msra.mxu0 0
        %1069 = vmatprep.subr.bf16.mxu0 0
        %1070 = vmatpush1.bf16.msra.mxu0 0
        %1071 = vmatprep.mubr.bf16.mxu0 0
        %1072 = vmatmul.mubr.bf16.gmra.mrb[0].mxu0 %v595
        %v1073 = vpop.f32.mrb[0].mxu0
        %v1074 = vadd.f32 0.0, %v1073
        %v1075 = vpop.f32.mrb[0].mxu0
        %v1076 = vpop.f32.mrb[0].mxu0
        %v1077 = vadd.f32 0.0, %v1076
        %v1078 = vpop.f32.mrb[0].mxu0
        %1079 = vdwg.mxu0
        %1080 = vmatprep.subr.bf16.mxu0 0
        %1081 = vmatpush1.bf16.msra.mxu0 %v1038
        %1082 = vmatprep.subr.bf16.mxu0 0
        %1083 = vmatpush1.bf16.msra.mxu0 0
        %1084 = vmatprep.subr.bf16.mxu0 0
        %1085 = vmatpush1.bf16.msra.mxu0 0
        %1086 = vmatprep.subr.bf16.mxu0 0
        %1087 = vmatpush1.bf16.msra.mxu0 0
        %1088 = vmatprep.subr.bf16.mxu0 0
        %1089 = vmatpush1.bf16.msra.mxu0 0
        %1090 = vmatprep.subr.bf16.mxu0 0
        %1091 = vmatpush1.bf16.msra.mxu0 0
        %1092 = vmatprep.subr.bf16.mxu0 0
        %1093 = vmatpush1.bf16.msra.mxu0 0
        %1094 = vmatprep.subr.bf16.mxu0 0
        %1095 = vmatpush1.bf16.msra.mxu0 0
        %1096 = vmatprep.subr.bf16.mxu0 0
        %1097 = vmatpush1.bf16.msra.mxu0 0
        %1098 = vmatprep.subr.bf16.mxu0 0
        %1099 = vmatpush1.bf16.msra.mxu0 0
        %1100 = vmatprep.subr.bf16.mxu0 0
        %1101 = vmatpush1.bf16.msra.mxu0 0
        %1102 = vmatprep.subr.bf16.mxu0 0
        %1103 = vmatpush1.bf16.msra.mxu0 0
        %1104 = vmatprep.subr.bf16.mxu0 0
        %1105 = vmatpush1.bf16.msra.mxu0 0
        %1106 = vmatprep.subr.bf16.mxu0 0
        %1107 = vmatpush1.bf16.msra.mxu0 0
        %1108 = vmatprep.subr.bf16.mxu0 0
        %1109 = vmatpush1.bf16.msra.mxu0 0
        %1110 = vmatprep.subr.bf16.mxu0 0
        %1111 = vmatpush1.bf16.msra.mxu0 0
        %1112 = vmatprep.mubr.bf16.mxu0 0
        %1113 = vmatmul.mubr.bf16.gmra.mrb[0].mxu0 %v639
        %v1114 = vpop.f32.mrb[0].mxu0
        %v1115 = vadd.f32 0.0, %v1114
        %v1116 = vpop.f32.mrb[0].mxu0
        %v1117 = vpop.f32.mrb[0].mxu0
        %v1118 = vadd.f32 0.0, %v1117
        %v1119 = vpop.f32.mrb[0].mxu0
        %1120 = vdwg.mxu0
        %v1121 = vmul.f32 %v1074, 2.0
        %v1122 = vmul.f32 %v1077, 2.0
        %v1123 = vmul.f32 %v1115, 2.0
        %v1124 = vmul.f32 %v1118, 2.0
        %v1125 = vsub.f32 %v1121, %v949
        %v1126 = vsub.f32 %v1122, %v950
        %v1127 = vsub.f32 %v1123, %v951
        %v1128 = vsub.f32 %v1124, %v952
        %1133 = vrot.lane.b32.xlu0 %v990, 32
        %v1134 = vpop.permute.xlu0 %1133
        %1135 = vrot.lane.b32.xlu0 %v993, 32
        %v1136 = vpop.permute.xlu0 %1135
        %1137 = vrot.lane.b32.xlu0 %v1031, 32
        %v1138 = vpop.permute.xlu0 %1137
        %1139 = vrot.lane.b32.xlu0 %v1034, 32
        %v1140 = vpop.permute.xlu0 %1139
        %1149 = vrot.lane.b32.xlu0 %v1125, 64
        %v1150 = vpop.permute.xlu0 %1149
        %1151 = vrot.lane.b32.xlu0 %v1126, 64
        %v1152 = vpop.permute.xlu0 %1151
        %1153 = vrot.lane.b32.xlu0 %v1127, 64
        %v1154 = vpop.permute.xlu0 %1153
        %1155 = vrot.lane.b32.xlu0 %v1128, 64
        %v1156 = vpop.permute.xlu0 %1155
        %vm1161 = vcmask 261120
        %v1162 = vsel %vm1161, %v949, %v1134
        %v1163 = vsel %vm1161, %v950, %v1136
        %v1164 = vsel %vm1161, %v951, %v1138
        %v1165 = vsel %vm1161, %v952, %v1140
        %vm1166 = vcmask 523264
        %v1167 = vsel %vm1166, %v1162, %v1150
        %v1168 = vsel %vm1166, %v1163, %v1152
        %v1169 = vsel %vm1166, %v1164, %v1154
        %v1170 = vsel %vm1166, %v1165, %v1156
        %v1171 = vpack.c.bf16 %v1168, %v1167
        %v1172 = vpack.c.bf16 %v1170, %v1169
        %v1185 = vunpack.c.l.b16 %v553
        %v1186 = vunpack.c.l.b16 %v554
        %v1187 = vunpack.c.l.b16 %v555
        %v1188 = vunpack.c.l.b16 %v556
        %v1189 = vunpack.c.l.b16 %v557
        %v1190 = vunpack.c.l.b16 %v558
        %v1191 = vunpack.c.l.b16 %v559
        %v1192 = vunpack.c.l.b16 %v560
        %v1193 = vunpack.c.l.b16 %v561
        %v1194 = vunpack.c.l.b16 %v562
        %v1195 = vunpack.c.l.b16 %v563
        %v1196 = vunpack.c.l.b16 %v564
        %v1197 = vpack.c.b16 %v1186, %v1185
        %v1198 = vpack.c.b16 %v1188, %v1187
        %v1199 = vpack.c.b16 %v1190, %v1189
        %v1200 = vpack.c.b16 %v1192, %v1191
        %v1201 = vpack.c.b16 %v1194, %v1193
        %v1202 = vpack.c.b16 %v1196, %v1195
        %vm1209 = vcmask 785408
        %v1211 = vsel %vm1209, %v1171, 0
        %v1214 = vsel %vm1209, %v1172, 0
        %1216 = vmatprep.subr.bf16.mxu0 0
        %1217 = vmatpush1.bf16.msra.mxu0 %v1197
        %1218 = vmatprep.subr.bf16.mxu0 0
        %1219 = vmatpush1.bf16.msra.mxu0 %v1198
        %1220 = vmatprep.subr.bf16.mxu0 0
        %1221 = vmatpush1.bf16.msra.mxu0 %v1199
        %1222 = vmatprep.subr.bf16.mxu0 0
        %1223 = vmatpush1.bf16.msra.mxu0 %v1200
        %1224 = vmatprep.subr.bf16.mxu0 0
        %1225 = vmatpush1.bf16.msra.mxu0 %v1201
        %1226 = vmatprep.subr.bf16.mxu0 0
        %1227 = vmatpush1.bf16.msra.mxu0 %v1202
        %1228 = vmatprep.subr.bf16.mxu0 0
        %1229 = vmatpush1.bf16.msra.mxu0 0
        %1230 = vmatprep.subr.bf16.mxu0 0
        %1231 = vmatpush1.bf16.msra.mxu0 0
        %1232 = vmatprep.subr.bf16.mxu0 0
        %1233 = vmatpush1.bf16.msra.mxu0 0
        %1234 = vmatprep.subr.bf16.mxu0 0
        %1235 = vmatpush1.bf16.msra.mxu0 0
        %1236 = vmatprep.subr.bf16.mxu0 0
        %1237 = vmatpush1.bf16.msra.mxu0 0
        %1238 = vmatprep.subr.bf16.mxu0 0
        %1239 = vmatpush1.bf16.msra.mxu0 0
        %1240 = vmatprep.subr.bf16.mxu0 0
        %1241 = vmatpush1.bf16.msra.mxu0 0
        %1242 = vmatprep.subr.bf16.mxu0 0
        %1243 = vmatpush1.bf16.msra.mxu0 0
        %1244 = vmatprep.subr.bf16.mxu0 0
        %1245 = vmatpush1.bf16.msra.mxu0 0
        %1246 = vmatprep.subr.bf16.mxu0 0
        %1247 = vmatpush1.bf16.msra.mxu0 0
        %1248 = vmatprep.mubr.bf16.mxu0 0
        %1249 = vmatmul.mubr.bf16.gmra.mrb[0].mxu0 %v1211
        %v1250 = vpop.f32.mrb[0].mxu0
        %v1251 = vadd.f32 0.0, %v1250
        %v1252 = vpop.f32.mrb[0].mxu0
        %v1253 = vpop.f32.mrb[0].mxu0
        %v1254 = vadd.f32 0.0, %v1253
        %v1255 = vpop.f32.mrb[0].mxu0
        %1256 = vmatprep.mubr.bf16.mxu0 0
        %1257 = vmatmul.mubr.bf16.gmra.mrb[0].mxu0 %v1214
        %v1258 = vpop.f32.mrb[0].mxu0
        %v1259 = vadd.f32 0.0, %v1258
        %v1260 = vpop.f32.mrb[0].mxu0
        %v1261 = vpop.f32.mrb[0].mxu0
        %v1262 = vadd.f32 0.0, %v1261
        %v1263 = vpop.f32.mrb[0].mxu0
        %1264 = vdwg.mxu0
        %1269 = vrot.lane.b32.xlu0 %v1251, 64
        %v1270 = vpop.permute.xlu0 %1269
        %1271 = vrot.lane.b32.xlu0 %v1254, 64
        %v1272 = vpop.permute.xlu0 %1271
        %1273 = vrot.lane.b32.xlu0 %v1259, 64
        %v1274 = vpop.permute.xlu0 %1273
        %1275 = vrot.lane.b32.xlu0 %v1262, 64
        %v1276 = vpop.permute.xlu0 %1275
        %v1281 = vadd.f32 %v911, %v1270
        %v1282 = vadd.f32 %v914, %v1272
        %v1283 = vadd.f32 %v919, %v1274
        %v1284 = vadd.f32 %v922, %v1276
        %v1285 = vtanh.pop %v1281
        %v1286 = vtanh.pop %v1282
        %v1287 = vtanh.pop %v1283
        %v1288 = vtanh.pop %v1284
        %1289 = vrot.lane.b32.xlu0 %v566, 32
        %v1290 = vpop.permute.xlu0 %1289
        %1291 = vrot.lane.b32.xlu0 %v567, 32
        %v1292 = vpop.permute.xlu0 %1291
        %1293 = vrot.lane.b32.xlu0 %v568, 32
        %v1294 = vpop.permute.xlu0 %1293
        %1295 = vrot.lane.b32.xlu0 %v569, 32
        %v1296 = vpop.permute.xlu0 %1295
        %v1301 = vmul.f32 %v942, %v1290
        %v1302 = vmul.f32 %v944, %v1292
        %v1303 = vmul.f32 %v946, %v1294
        %v1304 = vmul.f32 %v948, %v1296
        %v1305 = vsub.f32 1.0, %v942
        %v1306 = vsub.f32 1.0, %v944
        %v1307 = vsub.f32 1.0, %v946
        %v1308 = vsub.f32 1.0, %v948
        %1313 = vrot.lane.b32.xlu0 %v1285, 96
        %v1314 = vpop.permute.xlu0 %1313
        %1315 = vrot.lane.b32.xlu0 %v1286, 96
        %v1316 = vpop.permute.xlu0 %1315
        %1317 = vrot.lane.b32.xlu0 %v1287, 96
        %v1318 = vpop.permute.xlu0 %1317
        %1319 = vrot.lane.b32.xlu0 %v1288, 96
        %v1320 = vpop.permute.xlu0 %1319
        %v1325 = vmul.f32 %v1305, %v1314
        %v1326 = vmul.f32 %v1306, %v1316
        %v1327 = vmul.f32 %v1307, %v1318
        %v1328 = vmul.f32 %v1308, %v1320
        %v1329 = vadd.f32 %v1301, %v1325
        %v1330 = vadd.f32 %v1302, %v1326
        %v1331 = vadd.f32 %v1303, %v1327
        %v1332 = vadd.f32 %v1304, %v1328
        %1337 = vrot.lane.b32.xlu0 %v1329, 96
        %v1338 = vpop.permute.xlu0 %1337
        %1339 = vrot.lane.b32.xlu0 %v1330, 96
        %v1340 = vpop.permute.xlu0 %1339
        %1341 = vrot.lane.b32.xlu0 %v1331, 96
        %v1342 = vpop.permute.xlu0 %1341
        %1343 = vrot.lane.b32.xlu0 %v1332, 96
        %v1344 = vpop.permute.xlu0 %1343
        %1349 = vst.msk [vmem:[#allocation16] sm:$0xff] %vm1161, %v1338
        %1350 = vst.msk [vmem:[#allocation16 + $0x8] sm:$0xff] %vm1161, %v1340
        %1351 = vst.msk [vmem:[#allocation16 + $0x10] sm:$0xff] %vm1161, %v1342
        %1352 = vst.msk [vmem:[#allocation16 + $0x18] sm:$0xff] %vm1161, %v1344
        %v1353 = vld [vmem:[#allocation11] sm:$0xf]
        %v1354 = vld [vmem:[#allocation11 + $0x4] sm:$0xf]
        %v1355 = vld [vmem:[#allocation11 + $0x8] sm:$0xf]
        %v1356 = vld [vmem:[#allocation11 + $0xc] sm:$0xf]
        %v1357 = vld [vmem:[#allocation11 + $0x10] sm:$0xf]
        %v1358 = vld [vmem:[#allocation11 + $0x14] sm:$0xf]
        %v1359 = vld [vmem:[#allocation11 + $0x18] sm:$0xf]
        %v1360 = vld [vmem:[#allocation11 + $0x1c] sm:$0xf]
        %v1361 = vld [vmem:[#allocation11 + $0x20] sm:$0xf]
        %v1362 = vld [vmem:[#allocation11 + $0x24] sm:$0xf]
        %v1363 = vld [vmem:[#allocation11 + $0x28] sm:$0xf]
        %v1364 = vld [vmem:[#allocation11 + $0x2c] sm:$0xf]
        %v1365 = vld [vmem:[#allocation11 + $0x30] sm:$0xf]
        %v1366 = vld [vmem:[#allocation11 + $0x34] sm:$0xf]
        %v1367 = vld [vmem:[#allocation11 + $0x38] sm:$0xf]
        %v1368 = vld [vmem:[#allocation11 + $0x3c] sm:$0xf]
        %v1369 = vld [vmem:[#allocation11 + $0x40] sm:$0xf]
        %v1370 = vld [vmem:[#allocation11 + $0x44] sm:$0xf]
        %v1371 = vld [vmem:[#allocation11 + $0x48] sm:$0xf]
        %v1372 = vld [vmem:[#allocation11 + $0x4c] sm:$0xf]
        %v1373 = vld [vmem:[#allocation11 + $0x50] sm:$0xf]
        %v1374 = vld [vmem:[#allocation11 + $0x54] sm:$0xf]
        %v1375 = vld [vmem:[#allocation11 + $0x58] sm:$0xf]
        %v1376 = vld [vmem:[#allocation11 + $0x5c] sm:$0xf]
        %v1377 = vld [vmem:[#allocation13] sm:$0xf]
        %v1378 = vld [vmem:[#allocation13 + $0x4] sm:$0xf]
        %v1379 = vld [vmem:[#allocation13 + $0x8] sm:$0xf]
        %v1380 = vld [vmem:[#allocation13 + $0xc] sm:$0xf]
        %v1381 = vld [vmem:[#allocation13 + $0x10] sm:$0xf]
        %v1382 = vld [vmem:[#allocation13 + $0x14] sm:$0xf]
        %v1383 = vld [vmem:[#allocation13 + $0x18] sm:$0xf]
        %v1384 = vld [vmem:[#allocation13 + $0x1c] sm:$0xf]
        %v1385 = vld [vmem:[#allocation13 + $0x20] sm:$0xf]
        %v1386 = vld [vmem:[#allocation13 + $0x24] sm:$0xf]
        %v1387 = vld [vmem:[#allocation13 + $0x28] sm:$0xf]
        %v1388 = vld [vmem:[#allocation13 + $0x2c] sm:$0xf]
        %v1389 = vld [vmem:[#allocation14] sm:$0x1]
        %s1390 = scalar_lea.vmem [#allocation16], 32
        %v1391 = vld [vmem:[%s1390] sm:$0xff]
        %v1392 = vld [vmem:[%s1390 + $0x8] sm:$0xff]
        %v1393 = vld [vmem:[%s1390 + $0x10] sm:$0xff]
        %v1394 = vld [vmem:[%s1390 + $0x18] sm:$0xff]
        %1399 = vrot.lane.b32.xlu0 %v1391, 32
        %v1400 = vpop.permute.xlu0 %1399
        %1401 = vrot.lane.b32.xlu0 %v1392, 32
        %v1402 = vpop.permute.xlu0 %1401
        %1403 = vrot.lane.b32.xlu0 %v1393, 32
        %v1404 = vpop.permute.xlu0 %1403
        %1405 = vrot.lane.b32.xlu0 %v1394, 32
        %v1406 = vpop.permute.xlu0 %1405
        %v1411 = vsel %vm1161, %v1338, %v1400
        %v1412 = vsel %vm1161, %v1340, %v1402
        %v1413 = vsel %vm1161, %v1342, %v1404
        %v1414 = vsel %vm1161, %v1344, %v1406
        %v1415 = vpack.c.bf16 %v1412, %v1411
        %v1416 = vpack.c.bf16 %v1414, %v1413
        %1417 = vmatprep.subr.bf16.mxu0 0
        %1418 = vmatpush1.bf16.msra.mxu0 %v1415
        %1419 = vmatprep.subr.bf16.mxu0 0
        %1420 = vmatpush1.bf16.msra.mxu0 0
        %1421 = vmatprep.subr.bf16.mxu0 0
        %1422 = vmatpush1.bf16.msra.mxu0 0
        %1423 = vmatprep.subr.bf16.mxu0 0
        %1424 = vmatpush1.bf16.msra.mxu0 0
        %1425 = vmatprep.subr.bf16.mxu0 0
        %1426 = vmatpush1.bf16.msra.mxu0 0
        %1427 = vmatprep.subr.bf16.mxu0 0
        %1428 = vmatpush1.bf16.msra.mxu0 0
        %1429 = vmatprep.subr.bf16.mxu0 0
        %1430 = vmatpush1.bf16.msra.mxu0 0
        %1431 = vmatprep.subr.bf16.mxu0 0
        %1432 = vmatpush1.bf16.msra.mxu0 0
        %1433 = vmatprep.subr.bf16.mxu0 0
        %1434 = vmatpush1.bf16.msra.mxu0 0
        %1435 = vmatprep.subr.bf16.mxu0 0
        %1436 = vmatpush1.bf16.msra.mxu0 0
        %1437 = vmatprep.subr.bf16.mxu0 0
        %1438 = vmatpush1.bf16.msra.mxu0 0
        %1439 = vmatprep.subr.bf16.mxu0 0
        %1440 = vmatpush1.bf16.msra.mxu0 0
        %1441 = vmatprep.subr.bf16.mxu0 0
        %1442 = vmatpush1.bf16.msra.mxu0 0
        %1443 = vmatprep.subr.bf16.mxu0 0
        %1444 = vmatpush1.bf16.msra.mxu0 0
        %1445 = vmatprep.subr.bf16.mxu0 0
        %1446 = vmatpush1.bf16.msra.mxu0 0
        %1447 = vmatprep.subr.bf16.mxu0 0
        %1448 = vmatpush1.bf16.msra.mxu0 0
        %1449 = vmatprep.mubr.bf16.mxu0 0
        %1450 = vmatmul.mubr.bf16.gmra.mrb[0].mxu0 %v595
        %v1451 = vpop.f32.mrb[0].mxu0
        %v1452 = vadd.f32 0.0, %v1451
        %v1453 = vpop.f32.mrb[0].mxu0
        %v1454 = vpop.f32.mrb[0].mxu0
        %v1455 = vadd.f32 0.0, %v1454
        %v1456 = vpop.f32.mrb[0].mxu0
        %1457 = vdwg.mxu0
        %1458 = vmatprep.subr.bf16.mxu0 0
        %1459 = vmatpush1.bf16.msra.mxu0 %v1416
        %1460 = vmatprep.subr.bf16.mxu0 0
        %1461 = vmatpush1.bf16.msra.mxu0 0
        %1462 = vmatprep.subr.bf16.mxu0 0
        %1463 = vmatpush1.bf16.msra.mxu0 0
        %1464 = vmatprep.subr.bf16.mxu0 0
        %1465 = vmatpush1.bf16.msra.mxu0 0
        %1466 = vmatprep.subr.bf16.mxu0 0
        %1467 = vmatpush1.bf16.msra.mxu0 0
        %1468 = vmatprep.subr.bf16.mxu0 0
        %1469 = vmatpush1.bf16.msra.mxu0 0
        %1470 = vmatprep.subr.bf16.mxu0 0
        %1471 = vmatpush1.bf16.msra.mxu0 0
        %1472 = vmatprep.subr.bf16.mxu0 0
        %1473 = vmatpush1.bf16.msra.mxu0 0
        %1474 = vmatprep.subr.bf16.mxu0 0
        %1475 = vmatpush1.bf16.msra.mxu0 0
        %1476 = vmatprep.subr.bf16.mxu0 0
        %1477 = vmatpush1.bf16.msra.mxu0 0
        %1478 = vmatprep.subr.bf16.mxu0 0
        %1479 = vmatpush1.bf16.msra.mxu0 0
        %1480 = vmatprep.subr.bf16.mxu0 0
        %1481 = vmatpush1.bf16.msra.mxu0 0
        %1482 = vmatprep.subr.bf16.mxu0 0
        %1483 = vmatpush1.bf16.msra.mxu0 0
        %1484 = vmatprep.subr.bf16.mxu0 0
        %1485 = vmatpush1.bf16.msra.mxu0 0
        %1486 = vmatprep.subr.bf16.mxu0 0
        %1487 = vmatpush1.bf16.msra.mxu0 0
        %1488 = vmatprep.subr.bf16.mxu0 0
        %1489 = vmatpush1.bf16.msra.mxu0 0
        %1490 = vmatprep.mubr.bf16.mxu0 0
        %1491 = vmatmul.mubr.bf16.gmra.mrb[0].mxu0 %v639
        %v1492 = vpop.f32.mrb[0].mxu0
        %v1493 = vadd.f32 0.0, %v1492
        %v1494 = vpop.f32.mrb[0].mxu0
        %v1495 = vpop.f32.mrb[0].mxu0
        %v1496 = vadd.f32 0.0, %v1495
        %v1497 = vpop.f32.mrb[0].mxu0
        %1498 = vdwg.mxu0
        %v1499 = vpack.c.bf16 %v1455, %v1452
        %v1500 = vpack.c.bf16 %v1496, %v1493
        %1501 = vmatprep.subr.bf16.mxu0 0
        %1502 = vmatpush1.bf16.msra.mxu0 %v1499
        %1503 = vmatprep.subr.bf16.mxu0 0
        %1504 = vmatpush1.bf16.msra.mxu0 0
        %1505 = vmatprep.subr.bf16.mxu0 0
        %1506 = vmatpush1.bf16.msra.mxu0 0
        %1507 = vmatprep.subr.bf16.mxu0 0
        %1508 = vmatpush1.bf16.msra.mxu0 0
        %1509 = vmatprep.subr.bf16.mxu0 0
        %1510 = vmatpush1.bf16.msra.mxu0 0
        %1511 = vmatprep.subr.bf16.mxu0 0
        %1512 = vmatpush1.bf16.msra.mxu0 0
        %1513 = vmatprep.subr.bf16.mxu0 0
        %1514 = vmatpush1.bf16.msra.mxu0 0
        %1515 = vmatprep.subr.bf16.mxu0 0
        %1516 = vmatpush1.bf16.msra.mxu0 0
        %1517 = vmatprep.subr.bf16.mxu0 0
        %1518 = vmatpush1.bf16.msra.mxu0 0
        %1519 = vmatprep.subr.bf16.mxu0 0
        %1520 = vmatpush1.bf16.msra.mxu0 0
        %1521 = vmatprep.subr.bf16.mxu0 0
        %1522 = vmatpush1.bf16.msra.mxu0 0
        %1523 = vmatprep.subr.bf16.mxu0 0
        %1524 = vmatpush1.bf16.msra.mxu0 0
        %1525 = vmatprep.subr.bf16.mxu0 0
        %1526 = vmatpush1.bf16.msra.mxu0 0
        %1527 = vmatprep.subr.bf16.mxu0 0
        %1528 = vmatpush1.bf16.msra.mxu0 0
        %1529 = vmatprep.subr.bf16.mxu0 0
        %1530 = vmatpush1.bf16.msra.mxu0 0
        %1531 = vmatprep.subr.bf16.mxu0 0
        %1532 = vmatpush1.bf16.msra.mxu0 0
        %1533 = vmatprep.mubr.bf16.mxu0 0
        %1534 = vmatmul.mubr.bf16.gmra.mrb[0].mxu0 %v595
        %v1535 = vpop.f32.mrb[0].mxu0
        %v1536 = vadd.f32 0.0, %v1535
        %v1537 = vpop.f32.mrb[0].mxu0
        %v1538 = vpop.f32.mrb[0].mxu0
        %v1539 = vadd.f32 0.0, %v1538
        %v1540 = vpop.f32.mrb[0].mxu0
        %1541 = vdwg.mxu0
        %1542 = vmatprep.subr.bf16.mxu0 0
        %1543 = vmatpush1.bf16.msra.mxu0 %v1500
        %1544 = vmatprep.subr.bf16.mxu0 0
        %1545 = vmatpush1.bf16.msra.mxu0 0
        %1546 = vmatprep.subr.bf16.mxu0 0
        %1547 = vmatpush1.bf16.msra.mxu0 0
        %1548 = vmatprep.subr.bf16.mxu0 0
        %1549 = vmatpush1.bf16.msra.mxu0 0
        %1550 = vmatprep.subr.bf16.mxu0 0
        %1551 = vmatpush1.bf16.msra.mxu0 0
        %1552 = vmatprep.subr.bf16.mxu0 0
        %1553 = vmatpush1.bf16.msra.mxu0 0
        %1554 = vmatprep.subr.bf16.mxu0 0
        %1555 = vmatpush1.bf16.msra.mxu0 0
        %1556 = vmatprep.subr.bf16.mxu0 0
        %1557 = vmatpush1.bf16.msra.mxu0 0
        %1558 = vmatprep.subr.bf16.mxu0 0
        %1559 = vmatpush1.bf16.msra.mxu0 0
        %1560 = vmatprep.subr.bf16.mxu0 0
        %1561 = vmatpush1.bf16.msra.mxu0 0
        %1562 = vmatprep.subr.bf16.mxu0 0
        %1563 = vmatpush1.bf16.msra.mxu0 0
        %1564 = vmatprep.subr.bf16.mxu0 0
        %1565 = vmatpush1.bf16.msra.mxu0 0
        %1566 = vmatprep.subr.bf16.mxu0 0
        %1567 = vmatpush1.bf16.msra.mxu0 0
        %1568 = vmatprep.subr.bf16.mxu0 0
        %1569 = vmatpush1.bf16.msra.mxu0 0
        %1570 = vmatprep.subr.bf16.mxu0 0
        %1571 = vmatpush1.bf16.msra.mxu0 0
        %1572 = vmatprep.subr.bf16.mxu0 0
        %1573 = vmatpush1.bf16.msra.mxu0 0
        %1574 = vmatprep.mubr.bf16.mxu0 0
        %1575 = vmatmul.mubr.bf16.gmra.mrb[0].mxu0 %v639
        %v1576 = vpop.f32.mrb[0].mxu0
        %v1577 = vadd.f32 0.0, %v1576
        %v1578 = vpop.f32.mrb[0].mxu0
        %v1579 = vpop.f32.mrb[0].mxu0
        %v1580 = vadd.f32 0.0, %v1579
        %v1581 = vpop.f32.mrb[0].mxu0
        %1582 = vdwg.mxu0
        %v1583 = vmul.f32 %v1536, 2.0
        %v1584 = vmul.f32 %v1539, 2.0
        %v1585 = vmul.f32 %v1577, 2.0
        %v1586 = vmul.f32 %v1580, 2.0
        %v1587 = vsub.f32 %v1583, %v1411
        %v1588 = vsub.f32 %v1584, %v1412
        %v1589 = vsub.f32 %v1585, %v1413
        %v1590 = vsub.f32 %v1586, %v1414
        %1595 = vrot.lane.b32.xlu0 %v1452, 64
        %v1596 = vpop.permute.xlu0 %1595
        %1597 = vrot.lane.b32.xlu0 %v1455, 64
        %v1598 = vpop.permute.xlu0 %1597
        %1599 = vrot.lane.b32.xlu0 %v1493, 64
        %v1600 = vpop.permute.xlu0 %1599
        %1601 = vrot.lane.b32.xlu0 %v1496, 64
        %v1602 = vpop.permute.xlu0 %1601
        %v1607 = vsel %vm1166, %v1411, %v1596
        %v1608 = vsel %vm1166, %v1412, %v1598
        %v1609 = vsel %vm1166, %v1413, %v1600
        %v1610 = vsel %vm1166, %v1414, %v1602
        %v1611 = vpack.c.bf16 %v1608, %v1607
        %v1612 = vpack.c.bf16 %v1588, %v1587
        %v1613 = vpack.c.bf16 %v1610, %v1609
        %v1614 = vpack.c.bf16 %v1590, %v1589
        %v1616 = vlaneseq
        %v1617 = vshrl.u32 %v1616, 7
        %v1618 = vsub.s32 0, %v1617
        %v1619 = vrot.slane %v1389, %v1618
        %v1645 = vunpack.c.l.b16 %v1353
        %v1646 = vunpack.c.l.b16 %v1354
        %v1647 = vunpack.c.l.b16 %v1355
        %v1648 = vunpack.c.l.b16 %v1356
        %v1649 = vunpack.c.l.b16 %v1357
        %v1650 = vunpack.c.l.b16 %v1358
        %v1651 = vunpack.c.l.b16 %v1359
        %v1652 = vunpack.c.l.b16 %v1360
        %v1653 = vunpack.c.l.b16 %v1361
        %v1654 = vunpack.c.l.b16 %v1362
        %v1655 = vunpack.c.l.b16 %v1363
        %v1656 = vunpack.c.l.b16 %v1364
        %v1657 = vunpack.c.l.b16 %v1365
        %v1658 = vunpack.c.l.b16 %v1366
        %v1659 = vunpack.c.l.b16 %v1367
        %v1660 = vunpack.c.l.b16 %v1368
        %v1661 = vunpack.c.l.b16 %v1369
        %v1662 = vunpack.c.l.b16 %v1370
        %v1663 = vunpack.c.l.b16 %v1371
        %v1664 = vunpack.c.l.b16 %v1372
        %v1665 = vunpack.c.l.b16 %v1373
        %v1666 = vunpack.c.l.b16 %v1374
        %v1667 = vunpack.c.l.b16 %v1375
        %v1668 = vunpack.c.l.b16 %v1376
        %v1669 = vpack.c.b16 %v1646, %v1645
        %v1670 = vpack.c.b16 %v1648, %v1647
        %v1671 = vpack.c.b16 %v1650, %v1649
        %v1672 = vpack.c.b16 %v1652, %v1651
        %v1673 = vpack.c.b16 %v1654, %v1653
        %v1674 = vpack.c.b16 %v1656, %v1655
        %v1675 = vpack.c.b16 %v1658, %v1657
        %v1676 = vpack.c.b16 %v1660, %v1659
        %v1677 = vpack.c.b16 %v1662, %v1661
        %v1678 = vpack.c.b16 %v1664, %v1663
        %v1679 = vpack.c.b16 %v1666, %v1665
        %v1680 = vpack.c.b16 %v1668, %v1667
        %v1694 = vsel %vm1166, %v1612, 0
        %v1697 = vsel %vm1166, %v1614, 0
        %1699 = vmatprep.subr.bf16.mxu0 0
        %1700 = vmatpush1.bf16.msra.mxu0 %v1669
        %1701 = vmatprep.subr.bf16.mxu0 0
        %1702 = vmatpush1.bf16.msra.mxu0 %v1670
        %1703 = vmatprep.subr.bf16.mxu0 0
        %1704 = vmatpush1.bf16.msra.mxu0 %v1671
        %1705 = vmatprep.subr.bf16.mxu0 0
        %1706 = vmatpush1.bf16.msra.mxu0 %v1672
        %1707 = vmatprep.subr.bf16.mxu0 0
        %1708 = vmatpush1.bf16.msra.mxu0 %v1673
        %1709 = vmatprep.subr.bf16.mxu0 0
        %1710 = vmatpush1.bf16.msra.mxu0 %v1674
        %1711 = vmatprep.subr.bf16.mxu0 0
        %1712 = vmatpush1.bf16.msra.mxu0 %v1675
        %1713 = vmatprep.subr.bf16.mxu0 0
        %1714 = vmatpush1.bf16.msra.mxu0 %v1676
        %1715 = vmatprep.subr.bf16.mxu0 0
        %1716 = vmatpush1.bf16.msra.mxu0 %v1677
        %1717 = vmatprep.subr.bf16.mxu0 0
        %1718 = vmatpush1.bf16.msra.mxu0 %v1678
        %1719 = vmatprep.subr.bf16.mxu0 0
        %1720 = vmatpush1.bf16.msra.mxu0 %v1679
        %1721 = vmatprep.subr.bf16.mxu0 0
        %1722 = vmatpush1.bf16.msra.mxu0 %v1680
        %1723 = vmatprep.subr.bf16.mxu0 0
        %1724 = vmatpush1.bf16.msra.mxu0 0
        %1725 = vmatprep.subr.bf16.mxu0 0
        %1726 = vmatpush1.bf16.msra.mxu0 0
        %1727 = vmatprep.subr.bf16.mxu0 0
        %1728 = vmatpush1.bf16.msra.mxu0 0
        %1729 = vmatprep.subr.bf16.mxu0 0
        %1730 = vmatpush1.bf16.msra.mxu0 0
        %1731 = vmatprep.mubr.bf16.mxu0 %v1694
        %1732 = vmatmul.mubr.bf16.gmra.mrb[0].mxu0 %v1611
        %v1733 = vpop.f32.mrb[0].mxu0
        %v1734 = vadd.f32 %v1619, %v1733
        %v1735 = vpop.f32.mrb[0].mxu0
        %v1736 = vpop.f32.mrb[0].mxu0
        %v1737 = vadd.f32 %v1619, %v1736
        %v1738 = vpop.f32.mrb[0].mxu0
        %1739 = vmatprep.mubr.bf16.mxu0 %v1697
        %1740 = vmatmul.mubr.bf16.gmra.mrb[0].mxu0 %v1613
        %v1741 = vpop.f32.mrb[0].mxu0
        %v1742 = vadd.f32 %v1619, %v1741
        %v1743 = vpop.f32.mrb[0].mxu0
        %v1744 = vpop.f32.mrb[0].mxu0
        %v1745 = vadd.f32 %v1619, %v1744
        %v1746 = vpop.f32.mrb[0].mxu0
        %1747 = vdwg.mxu0
        %v1748 = vxor.u32 %v1734, 2147483648
        %v1749 = vxor.u32 %v1737, 2147483648
        %v1750 = vxor.u32 %v1742, 2147483648
        %v1751 = vxor.u32 %v1745, 2147483648
        %v1752 = vmul.f32 %v1748, 1.442695
        %v1753 = vpow.pop %v1752
        %v1754 = vmul.f32 %v1749, 1.442695
        %v1755 = vpow.pop %v1754
        %v1756 = vmul.f32 %v1750, 1.442695
        %v1757 = vpow.pop %v1756
        %v1758 = vmul.f32 %v1751, 1.442695
        %v1759 = vpow.pop %v1758
        %v1760 = vadd.f32 %v1753, 1.0
        %v1761 = vadd.f32 %v1755, 1.0
        %v1762 = vadd.f32 %v1757, 1.0
        %v1763 = vadd.f32 %v1759, 1.0
        %v1764 = vrcp.pop %v1760
        %v1765 = vmul.f32 1.0, %v1764
        %v1766 = vrcp.pop %v1761
        %v1767 = vmul.f32 1.0, %v1766
        %v1768 = vrcp.pop %v1762
        %v1769 = vmul.f32 1.0, %v1768
        %v1770 = vrcp.pop %v1763
        %v1771 = vmul.f32 1.0, %v1770
        %v1772 = vmul.f32 %v1765, %v1391
        %v1773 = vmul.f32 %v1767, %v1392
        %v1774 = vmul.f32 %v1769, %v1393
        %v1775 = vmul.f32 %v1771, %v1394
        %v1776 = vpack.c.bf16 %v1773, %v1772
        %v1777 = vpack.c.bf16 %v1775, %v1774
        %1778 = vmatprep.subr.bf16.mxu0 0
        %1779 = vmatpush1.bf16.msra.mxu0 %v1776
        %1780 = vmatprep.subr.bf16.mxu0 0
        %1781 = vmatpush1.bf16.msra.mxu0 0
        %1782 = vmatprep.subr.bf16.mxu0 0
        %1783 = vmatpush1.bf16.msra.mxu0 0
        %1784 = vmatprep.subr.bf16.mxu0 0
        %1785 = vmatpush1.bf16.msra.mxu0 0
        %1786 = vmatprep.subr.bf16.mxu0 0
        %1787 = vmatpush1.bf16.msra.mxu0 0
        %1788 = vmatprep.subr.bf16.mxu0 0
        %1789 = vmatpush1.bf16.msra.mxu0 0
        %1790 = vmatprep.subr.bf16.mxu0 0
        %1791 = vmatpush1.bf16.msra.mxu0 0
        %1792 = vmatprep.subr.bf16.mxu0 0
        %1793 = vmatpush1.bf16.msra.mxu0 0
        %1794 = vmatprep.subr.bf16.mxu0 0
        %1795 = vmatpush1.bf16.msra.mxu0 0
        %1796 = vmatprep.subr.bf16.mxu0 0
        %1797 = vmatpush1.bf16.msra.mxu0 0
        %1798 = vmatprep.subr.bf16.mxu0 0
        %1799 = vmatpush1.bf16.msra.mxu0 0
        %1800 = vmatprep.subr.bf16.mxu0 0
        %1801 = vmatpush1.bf16.msra.mxu0 0
        %1802 = vmatprep.subr.bf16.mxu0 0
        %1803 = vmatpush1.bf16.msra.mxu0 0
        %1804 = vmatprep.subr.bf16.mxu0 0
        %1805 = vmatpush1.bf16.msra.mxu0 0
        %1806 = vmatprep.subr.bf16.mxu0 0
        %1807 = vmatpush1.bf16.msra.mxu0 0
        %1808 = vmatprep.subr.bf16.mxu0 0
        %1809 = vmatpush1.bf16.msra.mxu0 0
        %1810 = vmatprep.mubr.bf16.mxu0 0
        %1811 = vmatmul.mubr.bf16.gmra.mrb[0].mxu0 %v595
        %v1812 = vpop.f32.mrb[0].mxu0
        %v1813 = vadd.f32 0.0, %v1812
        %v1814 = vpop.f32.mrb[0].mxu0
        %v1815 = vpop.f32.mrb[0].mxu0
        %v1816 = vadd.f32 0.0, %v1815
        %v1817 = vpop.f32.mrb[0].mxu0
        %1818 = vdwg.mxu0
        %1819 = vmatprep.subr.bf16.mxu0 0
        %1820 = vmatpush1.bf16.msra.mxu0 %v1777
        %1821 = vmatprep.subr.bf16.mxu0 0
        %1822 = vmatpush1.bf16.msra.mxu0 0
        %1823 = vmatprep.subr.bf16.mxu0 0
        %1824 = vmatpush1.bf16.msra.mxu0 0
        %1825 = vmatprep.subr.bf16.mxu0 0
        %1826 = vmatpush1.bf16.msra.mxu0 0
        %1827 = vmatprep.subr.bf16.mxu0 0
        %1828 = vmatpush1.bf16.msra.mxu0 0
        %1829 = vmatprep.subr.bf16.mxu0 0
        %1830 = vmatpush1.bf16.msra.mxu0 0
        %1831 = vmatprep.subr.bf16.mxu0 0
        %1832 = vmatpush1.bf16.msra.mxu0 0
        %1833 = vmatprep.subr.bf16.mxu0 0
        %1834 = vmatpush1.bf16.msra.mxu0 0
        %1835 = vmatprep.subr.bf16.mxu0 0
        %1836 = vmatpush1.bf16.msra.mxu0 0
        %1837 = vmatprep.subr.bf16.mxu0 0
        %1838 = vmatpush1.bf16.msra.mxu0 0
        %1839 = vmatprep.subr.bf16.mxu0 0
        %1840 = vmatpush1.bf16.msra.mxu0 0
        %1841 = vmatprep.subr.bf16.mxu0 0
        %1842 = vmatpush1.bf16.msra.mxu0 0
        %1843 = vmatprep.subr.bf16.mxu0 0
        %1844 = vmatpush1.bf16.msra.mxu0 0
        %1845 = vmatprep.subr.bf16.mxu0 0
        %1846 = vmatpush1.bf16.msra.mxu0 0
        %1847 = vmatprep.subr.bf16.mxu0 0
        %1848 = vmatpush1.bf16.msra.mxu0 0
        %1849 = vmatprep.subr.bf16.mxu0 0
        %1850 = vmatpush1.bf16.msra.mxu0 0
        %1851 = vmatprep.mubr.bf16.mxu0 0
        %1852 = vmatmul.mubr.bf16.gmra.mrb[0].mxu0 %v639
        %v1853 = vpop.f32.mrb[0].mxu0
        %v1854 = vadd.f32 0.0, %v1853
        %v1855 = vpop.f32.mrb[0].mxu0
        %v1856 = vpop.f32.mrb[0].mxu0
        %v1857 = vadd.f32 0.0, %v1856
        %v1858 = vpop.f32.mrb[0].mxu0
        %1859 = vdwg.mxu0
        %v1860 = vpack.c.bf16 %v1816, %v1813
        %v1861 = vpack.c.bf16 %v1857, %v1854
        %1862 = vmatprep.subr.bf16.mxu0 0
        %1863 = vmatpush1.bf16.msra.mxu0 %v1860
        %1864 = vmatprep.subr.bf16.mxu0 0
        %1865 = vmatpush1.bf16.msra.mxu0 0
        %1866 = vmatprep.subr.bf16.mxu0 0
        %1867 = vmatpush1.bf16.msra.mxu0 0
        %1868 = vmatprep.subr.bf16.mxu0 0
        %1869 = vmatpush1.bf16.msra.mxu0 0
        %1870 = vmatprep.subr.bf16.mxu0 0
        %1871 = vmatpush1.bf16.msra.mxu0 0
        %1872 = vmatprep.subr.bf16.mxu0 0
        %1873 = vmatpush1.bf16.msra.mxu0 0
        %1874 = vmatprep.subr.bf16.mxu0 0
        %1875 = vmatpush1.bf16.msra.mxu0 0
        %1876 = vmatprep.subr.bf16.mxu0 0
        %1877 = vmatpush1.bf16.msra.mxu0 0
        %1878 = vmatprep.subr.bf16.mxu0 0
        %1879 = vmatpush1.bf16.msra.mxu0 0
        %1880 = vmatprep.subr.bf16.mxu0 0
        %1881 = vmatpush1.bf16.msra.mxu0 0
        %1882 = vmatprep.subr.bf16.mxu0 0
        %1883 = vmatpush1.bf16.msra.mxu0 0
        %1884 = vmatprep.subr.bf16.mxu0 0
        %1885 = vmatpush1.bf16.msra.mxu0 0
        %1886 = vmatprep.subr.bf16.mxu0 0
        %1887 = vmatpush1.bf16.msra.mxu0 0
        %1888 = vmatprep.subr.bf16.mxu0 0
        %1889 = vmatpush1.bf16.msra.mxu0 0
        %1890 = vmatprep.subr.bf16.mxu0 0
        %1891 = vmatpush1.bf16.msra.mxu0 0
        %1892 = vmatprep.subr.bf16.mxu0 0
        %1893 = vmatpush1.bf16.msra.mxu0 0
        %1894 = vmatprep.mubr.bf16.mxu0 0
        %1895 = vmatmul.mubr.bf16.gmra.mrb[0].mxu0 %v595
        %v1896 = vpop.f32.mrb[0].mxu0
        %v1897 = vadd.f32 0.0, %v1896
        %v1898 = vpop.f32.mrb[0].mxu0
        %v1899 = vpop.f32.mrb[0].mxu0
        %v1900 = vadd.f32 0.0, %v1899
        %v1901 = vpop.f32.mrb[0].mxu0
        %1902 = vdwg.mxu0
        %1903 = vmatprep.subr.bf16.mxu0 0
        %1904 = vmatpush1.bf16.msra.mxu0 %v1861
        %1905 = vmatprep.subr.bf16.mxu0 0
        %1906 = vmatpush1.bf16.msra.mxu0 0
        %1907 = vmatprep.subr.bf16.mxu0 0
        %1908 = vmatpush1.bf16.msra.mxu0 0
        %1909 = vmatprep.subr.bf16.mxu0 0
        %1910 = vmatpush1.bf16.msra.mxu0 0
        %1911 = vmatprep.subr.bf16.mxu0 0
        %1912 = vmatpush1.bf16.msra.mxu0 0
        %1913 = vmatprep.subr.bf16.mxu0 0
        %1914 = vmatpush1.bf16.msra.mxu0 0
        %1915 = vmatprep.subr.bf16.mxu0 0
        %1916 = vmatpush1.bf16.msra.mxu0 0
        %1917 = vmatprep.subr.bf16.mxu0 0
        %1918 = vmatpush1.bf16.msra.mxu0 0
        %1919 = vmatprep.subr.bf16.mxu0 0
        %1920 = vmatpush1.bf16.msra.mxu0 0
        %1921 = vmatprep.subr.bf16.mxu0 0
        %1922 = vmatpush1.bf16.msra.mxu0 0
        %1923 = vmatprep.subr.bf16.mxu0 0
        %1924 = vmatpush1.bf16.msra.mxu0 0
        %1925 = vmatprep.subr.bf16.mxu0 0
        %1926 = vmatpush1.bf16.msra.mxu0 0
        %1927 = vmatprep.subr.bf16.mxu0 0
        %1928 = vmatpush1.bf16.msra.mxu0 0
        %1929 = vmatprep.subr.bf16.mxu0 0
        %1930 = vmatpush1.bf16.msra.mxu0 0
        %1931 = vmatprep.subr.bf16.mxu0 0
        %1932 = vmatpush1.bf16.msra.mxu0 0
        %1933 = vmatprep.subr.bf16.mxu0 0
        %1934 = vmatpush1.bf16.msra.mxu0 0
        %1935 = vmatprep.mubr.bf16.mxu0 0
        %1936 = vmatmul.mubr.bf16.gmra.mrb[0].mxu0 %v639
        %v1937 = vpop.f32.mrb[0].mxu0
        %v1938 = vadd.f32 0.0, %v1937
        %v1939 = vpop.f32.mrb[0].mxu0
        %v1940 = vpop.f32.mrb[0].mxu0
        %v1941 = vadd.f32 0.0, %v1940
        %v1942 = vpop.f32.mrb[0].mxu0
        %1943 = vdwg.mxu0
        %v1944 = vmul.f32 %v1897, 2.0
        %v1945 = vmul.f32 %v1900, 2.0
        %v1946 = vmul.f32 %v1938, 2.0
        %v1947 = vmul.f32 %v1941, 2.0
        %v1948 = vsub.f32 %v1944, %v1772
        %v1949 = vsub.f32 %v1945, %v1773
        %v1950 = vsub.f32 %v1946, %v1774
        %v1951 = vsub.f32 %v1947, %v1775
        %1956 = vrot.lane.b32.xlu0 %v1813, 32
        %v1957 = vpop.permute.xlu0 %1956
        %1958 = vrot.lane.b32.xlu0 %v1816, 32
        %v1959 = vpop.permute.xlu0 %1958
        %1960 = vrot.lane.b32.xlu0 %v1854, 32
        %v1961 = vpop.permute.xlu0 %1960
        %1962 = vrot.lane.b32.xlu0 %v1857, 32
        %v1963 = vpop.permute.xlu0 %1962
        %1972 = vrot.lane.b32.xlu0 %v1948, 64
        %v1973 = vpop.permute.xlu0 %1972
        %1974 = vrot.lane.b32.xlu0 %v1949, 64
        %v1975 = vpop.permute.xlu0 %1974
        %1976 = vrot.lane.b32.xlu0 %v1950, 64
        %v1977 = vpop.permute.xlu0 %1976
        %1978 = vrot.lane.b32.xlu0 %v1951, 64
        %v1979 = vpop.permute.xlu0 %1978
        %v1984 = vsel %vm1161, %v1772, %v1957
        %v1985 = vsel %vm1161, %v1773, %v1959
        %v1986 = vsel %vm1161, %v1774, %v1961
        %v1987 = vsel %vm1161, %v1775, %v1963
        %v1988 = vsel %vm1166, %v1984, %v1973
        %v1989 = vsel %vm1166, %v1985, %v1975
        %v1990 = vsel %vm1166, %v1986, %v1977
        %v1991 = vsel %vm1166, %v1987, %v1979
        %v1992 = vpack.c.bf16 %v1989, %v1988
        %v1993 = vpack.c.bf16 %v1991, %v1990
        %v2006 = vunpack.c.l.b16 %v1377
        %v2007 = vunpack.c.l.b16 %v1378
        %v2008 = vunpack.c.l.b16 %v1379
        %v2009 = vunpack.c.l.b16 %v1380
        %v2010 = vunpack.c.l.b16 %v1381
        %v2011 = vunpack.c.l.b16 %v1382
        %v2012 = vunpack.c.l.b16 %v1383
        %v2013 = vunpack.c.l.b16 %v1384
        %v2014 = vunpack.c.l.b16 %v1385
        %v2015 = vunpack.c.l.b16 %v1386
        %v2016 = vunpack.c.l.b16 %v1387
        %v2017 = vunpack.c.l.b16 %v1388
        %v2018 = vpack.c.b16 %v2007, %v2006
        %v2019 = vpack.c.b16 %v2009, %v2008
        %v2020 = vpack.c.b16 %v2011, %v2010
        %v2021 = vpack.c.b16 %v2013, %v2012
        %v2022 = vpack.c.b16 %v2015, %v2014
        %v2023 = vpack.c.b16 %v2017, %v2016
        %v2031 = vsel %vm1209, %v1992, 0
        %v2034 = vsel %vm1209, %v1993, 0
        %2036 = vmatprep.subr.bf16.mxu0 0
        %2037 = vmatpush1.bf16.msra.mxu0 %v2018
        %2038 = vmatprep.subr.bf16.mxu0 0
        %2039 = vmatpush1.bf16.msra.mxu0 %v2019
        %2040 = vmatprep.subr.bf16.mxu0 0
        %2041 = vmatpush1.bf16.msra.mxu0 %v2020
        %2042 = vmatprep.subr.bf16.mxu0 0
        %2043 = vmatpush1.bf16.msra.mxu0 %v2021
        %2044 = vmatprep.subr.bf16.mxu0 0
        %2045 = vmatpush1.bf16.msra.mxu0 %v2022
        %2046 = vmatprep.subr.bf16.mxu0 0
        %2047 = vmatpush1.bf16.msra.mxu0 %v2023
        %2048 = vmatprep.subr.bf16.mxu0 0
        %2049 = vmatpush1.bf16.msra.mxu0 0
        %2050 = vmatprep.subr.bf16.mxu0 0
        %2051 = vmatpush1.bf16.msra.mxu0 0
        %2052 = vmatprep.subr.bf16.mxu0 0
        %2053 = vmatpush1.bf16.msra.mxu0 0
        %2054 = vmatprep.subr.bf16.mxu0 0
        %2055 = vmatpush1.bf16.msra.mxu0 0
        %2056 = vmatprep.subr.bf16.mxu0 0
        %2057 = vmatpush1.bf16.msra.mxu0 0
        %2058 = vmatprep.subr.bf16.mxu0 0
        %2059 = vmatpush1.bf16.msra.mxu0 0
        %2060 = vmatprep.subr.bf16.mxu0 0
        %2061 = vmatpush1.bf16.msra.mxu0 0
        %2062 = vmatprep.subr.bf16.mxu0 0
        %2063 = vmatpush1.bf16.msra.mxu0 0
        %2064 = vmatprep.subr.bf16.mxu0 0
        %2065 = vmatpush1.bf16.msra.mxu0 0
        %2066 = vmatprep.subr.bf16.mxu0 0
        %2067 = vmatpush1.bf16.msra.mxu0 0
        %2068 = vmatprep.mubr.bf16.mxu0 0
        %2069 = vmatmul.mubr.bf16.gmra.mrb[0].mxu0 %v2031
        %v2070 = vpop.f32.mrb[0].mxu0
        %v2071 = vadd.f32 0.0, %v2070
        %v2072 = vpop.f32.mrb[0].mxu0
        %v2073 = vpop.f32.mrb[0].mxu0
        %v2074 = vadd.f32 0.0, %v2073
        %v2075 = vpop.f32.mrb[0].mxu0
        %2076 = vmatprep.mubr.bf16.mxu0 0
        %2077 = vmatmul.mubr.bf16.gmra.mrb[0].mxu0 %v2034
        %v2078 = vpop.f32.mrb[0].mxu0
        %v2079 = vadd.f32 0.0, %v2078
        %v2080 = vpop.f32.mrb[0].mxu0
        %v2081 = vpop.f32.mrb[0].mxu0
        %v2082 = vadd.f32 0.0, %v2081
        %v2083 = vpop.f32.mrb[0].mxu0
        %2084 = vdwg.mxu0
        %2089 = vrot.lane.b32.xlu0 %v2071, 64
        %v2090 = vpop.permute.xlu0 %2089
        %2091 = vrot.lane.b32.xlu0 %v2074, 64
        %v2092 = vpop.permute.xlu0 %2091
        %2093 = vrot.lane.b32.xlu0 %v2079, 64
        %v2094 = vpop.permute.xlu0 %2093
        %2095 = vrot.lane.b32.xlu0 %v2082, 64
        %v2096 = vpop.permute.xlu0 %2095
        %v2101 = vadd.f32 %v1734, %v2090
        %v2102 = vadd.f32 %v1737, %v2092
        %v2103 = vadd.f32 %v1742, %v2094
        %v2104 = vadd.f32 %v1745, %v2096
        %v2105 = vtanh.pop %v2101
        %v2106 = vtanh.pop %v2102
        %v2107 = vtanh.pop %v2103
        %v2108 = vtanh.pop %v2104
        %v2109 = vmul.f32 %v1765, %v1400
        %v2110 = vmul.f32 %v1767, %v1402
        %v2111 = vmul.f32 %v1769, %v1404
        %v2112 = vmul.f32 %v1771, %v1406
        %v2113 = vsub.f32 1.0, %v1765
        %v2114 = vsub.f32 1.0, %v1767
        %v2115 = vsub.f32 1.0, %v1769
        %v2116 = vsub.f32 1.0, %v1771
        %2121 = vrot.lane.b32.xlu0 %v2105, 96
        %v2122 = vpop.permute.xlu0 %2121
        %2123 = vrot.lane.b32.xlu0 %v2106, 96
        %v2124 = vpop.permute.xlu0 %2123
        %2125 = vrot.lane.b32.xlu0 %v2107, 96
        %v2126 = vpop.permute.xlu0 %2125
        %2127 = vrot.lane.b32.xlu0 %v2108, 96
        %v2128 = vpop.permute.xlu0 %2127
        %v2133 = vmul.f32 %v2113, %v2122
        %v2134 = vmul.f32 %v2114, %v2124
        %v2135 = vmul.f32 %v2115, %v2126
        %v2136 = vmul.f32 %v2116, %v2128
        %v2137 = vadd.f32 %v2109, %v2133
        %v2138 = vadd.f32 %v2110, %v2134
        %v2139 = vadd.f32 %v2111, %v2135
        %v2140 = vadd.f32 %v2112, %v2136
        %2145 = vrot.lane.b32.xlu0 %v2137, 96
        %v2146 = vpop.permute.xlu0 %2145
        %2147 = vrot.lane.b32.xlu0 %v2138, 96
        %v2148 = vpop.permute.xlu0 %2147
        %2149 = vrot.lane.b32.xlu0 %v2139, 96
        %v2150 = vpop.permute.xlu0 %2149
        %2151 = vrot.lane.b32.xlu0 %v2140, 96
        %v2152 = vpop.permute.xlu0 %2151
        %2157 = vst.msk [vmem:[%s1390] sm:$0xff] %vm1161, %v2146
        %2158 = vst.msk [vmem:[%s1390 + $0x8] sm:$0xff] %vm1161, %v2148
        %2159 = vst.msk [vmem:[%s1390 + $0x10] sm:$0xff] %vm1161, %v2150
        %2160 = vst.msk [vmem:[%s1390 + $0x18] sm:$0xff] %vm1161, %v2152
        // Predicated region
        $region89: #{dcrnn_next_time_pred.2} parent=51 // pred_check
          %p2161 = pneg %p241
        $region90: #{dcrnn_next_time_pred.2} parent=51 // pred_check_branch
          %2163 = sbr.rel (%p2161) target = $region92
        $region91: #{dcrnn_next_time_pred.2} parent=51 // pred_region
          %s2164 = smul.u32 2, %s33
          %s2166 = ssub.s32 1024, 1024
          %2167 = vsyncadd [#allocation4], %s2166
          %s2168 = smul.addr %s2164, 2
          %s2169 = smul.addr %s2168, 128
          %s2170 = scalar_lea.hbm %s8, %s2169
          %s2171 = sshll.u32 [#allocation16], 4
          %s2172 = int_to_ptr.vmem [resolvable:$true] %s2171
          %2177 = dma.vmem_to_hbm [thread:$0]  %s2172, 1024, %s2170, [#allocation4], 128, 128, 8
        $region92: #{dcrnn_next_time_pred.2} parent=51 // pred_fallthru
          _
        // Predicated region
        $region93: #{dcrnn_next_time_pred.2} parent=51 // pred_check
          %p2178 = pneg %p241
        $region94: #{dcrnn_next_time_pred.2} parent=51 // pred_check_branch
          %2180 = sbr.rel (%p2178) target = $region96
        $region95: #{dcrnn_next_time_pred.2} parent=51 // pred_region
          %2181 = dma.done [#allocation4], 1024
        $region96: #{dcrnn_next_time_pred.2} parent=51 // pred_fallthru
          _
      $region52: #{dcrnn_next_time_pred.2} parent=5 // pred_fallthru
        _
      %p2182 = scmp.le.s32.totalorder 2, %s24
      // Predicated region
      $region97: #{dcrnn_next_time_pred.2} parent=5 // pred_check
        %p2183 = pneg %p2182
      $region98: #{dcrnn_next_time_pred.2} parent=5 // pred_check_branch
        %2185 = sbr.rel (%p2183) target = $region100
      $region99: #{dcrnn_next_time_pred.2} parent=5 // pred_region
        %s2186 = ssub.s32 %s24, 2
      $region100: #{dcrnn_next_time_pred.2} parent=5 // pred_fallthru
        _
    $region6: #{dcrnn_next_time_pred.2} parent=1 // loop_footer
      %s28 = sadd.s32 1, %s24
    $region7: #{dcrnn_next_time_pred.2} parent=1 // loop_footer_branch
      %23 = sbr.rel target = $region3
    $region8: #{dcrnn_next_time_pred.2} parent=1 // loop_exit
      _
    %2187 = vsyncpa [#allocation3], 1
    %s2188 = scalar_lea.sflag [#allocation3], 1
    %2189 = vsyncpa %s2188, 1
    %2190 = vsyncpa [#allocation6], 1
    %s2191 = scalar_lea.sflag [#allocation6], 1
    %2192 = vsyncpa %s2191, 1
    %2193 = vsyncpa [#allocation9], 1
    %2194 = vsyncpa [#allocation12], 1
    %2195 = vsyncpa [#allocation15], 1
    %2196 = vsyncpa [#allocation4], 1
    %s2197 = scalar_lea.sflag [#allocation4], 1
    %2198 = vsyncpa %s2197, 1

// kernel: dcrnn_next_time_pred.3
$region0: #{dcrnn_next_time_pred.3}
  #allocation0 [shape = 'u32[]', space=smem, size = 0x4, offset = 0x4, fixed_abs, tag = 'smem constant byte address 0x4 - core index']
  #allocation1 [shape = 'u32[144,128]{1,0:T(1,128)}', space=vmem, size = 0x12000, scoped, tag = 'internal scratch']
  #allocation2 [shape = 'f32[2,2,16,32]{3,2,1,0:T(8,128)}', space=vmem, size = 0x8000, scoped, tag = 'scratch operand']
  #allocation3 [shape = 'f32[2,16,4]{2,1,0:T(8,128)}', space=vmem, size = 0x4000, scoped, tag = 'scratch operand']
  #allocation22 [shape = 's32[]', space=sflag, size = 0x4, offset = 0, fixed_abs, tag = 'sflag constant byte address 0x0 - dummy sync flag']
  #allocation24 [shape = 's32[]', space=sflag, size = 0x4, offset = 0, fixed_abs, tag = 'sflag constant byte address 0x0 - dummy sync flag']
  %s0 = inlined_call_operand.hbm [shape: f32[2,8,16,16], index: 0, kind: input, shape index: {}]
  %s1 = inlined_call_operand.hbm [shape: f32[2,2,16,32], index: 1, kind: input, shape index: {}]
  %s2 = inlined_call_operand.hbm [shape: bf16[108,96], index: 2, kind: input, shape index: {}]
  %s3 = inlined_call_operand.hbm [shape: bf16[96,32], index: 3, kind: input, shape index: {}]
  %s4 = inlined_call_operand.hbm [shape: f32[1,96], index: 4, kind: input, shape index: {}]
  %s5 = inlined_call_operand.hbm [shape: bf16[192,96], index: 5, kind: input, shape index: {}]
  %s6 = inlined_call_operand.hbm [shape: bf16[96,32], index: 6, kind: input, shape index: {}]
  %s7 = inlined_call_operand.hbm [shape: f32[1,96], index: 7, kind: input, shape index: {}]
  %s8 = inlined_call_operand.hbm [shape: bf16[32,4], index: 8, kind: input, shape index: {}]
  %s9 = inlined_call_operand.hbm [shape: f32[1,4], index: 9, kind: input, shape index: {}]
  %s10 = inlined_call_operand.hbm [shape: f32[2,8,16,4], index: 10, kind: output, shape index: {}]
  %s11 = sld [smem:[#allocation0]]
  $region117: #{dcrnn_next_time_pred.3} parent=0
    _
  %s13 = ssub.s32 1, %s11
  %s14 = scalar_select 0, %s13, %s11
  $region1: #{dcrnn_next_time_pred.3} parent=0
    #allocation4 [shape = 'u8[32768]{0}', space=vmem, size = 0x8000, scoped, tag = 'input window, operand 0']
    #allocation5 [shape = 's32[2]{0}', space=sflag, size = 0x8, scoped, tag = 'scoped memory for dcrnn_next_time_pred.3']
    #allocation6 [shape = 's32[2]{0}', space=sflag, size = 0x8, scoped, tag = 'scoped memory for dcrnn_next_time_pred.3']
    #allocation7 [shape = 'u8[32768]{0}', space=vmem, size = 0x8000, scoped, tag = 'input window, operand 1, single buffered']
    #allocation8 [shape = 's32[1]{0}', space=sflag, size = 0x4, scoped, tag = 'scoped memory for dcrnn_next_time_pred.3']
    #allocation9 [shape = 'u8[28672]{0}', space=vmem, size = 0x7000, scoped, tag = 'input window, operand 2, single buffered']
    #allocation10 [shape = 'u8[24576]{0}', space=vmem, size = 0x6000, scoped, tag = 'input window, operand 3, single buffered']
    #allocation11 [shape = 's32[1]{0}', space=sflag, size = 0x4, scoped, tag = 'scoped memory for dcrnn_next_time_pred.3']
    #allocation12 [shape = 'u8[512]{0}', space=vmem, size = 0x400, scoped, tag = 'input window, operand 4, single buffered']
    #allocation13 [shape = 'u8[49152]{0}', space=vmem, size = 0xc000, scoped, tag = 'input window, operand 5, single buffered']
    #allocation14 [shape = 's32[1]{0}', space=sflag, size = 0x4, scoped, tag = 'scoped memory for dcrnn_next_time_pred.3']
    #allocation15 [shape = 'u8[24576]{0}', space=vmem, size = 0x6000, scoped, tag = 'input window, operand 6, single buffered']
    #allocation16 [shape = 'u8[512]{0}', space=vmem, size = 0x400, scoped, tag = 'input window, operand 7, single buffered']
    #allocation17 [shape = 's32[1]{0}', space=sflag, size = 0x4, scoped, tag = 'scoped memory for dcrnn_next_time_pred.3']
    #allocation18 [shape = 'u8[8192]{0}', space=vmem, size = 0x2000, scoped, tag = 'input window, operand 8, single buffered']
    #allocation19 [shape = 'u8[512]{0}', space=vmem, size = 0x400, scoped, tag = 'input window, operand 9, single buffered']
    #allocation20 [shape = 's32[1]{0}', space=sflag, size = 0x4, scoped, tag = 'scoped memory for dcrnn_next_time_pred.3']
    #allocation21 [shape = 'u8[32768]{0}', space=vmem, size = 0x8000, scoped, tag = 'output window, operand 0']
    %15 = vsyncpa [#allocation5], 0
    %s16 = scalar_lea.sflag [#allocation5], 1
    %17 = vsyncpa %s16, 0
    %18 = vsyncpa [#allocation8], 0
    %19 = vsyncpa [#allocation11], 0
    %20 = vsyncpa [#allocation14], 0
    %21 = vsyncpa [#allocation17], 0
    %22 = vsyncpa [#allocation20], 0
    %23 = vsyncpa [#allocation6], 0
    %s24 = scalar_lea.sflag [#allocation6], 1
    %25 = vsyncpa %s24, 0
    loop: start=0, step=1, limit=10
    $region2: #{dcrnn_next_time_pred.3} parent=1 // loop_pre_header
      _
    $region3: #{dcrnn_next_time_pred.3} parent=1 // loop_header
      %s27 = sphi 0, %s31
      %p28 = scmp.ge.s32.totalorder %s27, 10
      %s34 = sphi 0, %s46
      %s35 = sphi 0, %s42
      %s36 = sphi 0, %s34
      %s37 = sphi 0, %s35
      %s38 = sphi 0, %s36
      %s39 = sphi 0, %s37
      %s51 = sphi 0, %s53
      %s54 = sphi 0, %s51
      %s55 = sphi 0, %s54
      %s71 = sphi 0, %s55
      %s77 = sphi 0, %s79
      %s80 = sphi 0, %s77
      %s81 = sphi 0, %s80
      %s97 = sphi 0, %s81
      %s101 = sphi 0, %s101
      %s103 = sphi 0, %s101
      %s104 = sphi 0, %s103
      %s118 = sphi 0, %s104
      %s122 = sphi 0, %s122
      %s124 = sphi 0, %s122
      %s125 = sphi 0, %s124
      %s139 = sphi 0, %s125
      %s143 = sphi 0, %s143
      %s145 = sphi 0, %s143
      %s146 = sphi 0, %s145
      %s160 = sphi 0, %s146
      %s164 = sphi 0, %s164
      %s166 = sphi 0, %s164
      %s167 = sphi 0, %s166
      %s181 = sphi 0, %s167
      %s185 = sphi 0, %s185
      %s187 = sphi 0, %s185
      %s188 = sphi 0, %s187
      %s202 = sphi 0, %s188
      %s206 = sphi 0, %s206
      %s208 = sphi 0, %s206
      %s209 = sphi 0, %s208
      %s223 = sphi 0, %s209
      %s227 = sphi 0, %s227
      %s229 = sphi 0, %s227
      %s230 = sphi 0, %s229
      %s244 = sphi 0, %s230
      %s248 = sphi 0, %s248
      %s250 = sphi 0, %s248
      %s251 = sphi 0, %s250
      %s265 = sphi 0, %s251
      %s273 = sphi 0, %s275
      %s276 = sphi 0, %s273
      %s277 = sphi 0, %s276
      %s293 = sphi 0, %s277
    $region4: #{dcrnn_next_time_pred.3} parent=1 // loop_header_branch
      %30 = sbr.rel (%p28) target = $region8
    $region5: #{dcrnn_next_time_pred.3} parent=1 // loop_body
      %s32 = ssub.s32 %s27, 1
      %s33 = ssub.s32 %s27, 2
      %s40 = sadd.s32 1, %s35
      %p41 = scmp.ge.s32.totalorder %s40, 8
      %s42 = scalar_select %p41, 0, %s40
      %s43 = sadd.s32 1, %s34
      %s44 = scalar_select %p41, %s43, %s34
      %p45 = scmp.ge.s32.totalorder %s44, 1
      %s46 = scalar_select %p45, 0, %s44
      %s47 = ssub.s32 %s34, %s46
      %s48 = ssub.s32 %s35, %s42
      %s49 = sor.u32 %s47, %s48
      %p50 = scmp.eq.s32.totalorder %s49, 0
      %s52 = sadd.s32 %s51, 1
      %s53 = scalar_select %p50, %s51, %s52
      %p56 = pneg %p50
      %p57 = scmp.eq.s32.totalorder %s27, 7
      %p58 = por %p56, %p57
      %p59 = scmp.ne.s32.totalorder %s51, %s54
      %p60 = scmp.eq.s32.totalorder %s27, 0
      %p61 = por %p59, %p60
      %p62 = scmp.ne.s32.totalorder %s51, %s54
      %p63 = scmp.eq.s32.totalorder %s32, 7
      %p64 = por %p62, %p63
      %p65 = scmp.ne.s32.totalorder %s54, %s55
      %p66 = scmp.eq.s32.totalorder %s32, 0
      %p67 = por %p65, %p66
      %p68 = scmp.ne.s32.totalorder %s54, %s55
      %p69 = scmp.eq.s32.totalorder %s33, 7
      %p70 = por %p68, %p69
      %p72 = scmp.ne.s32.totalorder %s55, %s71
      %p73 = scmp.eq.s32.totalorder %s33, 0
      %p74 = por %p72, %p73
      %s75 = ssub.s32 %s34, %s46
      %p76 = scmp.eq.s32.totalorder %s75, 0
      %s78 = sadd.s32 %s77, 1
      %s79 = scalar_select %p76, %s77, %s78
      %p82 = pneg %p76
      %p83 = scmp.eq.s32.totalorder %s27, 7
      %p84 = por %p82, %p83
      %p85 = scmp.ne.s32.totalorder %s77, %s80
      %p86 = scmp.eq.s32.totalorder %s27, 0
      %p87 = por %p85, %p86
      %p88 = scmp.ne.s32.totalorder %s77, %s80
      %p89 = scmp.eq.s32.totalorder %s32, 7
      %p90 = por %p88, %p89
      %p91 = scmp.ne.s32.totalorder %s80, %s81
      %p92 = scmp.eq.s32.totalorder %s32, 0
      %p93 = por %p91, %p92
      %p94 = scmp.ne.s32.totalorder %s80, %s81
      %p95 = scmp.eq.s32.totalorder %s33, 7
      %p96 = por %p94, %p95
      %p98 = scmp.ne.s32.totalorder %s81, %s97
      %p99 = scmp.eq.s32.totalorder %s33, 0
      %p100 = por %p98, %p99
      %s102 = sadd.s32 %s101, 1
      %p105 = scmp.eq.s32.totalorder %s27, 7
      %p106 = scmp.ne.s32.totalorder %s101, %s103
      %p107 = scmp.eq.s32.totalorder %s27, 0
      %p108 = por %p106, %p107
      %p109 = scmp.ne.s32.totalorder %s101, %s103
      %p110 = scmp.eq.s32.totalorder %s32, 7
      %p111 = por %p109, %p110
      %p112 = scmp.ne.s32.totalorder %s103, %s104
      %p113 = scmp.eq.s32.totalorder %s32, 0
      %p114 = por %p112, %p113
      %p115 = scmp.ne.s32.totalorder %s103, %s104
      %p116 = scmp.eq.s32.totalorder %s33, 7
      %p117 = por %p115, %p116
      %p119 = scmp.ne.s32.totalorder %s104, %s118
      %p120 = scmp.eq.s32.totalorder %s33, 0
      %p121 = por %p119, %p120
      %s123 = sadd.s32 %s122, 1
      %p126 = scmp.eq.s32.totalorder %s27, 7
      %p127 = scmp.ne.s32.totalorder %s122, %s124
      %p128 = scmp.eq.s32.totalorder %s27, 0
      %p129 = por %p127, %p128
      %p130 = scmp.ne.s32.totalorder %s122, %s124
      %p131 = scmp.eq.s32.totalorder %s32, 7
      %p132 = por %p130, %p131
      %p133 = scmp.ne.s32.totalorder %s124, %s125
      %p134 = scmp.eq.s32.totalorder %s32, 0
      %p135 = por %p133, %p134
      %p136 = scmp.ne.s32.totalorder %s124, %s125
      %p137 = scmp.eq.s32.totalorder %s33, 7
      %p138 = por %p136, %p137
      %p140 = scmp.ne.s32.totalorder %s125, %s139
      %p141 = scmp.eq.s32.totalorder %s33, 0
      %p142 = por %p140, %p141
      %s144 = sadd.s32 %s143, 1
      %p147 = scmp.eq.s32.totalorder %s27, 7
      %p148 = scmp.ne.s32.totalorder %s143, %s145
      %p149 = scmp.eq.s32.totalorder %s27, 0
      %p150 = por %p148, %p149
      %p151 = scmp.ne.s32.totalorder %s143, %s145
      %p152 = scmp.eq.s32.totalorder %s32, 7
      %p153 = por %p151, %p152
      %p154 = scmp.ne.s32.totalorder %s145, %s146
      %p155 = scmp.eq.s32.totalorder %s32, 0
      %p156 = por %p154, %p155
      %p157 = scmp.ne.s32.totalorder %s145, %s146
      %p158 = scmp.eq.s32.totalorder %s33, 7
      %p159 = por %p157, %p158
      %p161 = scmp.ne.s32.totalorder %s146, %s160
      %p162 = scmp.eq.s32.totalorder %s33, 0
      %p163 = por %p161, %p162
      %s165 = sadd.s32 %s164, 1
      %p168 = scmp.eq.s32.totalorder %s27, 7
      %p169 = scmp.ne.s32.totalorder %s164, %s166
      %p170 = scmp.eq.s32.totalorder %s27, 0
      %p171 = por %p169, %p170
      %p172 = scmp.ne.s32.totalorder %s164, %s166
      %p173 = scmp.eq.s32.totalorder %s32, 7
      %p174 = por %p172, %p173
      %p175 = scmp.ne.s32.totalorder %s166, %s167
      %p176 = scmp.eq.s32.totalorder %s32, 0
      %p177 = por %p175, %p176
      %p178 = scmp.ne.s32.totalorder %s166, %s167
      %p179 = scmp.eq.s32.totalorder %s33, 7
      %p180 = por %p178, %p179
      %p182 = scmp.ne.s32.totalorder %s167, %s181
      %p183 = scmp.eq.s32.totalorder %s33, 0
      %p184 = por %p182, %p183
      %s186 = sadd.s32 %s185, 1
      %p189 = scmp.eq.s32.totalorder %s27, 7
      %p190 = scmp.ne.s32.totalorder %s185, %s187
      %p191 = scmp.eq.s32.totalorder %s27, 0
      %p192 = por %p190, %p191
      %p193 = scmp.ne.s32.totalorder %s185, %s187
      %p194 = scmp.eq.s32.totalorder %s32, 7
      %p195 = por %p193, %p194
      %p196 = scmp.ne.s32.totalorder %s187, %s188
      %p197 = scmp.eq.s32.totalorder %s32, 0
      %p198 = por %p196, %p197
      %p199 = scmp.ne.s32.totalorder %s187, %s188
      %p200 = scmp.eq.s32.totalorder %s33, 7
      %p201 = por %p199, %p200
      %p203 = scmp.ne.s32.totalorder %s188, %s202
      %p204 = scmp.eq.s32.totalorder %s33, 0
      %p205 = por %p203, %p204
      %s207 = sadd.s32 %s206, 1
      %p210 = scmp.eq.s32.totalorder %s27, 7
      %p211 = scmp.ne.s32.totalorder %s206, %s208
      %p212 = scmp.eq.s32.totalorder %s27, 0
      %p213 = por %p211, %p212
      %p214 = scmp.ne.s32.totalorder %s206, %s208
      %p215 = scmp.eq.s32.totalorder %s32, 7
      %p216 = por %p214, %p215
      %p217 = scmp.ne.s32.totalorder %s208, %s209
      %p218 = scmp.eq.s32.totalorder %s32, 0
      %p219 = por %p217, %p218
      %p220 = scmp.ne.s32.totalorder %s208, %s209
      %p221 = scmp.eq.s32.totalorder %s33, 7
      %p222 = por %p220, %p221
      %p224 = scmp.ne.s32.totalorder %s209, %s223
      %p225 = scmp.eq.s32.totalorder %s33, 0
      %p226 = por %p224, %p225
      %s228 = sadd.s32 %s227, 1
      %p231 = scmp.eq.s32.totalorder %s27, 7
      %p232 = scmp.ne.s32.totalorder %s227, %s229
      %p233 = scmp.eq.s32.totalorder %s27, 0
      %p234 = por %p232, %p233
      %p235 = scmp.ne.s32.totalorder %s227, %s229
      %p236 = scmp.eq.s32.totalorder %s32, 7
      %p237 = por %p235, %p236
      %p238 = scmp.ne.s32.totalorder %s229, %s230
      %p239 = scmp.eq.s32.totalorder %s32, 0
      %p240 = por %p238, %p239
      %p241 = scmp.ne.s32.totalorder %s229, %s230
      %p242 = scmp.eq.s32.totalorder %s33, 7
      %p243 = por %p241, %p242
      %p245 = scmp.ne.s32.totalorder %s230, %s244
      %p246 = scmp.eq.s32.totalorder %s33, 0
      %p247 = por %p245, %p246
      %s249 = sadd.s32 %s248, 1
      %p252 = scmp.eq.s32.totalorder %s27, 7
      %p253 = scmp.ne.s32.totalorder %s248, %s250
      %p254 = scmp.eq.s32.totalorder %s27, 0
      %p255 = por %p253, %p254
      %p256 = scmp.ne.s32.totalorder %s248, %s250
      %p257 = scmp.eq.s32.totalorder %s32, 7
      %p258 = por %p256, %p257
      %p259 = scmp.ne.s32.totalorder %s250, %s251
      %p260 = scmp.eq.s32.totalorder %s32, 0
      %p261 = por %p259, %p260
      %p262 = scmp.ne.s32.totalorder %s250, %s251
      %p263 = scmp.eq.s32.totalorder %s33, 7
      %p264 = por %p262, %p263
      %p266 = scmp.ne.s32.totalorder %s251, %s265
      %p267 = scmp.eq.s32.totalorder %s33, 0
      %p268 = por %p266, %p267
      %s269 = ssub.s32 %s34, %s46
      %s270 = ssub.s32 %s35, %s42
      %s271 = sor.u32 %s269, %s270
      %p272 = scmp.eq.s32.totalorder %s271, 0
      %s274 = sadd.s32 %s273, 1
      %s275 = scalar_select %p272, %s273, %s274
      %p278 = pneg %p272
      %p279 = scmp.eq.s32.totalorder %s27, 7
      %p280 = por %p278, %p279
      %p281 = scmp.ne.s32.totalorder %s273, %s276
      %p282 = scmp.eq.s32.totalorder %s27, 0
      %p283 = por %p281, %p282
      %p284 = scmp.ne.s32.totalorder %s273, %s276
      %p285 = scmp.eq.s32.totalorder %s32, 7
      %p286 = por %p284, %p285
      %p287 = scmp.ne.s32.totalorder %s276, %s277
      %p288 = scmp.eq.s32.totalorder %s32, 0
      %p289 = por %p287, %p288
      %p290 = scmp.ne.s32.totalorder %s276, %s277
      %p291 = scmp.eq.s32.totalorder %s33, 7
      %p292 = por %p290, %p291
      %p294 = scmp.ne.s32.totalorder %s277, %s293
      %p295 = scmp.eq.s32.totalorder %s33, 0
      %p296 = por %p294, %p295
      %p297 = scmp.le.s32.totalorder 1, %s27
      %p298 = scmp.lt.s32.totalorder %s27, 9
      %p299 = pnand %p297, %p298
      %p300 = pneg %p299
      // Predicated region
      $region9: #{dcrnn_next_time_pred.3} parent=5 // pred_check
        _
      $region10: #{dcrnn_next_time_pred.3} parent=5 // pred_check_branch
        %302 = sbr.rel (%p299) target = $region12
      $region11: #{dcrnn_next_time_pred.3} parent=5 // pred_region
        %s303 = ssub.s32 %s27, 1
        // Predicated region
        $region13: #{dcrnn_next_time_pred.3} parent=11 // pred_check
          %p304 = pneg %p93
        $region14: #{dcrnn_next_time_pred.3} parent=11 // pred_check_branch
          %306 = sbr.rel (%p304) target = $region16
        $region15: #{dcrnn_next_time_pred.3} parent=11 // pred_region
          %s307 = smul.u32 2, %s36
          %s309 = ssub.s32 1024, 1024
          %310 = vsyncadd [#allocation8], %s309
          %s311 = smul.addr %s307, 2
          %s312 = smul.addr %s311, 128
          %s313 = scalar_lea.hbm %s1, %s312
          %s314 = sshll.u32 [#allocation7], 4
          %s315 = int_to_ptr.vmem [resolvable:$true] %s314
          %320 = dma.hbm_to_vmem [thread:$0]  %s313, 1024, %s315, [#allocation8], 128, 128, 8
        $region16: #{dcrnn_next_time_pred.3} parent=11 // pred_fallthru
          _
        // Predicated region
        $region17: #{dcrnn_next_time_pred.3} parent=11 // pred_check
          %p321 = pneg %p114
        $region18: #{dcrnn_next_time_pred.3} parent=11 // pred_check_branch
          %323 = sbr.rel (%p321) target = $region20
        $region19: #{dcrnn_next_time_pred.3} parent=11 // pred_region
          %s325 = ssub.s32 896, 896
          %326 = vsyncadd [#allocation8], %s325
          %s327 = sshll.u32 [#allocation9], 4
          %s328 = int_to_ptr.vmem [resolvable:$true] %s327
          %333 = dma.hbm_to_vmem [thread:$0]  %s2, 896, %s328, [#allocation8], 64, 64, 4
        $region20: #{dcrnn_next_time_pred.3} parent=11 // pred_fallthru
          _
        // Predicated region
        $region21: #{dcrnn_next_time_pred.3} parent=11 // pred_check
          %p334 = pneg %p135
        $region22: #{dcrnn_next_time_pred.3} parent=11 // pred_check_branch
          %336 = sbr.rel (%p334) target = $region24
        $region23: #{dcrnn_next_time_pred.3} parent=11 // pred_region
          %s338 = ssub.s32 768, 768
          %339 = vsyncadd [#allocation11], %s338
          %s340 = sshll.u32 [#allocation10], 4
          %s341 = int_to_ptr.vmem [resolvable:$true] %s340
          %346 = dma.hbm_to_vmem [thread:$0]  %s3, 768, %s341, [#allocation11], 64, 64, 4
        $region24: #{dcrnn_next_time_pred.3} parent=11 // pred_fallthru
          _
        // Predicated region
        $region25: #{dcrnn_next_time_pred.3} parent=11 // pred_check
          %p347 = pneg %p156
        $region26: #{dcrnn_next_time_pred.3} parent=11 // pred_check_branch
          %349 = sbr.rel (%p347) target = $region28
        $region27: #{dcrnn_next_time_pred.3} parent=11 // pred_region
          %s351 = ssub.s32 16, 16
          %352 = vsyncadd [#allocation11], %s351
          %s354 = sshll.u32 [#allocation12], 4
          %s355 = int_to_ptr.vmem [resolvable:$true] %s354
          %357 = dma.hbm_to_vmem [thread:$0]  %s4, 16, %s355, [#allocation11]
        $region28: #{dcrnn_next_time_pred.3} parent=11 // pred_fallthru
          _
        // Predicated region
        $region29: #{dcrnn_next_time_pred.3} parent=11 // pred_check
          %p358 = pneg %p177
        $region30: #{dcrnn_next_time_pred.3} parent=11 // pred_check_branch
          %360 = sbr.rel (%p358) target = $region32
        $region31: #{dcrnn_next_time_pred.3} parent=11 // pred_region
          %s362 = ssub.s32 1536, 1536
          %363 = vsyncadd [#allocation14], %s362
          %s364 = sshll.u32 [#allocation13], 4
          %s365 = int_to_ptr.vmem [resolvable:$true] %s364
          %370 = dma.hbm_to_vmem [thread:$0]  %s5, 1536, %s365, [#allocation14], 64, 64, 4
        $region32: #{dcrnn_next_time_pred.3} parent=11 // pred_fallthru
          _
        // Predicated region
        $region33: #{dcrnn_next_time_pred.3} parent=11 // pred_check
          %p371 = pneg %p198
        $region34: #{dcrnn_next_time_pred.3} parent=11 // pred_check_branch
          %373 = sbr.rel (%p371) target = $region36
        $region35: #{dcrnn_next_time_pred.3} parent=11 // pred_region
          %s375 = ssub.s32 768, 768
          %376 = vsyncadd [#allocation14], %s375
          %s377 = sshll.u32 [#allocation15], 4
          %s378 = int_to_ptr.vmem [resolvable:$true] %s377
          %383 = dma.hbm_to_vmem [thread:$0]  %s6, 768, %s378, [#allocation14], 64, 64, 4
        $region36: #{dcrnn_next_time_pred.3} parent=11 // pred_fallthru
          _
        // Predicated region
        $region37: #{dcrnn_next_time_pred.3} parent=11 // pred_check
          %p384 = pneg %p219
        $region38: #{dcrnn_next_time_pred.3} parent=11 // pred_check_branch
          %386 = sbr.rel (%p384) target = $region40
        $region39: #{dcrnn_next_time_pred.3} parent=11 // pred_region
          %s388 = ssub.s32 16, 16
          %389 = vsyncadd [#allocation17], %s388
          %s391 = sshll.u32 [#allocation16], 4
          %s392 = int_to_ptr.vmem [resolvable:$true] %s391
          %394 = dma.hbm_to_vmem [thread:$0]  %s7, 16, %s392, [#allocation17]
        $region40: #{dcrnn_next_time_pred.3} parent=11 // pred_fallthru
          _
        // Predicated region
        $region41: #{dcrnn_next_time_pred.3} parent=11 // pred_check
          %p395 = pneg %p240
        $region42: #{dcrnn_next_time_pred.3} parent=11 // pred_check_branch
          %397 = sbr.rel (%p395) target = $region44
        $region43: #{dcrnn_next_time_pred.3} parent=11 // pred_region
          %s399 = ssub.s32 256, 256
          %400 = vsyncadd [#allocation17], %s399
          %s401 = sshll.u32 [#allocation18], 4
          %s402 = int_to_ptr.vmem [resolvable:$true] %s401
          %407 = dma.hbm_to_vmem [thread:$0]  %s8, 256, %s402, [#allocation17], 64, 64, 4
        $region44: #{dcrnn_next_time_pred.3} parent=11 // pred_fallthru
          _
        // Predicated region
        $region45: #{dcrnn_next_time_pred.3} parent=11 // pred_check
          %p408 = pneg %p261
        $region46: #{dcrnn_next_time_pred.3} parent=11 // pred_check_branch
          %410 = sbr.rel (%p408) target = $region48
        $region47: #{dcrnn_next_time_pred.3} parent=11 // pred_region
          %s412 = ssub.s32 16, 16
          %413 = vsyncadd [#allocation20], %s412
          %s415 = sshll.u32 [#allocation19], 4
          %s416 = int_to_ptr.vmem [resolvable:$true] %s415
          %418 = dma.hbm_to_vmem [thread:$0]  %s9, 16, %s416, [#allocation20]
        $region48: #{dcrnn_next_time_pred.3} parent=11 // pred_fallthru
          _
      $region12: #{dcrnn_next_time_pred.3} parent=5 // pred_fallthru
        _
      %p419 = scmp.lt.s32.totalorder %s27, 8
      // Predicated region
      $region49: #{dcrnn_next_time_pred.3} parent=5 // pred_check
        %p420 = pneg %p419
      $region50: #{dcrnn_next_time_pred.3} parent=5 // pred_check_branch
        %422 = sbr.rel (%p420) target = $region52
      $region51: #{dcrnn_next_time_pred.3} parent=5 // pred_region
        // Predicated region
        $region53: #{dcrnn_next_time_pred.3} parent=51 // pred_check
          %p423 = pneg %p61
        $region54: #{dcrnn_next_time_pred.3} parent=51 // pred_check_branch
          %425 = sbr.rel (%p423) target = $region56
        $region55: #{dcrnn_next_time_pred.3} parent=51 // pred_region
          #allocation23 [shape = 'u32[6]{0}', space=smem, size = 0x18, scoped, tag = 'DMA stride descriptor']
          %s426 = sand.u32 %s51, 1
          %s427 = scalar_lea.sflag [#allocation5], %s426
          %s428 = sand.u32 %s51, 1
          %s429 = smul.addr %s428, 32
          %s430 = scalar_lea.vmem [#allocation4], %s429
          %s431 = smul.u32 2, %s34
          %s433 = ssub.s32 512, 512
          %434 = vsyncadd %s427, %s433
          %s435 = smul.addr %s35, 2
          %s436 = smul.addr %s431, 16
          %s437 = sadd.s32 %s435, %s436
          %s438 = smul.addr %s437, 128
          %s439 = scalar_lea.hbm %s0, %s438
          %s441 = sshll.u32 1, 14
          %s442 = sxor.u32 4294967295, %s441
          %s444 = sld [smem:[#allocation0]]
          %s445 = sadd.s32 2, %s444
          %s447 = sshll.u32 7, 26
          %s448 = sxor.u32 4294967295, %s447
          %s449 = sand.u32 0, %s448
          %s450 = sshll.u32 %s445, 26
          %s451 = sor.u32 %s449, %s450
          %s452 = sshll.u32 %s430, 4
          %s453 = int_to_ptr.vmem [resolvable:$true] %s452
          %459 = sst [smem:[#allocation23]] 2048
          %s460 = scalar_lea.smem [#allocation23], 1
          %461 = sst [smem:[%s460]] 256
          %s462 = scalar_lea.smem [#allocation23], 2
          %463 = sst [smem:[%s462]] 2
          %s464 = scalar_lea.smem [#allocation23], 3
          %465 = sst [smem:[%s464]] 128
          %s466 = scalar_lea.smem [#allocation23], 4
          %467 = sst [smem:[%s466]] 128
          %s468 = scalar_lea.smem [#allocation23], 5
          %469 = sst [smem:[%s468]] 8
          %471 = dma.general %s439, 512, %s453, %s427, [#allocation22], [#allocation23], %s451, 0
        $region56: #{dcrnn_next_time_pred.3} parent=51 // pred_fallthru
          _
      $region52: #{dcrnn_next_time_pred.3} parent=5 // pred_fallthru
        _
      %p472 = scmp.le.s32.totalorder 1, %s27
      %p473 = scmp.lt.s32.totalorder %s27, 9
      %p474 = pnand %p472, %p473
      %p475 = pneg %p474
      // Predicated region
      $region57: #{dcrnn_next_time_pred.3} parent=5 // pred_check
        _
      $region58: #{dcrnn_next_time_pred.3} parent=5 // pred_check_branch
        %477 = sbr.rel (%p474) target = $region60
      $region59: #{dcrnn_next_time_pred.3} parent=5 // pred_region
        %s478 = ssub.s32 %s27, 1
        %s479 = sand.u32 %s54, 1
        %s480 = scalar_lea.sflag [#allocation5], %s479
        %s481 = sand.u32 %s54, 1
        %s482 = smul.addr %s481, 32
        %s483 = scalar_lea.vmem [#allocation4], %s482
        // Predicated region
        $region61: #{dcrnn_next_time_pred.3} parent=59 // pred_check
          %p484 = pneg %p67
        $region62: #{dcrnn_next_time_pred.3} parent=59 // pred_check_branch
          %486 = sbr.rel (%p484) target = $region64
        $region63: #{dcrnn_next_time_pred.3} parent=59 // pred_region
          %487 = dma.done %s480, 512
        $region64: #{dcrnn_next_time_pred.3} parent=59 // pred_fallthru
          _
        // Predicated region
        $region65: #{dcrnn_next_time_pred.3} parent=59 // pred_check
          %p488 = pneg %p93
        $region66: #{dcrnn_next_time_pred.3} parent=59 // pred_check_branch
          %490 = sbr.rel (%p488) target = $region68
        $region67: #{dcrnn_next_time_pred.3} parent=59 // pred_region
          %491 = dma.done [#allocation8], 1024
        $region68: #{dcrnn_next_time_pred.3} parent=59 // pred_fallthru
          _
        // Predicated region
        $region69: #{dcrnn_next_time_pred.3} parent=59 // pred_check
          %p492 = pneg %p114
        $region70: #{dcrnn_next_time_pred.3} parent=59 // pred_check_branch
          %494 = sbr.rel (%p492) target = $region72
        $region71: #{dcrnn_next_time_pred.3} parent=59 // pred_region
          %495 = dma.done [#allocation8], 896
        $region72: #{dcrnn_next_time_pred.3} parent=59 // pred_fallthru
          _
        // Predicated region
        $region73: #{dcrnn_next_time_pred.3} parent=59 // pred_check
          %p496 = pneg %p135
        $region74: #{dcrnn_next_time_pred.3} parent=59 // pred_check_branch
          %498 = sbr.rel (%p496) target = $region76
        $region75: #{dcrnn_next_time_pred.3} parent=59 // pred_region
          %499 = dma.done [#allocation11], 768
        $region76: #{dcrnn_next_time_pred.3} parent=59 // pred_fallthru
          _
        // Predicated region
        $region77: #{dcrnn_next_time_pred.3} parent=59 // pred_check
          %p500 = pneg %p156
        $region78: #{dcrnn_next_time_pred.3} parent=59 // pred_check_branch
          %502 = sbr.rel (%p500) target = $region80
        $region79: #{dcrnn_next_time_pred.3} parent=59 // pred_region
          %503 = dma.done [#allocation11], 16
        $region80: #{dcrnn_next_time_pred.3} parent=59 // pred_fallthru
          _
        // Predicated region
        $region81: #{dcrnn_next_time_pred.3} parent=59 // pred_check
          %p504 = pneg %p177
        $region82: #{dcrnn_next_time_pred.3} parent=59 // pred_check_branch
          %506 = sbr.rel (%p504) target = $region84
        $region83: #{dcrnn_next_time_pred.3} parent=59 // pred_region
          %507 = dma.done [#allocation14], 1536
        $region84: #{dcrnn_next_time_pred.3} parent=59 // pred_fallthru
          _
        // Predicated region
        $region85: #{dcrnn_next_time_pred.3} parent=59 // pred_check
          %p508 = pneg %p198
        $region86: #{dcrnn_next_time_pred.3} parent=59 // pred_check_branch
          %510 = sbr.rel (%p508) target = $region88
        $region87: #{dcrnn_next_time_pred.3} parent=59 // pred_region
          %511 = dma.done [#allocation14], 768
        $region88: #{dcrnn_next_time_pred.3} parent=59 // pred_fallthru
          _
        // Predicated region
        $region89: #{dcrnn_next_time_pred.3} parent=59 // pred_check
          %p512 = pneg %p219
        $region90: #{dcrnn_next_time_pred.3} parent=59 // pred_check_branch
          %514 = sbr.rel (%p512) target = $region92
        $region91: #{dcrnn_next_time_pred.3} parent=59 // pred_region
          %515 = dma.done [#allocation17], 16
        $region92: #{dcrnn_next_time_pred.3} parent=59 // pred_fallthru
          _
        // Predicated region
        $region93: #{dcrnn_next_time_pred.3} parent=59 // pred_check
          %p516 = pneg %p240
        $region94: #{dcrnn_next_time_pred.3} parent=59 // pred_check_branch
          %518 = sbr.rel (%p516) target = $region96
        $region95: #{dcrnn_next_time_pred.3} parent=59 // pred_region
          %519 = dma.done [#allocation17], 256
        $region96: #{dcrnn_next_time_pred.3} parent=59 // pred_fallthru
          _
        // Predicated region
        $region97: #{dcrnn_next_time_pred.3} parent=59 // pred_check
          %p520 = pneg %p261
        $region98: #{dcrnn_next_time_pred.3} parent=59 // pred_check_branch
          %522 = sbr.rel (%p520) target = $region100
        $region99: #{dcrnn_next_time_pred.3} parent=59 // pred_region
          %523 = dma.done [#allocation20], 16
        $region100: #{dcrnn_next_time_pred.3} parent=59 // pred_fallthru
          _
        %s524 = sand.u32 %s54, 1
        %s525 = scalar_lea.sflag [#allocation5], %s524
        %s526 = sand.u32 %s54, 1
        %s527 = smul.addr %s526, 32
        %s528 = scalar_lea.vmem [#allocation4], %s527
        %p529 = pneg %p67
        %p530 = pneg %p64
        %p531 = pneg %p93
        %p532 = pneg %p90
        %p533 = pneg %p114
        %p534 = pneg %p111
        %p535 = pneg %p135
        %p536 = pneg %p132
        %p537 = pneg %p156
        %p538 = pneg %p153
        %p539 = pneg %p177
        %p540 = pneg %p174
        %p541 = pneg %p198
        %p542 = pneg %p195
        %p543 = pneg %p219
        %p544 = pneg %p216
        %p545 = pneg %p240
        %p546 = pneg %p237
        %p547 = pneg %p261
        %p548 = pneg %p258
        %p549 = pneg %p289
        %p550 = pneg %p286
        %s551 = sand.u32 %s276, 1
        %s552 = scalar_lea.sflag [#allocation6], %s551
        %s553 = sand.u32 %s276, 1
        %s554 = smul.addr %s553, 32
        %s555 = scalar_lea.vmem [#allocation21], %s554
        %s556 = smul.u32 2, %s36
        %s557 = smul.u32 2, %s36
        %s558 = smul.u32 2, %s36
        %p560 = scmp.eq.s32.totalorder %s37, 0
        // Predicated region
        $region101: #{dcrnn_next_time_pred.3} parent=59 // pred_check
          %p561 = pneg %p560
        $region102: #{dcrnn_next_time_pred.3} parent=59 // pred_check_branch
          %563 = sbr.rel (%p561) target = $region104
        $region103: #{dcrnn_next_time_pred.3} parent=59 // pred_region
          %v564 = vld [vmem:[#allocation7] sm:$0xff]
          %v565 = vld [vmem:[#allocation7 + $0x8] sm:$0xff]
          %v566 = vld [vmem:[#allocation7 + $0x10] sm:$0xff]
          %v567 = vld [vmem:[#allocation7 + $0x18] sm:$0xff]
          %v568 = vld [vmem:[#allocation7 + $0x20] sm:$0xff]
          %v569 = vld [vmem:[#allocation7 + $0x28] sm:$0xff]
          %v570 = vld [vmem:[#allocation7 + $0x30] sm:$0xff]
          %v571 = vld [vmem:[#allocation7 + $0x38] sm:$0xff]
          %vm572 = vcmask 261120
          %573 = vst.msk [vmem:[#allocation2] sm:$0xff] %vm572, %v564
          %574 = vst.msk [vmem:[#allocation2 + $0x8] sm:$0xff] %vm572, %v565
          %575 = vst.msk [vmem:[#allocation2 + $0x10] sm:$0xff] %vm572, %v566
          %576 = vst.msk [vmem:[#allocation2 + $0x18] sm:$0xff] %vm572, %v567
          %577 = vst.msk [vmem:[#allocation2 + $0x20] sm:$0xff] %vm572, %v568
          %578 = vst.msk [vmem:[#allocation2 + $0x28] sm:$0xff] %vm572, %v569
          %579 = vst.msk [vmem:[#allocation2 + $0x30] sm:$0xff] %vm572, %v570
          %580 = vst.msk [vmem:[#allocation2 + $0x38] sm:$0xff] %vm572, %v571
          %vm581 = vcmask 31744
          %582 = vst.msk [vmem:[#allocation3] sm:$0xff] %vm581, 0.0
          %583 = vst.msk [vmem:[#allocation3 + $0x8] sm:$0xff] %vm581, 0.0
          %584 = vst.msk [vmem:[#allocation3 + $0x10] sm:$0xff] %vm581, 0.0
          %585 = vst.msk [vmem:[#allocation3 + $0x18] sm:$0xff] %vm581, 0.0
        $region104: #{dcrnn_next_time_pred.3} parent=59 // pred_fallthru
          _
        %v586 = vld [vmem:[%s483] sm:$0xff]
        %v587 = vld [vmem:[%s483 + $0x8] sm:$0xff]
        %v588 = vld [vmem:[%s483 + $0x10] sm:$0xff]
        %v589 = vld [vmem:[%s483 + $0x18] sm:$0xff]
        %v590 = vpack.c.bf16 %v587, %v586
        %v591 = vpack.c.bf16 %v589, %v588
        %v592 = vld [vmem:[#allocation3] sm:$0xff]
        %v593 = vld [vmem:[#allocation3 + $0x8] sm:$0xff]
        %v594 = vld [vmem:[#allocation3 + $0x10] sm:$0xff]
        %v595 = vld [vmem:[#allocation3 + $0x18] sm:$0xff]
        %v596 = vld [vmem:[#allocation9] sm:$0xf]
        %v597 = vld [vmem:[#allocation9 + $0x4] sm:$0xf]
        %v598 = vld [vmem:[#allocation9 + $0x8] sm:$0xf]
        %v599 = vld [vmem:[#allocation9 + $0xc] sm:$0xf]
        %v600 = vld [vmem:[#allocation9 + $0x10] sm:$0xf]
        %v601 = vld [vmem:[#allocation9 + $0x14] sm:$0xf]
        %v602 = vld [vmem:[#allocation9 + $0x18] sm:$0xf]
        %v603 = vld [vmem:[#allocation9 + $0x1c] sm:$0xf]
        %v604 = vld [vmem:[#allocation9 + $0x20] sm:$0xf]
        %v605 = vld [vmem:[#allocation9 + $0x24] sm:$0xf]
        %v606 = vld [vmem:[#allocation9 + $0x28] sm:$0xf]
        %v607 = vld [vmem:[#allocation9 + $0x2c] sm:$0xf]
        %v608 = vld [vmem:[#allocation9 + $0x30] sm:$0xf]
        %v609 = vld [vmem:[#allocation9 + $0x34] sm:$0x3]
        %v610 = vld [vmem:[#allocation10] sm:$0xf]
        %v611 = vld [vmem:[#allocation10 + $0x4] sm:$0xf]
        %v612 = vld [vmem:[#allocation10 + $0x8] sm:$0xf]
        %v613 = vld [vmem:[#allocation10 + $0xc] sm:$0xf]
        %v614 = vld [vmem:[#allocation10 + $0x10] sm:$0xf]
        %v615 = vld [vmem:[#allocation10 + $0x14] sm:$0xf]
        %v616 = vld [vmem:[#allocation10 + $0x18] sm:$0xf]
        %v617 = vld [vmem:[#allocation10 + $0x1c] sm:$0xf]
        %v618 = vld [vmem:[#allocation10 + $0x20] sm:$0xf]
        %v619 = vld [vmem:[#allocation10 + $0x24] sm:$0xf]
        %v620 = vld [vmem:[#allocation10 + $0x28] sm:$0xf]
        %v621 = vld [vmem:[#allocation10 + $0x2c] sm:$0xf]
        %v622 = vld [vmem:[#allocation12] sm:$0x1]
        %v623 = vld [vmem:[#allocation2] sm:$0xff]
        %v624 = vld [vmem:[#allocation2 + $0x8] sm:$0xff]
        %v625 = vld [vmem:[#allocation2 + $0x10] sm:$0xff]
        %v626 = vld [vmem:[#allocation2 + $0x18] sm:$0xff]
        %631 = vrot.lane.b32.xlu0 %v623, 4
        %v632 = vpop.permute.xlu0 %631
        %633 = vrot.lane.b32.xlu0 %v624, 4
        %v634 = vpop.permute.xlu0 %633
        %635 = vrot.lane.b32.xlu0 %v625, 4
        %v636 = vpop.permute.xlu0 %635
        %637 = vrot.lane.b32.xlu0 %v626, 4
        %v638 = vpop.permute.xlu0 %637
        %vm643 = vcmask 31744
        %v644 = vsel %vm643, %v592, %v632
        %v645 = vsel %vm643, %v593, %v634
        %v646 = vsel %vm643, %v594, %v636
        %v647 = vsel %vm643, %v595, %v638
        %v648 = vpack.c.bf16 %v645, %v644
        %v649 = vpack.c.bf16 %v647, %v646
        %vm650 = vcmask 130048
        %v652 = vsel %vm650, %v590, 0
        %654 = vmatprep.subr.bf16.mxu0 0
        %655 = vmatpush1.bf16.msra.mxu0 %v648
        %656 = vmatprep.subr.bf16.mxu0 0
        %657 = vmatpush1.bf16.msra.mxu0 0
        %658 = vmatprep.subr.bf16.mxu0 0
        %659 = vmatpush1.bf16.msra.mxu0 0
        %660 = vmatprep.subr.bf16.mxu0 0
        %661 = vmatpush1.bf16.msra.mxu0 0
        %662 = vmatprep.subr.bf16.mxu0 0
        %663 = vmatpush1.bf16.msra.mxu0 0
        %664 = vmatprep.subr.bf16.mxu0 0
        %665 = vmatpush1.bf16.msra.mxu0 0
        %666 = vmatprep.subr.bf16.mxu0 0
        %667 = vmatpush1.bf16.msra.mxu0 0
        %668 = vmatprep.subr.bf16.mxu0 0
        %669 = vmatpush1.bf16.msra.mxu0 0
        %670 = vmatprep.subr.bf16.mxu0 0
        %671 = vmatpush1.bf16.msra.mxu0 0
        %672 = vmatprep.subr.bf16.mxu0 0
        %673 = vmatpush1.bf16.msra.mxu0 0
        %674 = vmatprep.subr.bf16.mxu0 0
        %675 = vmatpush1.bf16.msra.mxu0 0
        %676 = vmatprep.subr.bf16.mxu0 0
        %677 = vmatpush1.bf16.msra.mxu0 0
        %678 = vmatprep.subr.bf16.mxu0 0
        %679 = vmatpush1.bf16.msra.mxu0 0
        %680 = vmatprep.subr.bf16.mxu0 0
        %681 = vmatpush1.bf16.msra.mxu0 0
        %682 = vmatprep.subr.bf16.mxu0 0
        %683 = vmatpush1.bf16.msra.mxu0 0
        %684 = vmatprep.subr.bf16.mxu0 0
        %685 = vmatpush1.bf16.msra.mxu0 0
        %686 = vmatprep.mubr.bf16.mxu0 0
        %687 = vmatmul.mubr.bf16.gmra.mrb[0].mxu0 %v652
        %v688 = vpop.f32.mrb[0].mxu0
        %v689 = vadd.f32 0.0, %v688
        %v690 = vpop.f32.mrb[0].mxu0
        %v691 = vpop.f32.mrb[0].mxu0
        %v692 = vadd.f32 0.0, %v691
        %v693 = vpop.f32.mrb[0].mxu0
        %694 = vdwg.mxu0
        %v696 = vsel %vm650, %v591, 0
        %698 = vmatprep.subr.bf16.mxu0 0
        %699 = vmatpush1.bf16.msra.mxu0 %v649
        %700 = vmatprep.subr.bf16.mxu0 0
        %701 = vmatpush1.bf16.msra.mxu0 0
        %702 = vmatprep.subr.bf16.mxu0 0
        %703 = vmatpush1.bf16.msra.mxu0 0
        %704 = vmatprep.subr.bf16.mxu0 0
        %705 = vmatpush1.bf16.msra.mxu0 0
        %706 = vmatprep.subr.bf16.mxu0 0
        %707 = vmatpush1.bf16.msra.mxu0 0
        %708 = vmatprep.subr.bf16.mxu0 0
        %709 = vmatpush1.bf16.msra.mxu0 0
        %710 = vmatprep.subr.bf16.mxu0 0
        %711 = vmatpush1.bf16.msra.mxu0 0
        %712 = vmatprep.subr.bf16.mxu0 0
        %713 = vmatpush1.bf16.msra.mxu0 0
        %714 = vmatprep.subr.bf16.mxu0 0
        %715 = vmatpush1.bf16.msra.mxu0 0
        %716 = vmatprep.subr.bf16.mxu0 0
        %717 = vmatpush1.bf16.msra.mxu0 0
        %718 = vmatprep.subr.bf16.mxu0 0
        %719 = vmatpush1.bf16.msra.mxu0 0
        %720 = vmatprep.subr.bf16.mxu0 0
        %721 = vmatpush1.bf16.msra.mxu0 0
        %722 = vmatprep.subr.bf16.mxu0 0
        %723 = vmatpush1.bf16.msra.mxu0 0
        %724 = vmatprep.subr.bf16.mxu0 0
        %725 = vmatpush1.bf16.msra.mxu0 0
        %726 = vmatprep.subr.bf16.mxu0 0
        %727 = vmatpush1.bf16.msra.mxu0 0
        %728 = vmatprep.subr.bf16.mxu0 0
        %729 = vmatpush1.bf16.msra.mxu0 0
        %730 = vmatprep.mubr.bf16.mxu0 0
        %731 = vmatmul.mubr.bf16.gmra.mrb[0].mxu0 %v696
        %v732 = vpop.f32.mrb[0].mxu0
        %v733 = vadd.f32 0.0, %v732
        %v734 = vpop.f32.mrb[0].mxu0
        %v735 = vpop.f32.mrb[0].mxu0
        %v736 = vadd.f32 0.0, %v735
        %v737 = vpop.f32.mrb[0].mxu0
        %738 = vdwg.mxu0
        %v739 = vpack.c.bf16 %v692, %v689
        %v740 = vpack.c.bf16 %v736, %v733
        %741 = vmatprep.subr.bf16.mxu0 0
        %742 = vmatpush1.bf16.msra.mxu0 %v739
        %743 = vmatprep.subr.bf16.mxu0 0
        %744 = vmatpush1.bf16.msra.mxu0 0
        %745 = vmatprep.subr.bf16.mxu0 0
        %746 = vmatpush1.bf16.msra.mxu0 0
        %747 = vmatprep.subr.bf16.mxu0 0
        %748 = vmatpush1.bf16.msra.mxu0 0
        %749 = vmatprep.subr.bf16.mxu0 0
        %750 = vmatpush1.bf16.msra.mxu0 0
        %751 = vmatprep.subr.bf16.mxu0 0
        %752 = vmatpush1.bf16.msra.mxu0 0
        %753 = vmatprep.subr.bf16.mxu0 0
        %754 = vmatpush1.bf16.msra.mxu0 0
        %755 = vmatprep.subr.bf16.mxu0 0
        %756 = vmatpush1.bf16.msra.mxu0 0
        %757 = vmatprep.subr.bf16.mxu0 0
        %758 = vmatpush1.bf16.msra.mxu0 0
        %759 = vmatprep.subr.bf16.mxu0 0
        %760 = vmatpush1.bf16.msra.mxu0 0
        %761 = vmatprep.subr.bf16.mxu0 0
        %762 = vmatpush1.bf16.msra.mxu0 0
        %763 = vmatprep.subr.bf16.mxu0 0
        %764 = vmatpush1.bf16.msra.mxu0 0
        %765 = vmatprep.subr.bf16.mxu0 0
        %766 = vmatpush1.bf16.msra.mxu0 0
        %767 = vmatprep.subr.bf16.mxu0 0
        %768 = vmatpush1.bf16.msra.mxu0 0
        %769 = vmatprep.subr.bf16.mxu0 0
        %770 = vmatpush1.bf16.msra.mxu0 0
        %771 = vmatprep.subr.bf16.mxu0 0
        %772 = vmatpush1.bf16.msra.mxu0 0
        %773 = vmatprep.mubr.bf16.mxu0 0
        %774 = vmatmul.mubr.bf16.gmra.mrb[0].mxu0 %v652
        %v775 = vpop.f32.mrb[0].mxu0
        %v776 = vadd.f32 0.0, %v775
        %v777 = vpop.f32.mrb[0].mxu0
        %v778 = vpop.f32.mrb[0].mxu0
        %v779 = vadd.f32 0.0, %v778
        %v780 = vpop.f32.mrb[0].mxu0
        %781 = vdwg.mxu0
        %782 = vmatprep.subr.bf16.mxu0 0
        %783 = vmatpush1.bf16.msra.mxu0 %v740
        %784 = vmatprep.subr.bf16.mxu0 0
        %785 = vmatpush1.bf16.msra.mxu0 0
        %786 = vmatprep.subr.bf16.mxu0 0
        %787 = vmatpush1.bf16.msra.mxu0 0
        %788 = vmatprep.subr.bf16.mxu0 0
        %789 = vmatpush1.bf16.msra.mxu0 0
        %790 = vmatprep.subr.bf16.mxu0 0
        %791 = vmatpush1.bf16.msra.mxu0 0
        %792 = vmatprep.subr.bf16.mxu0 0
        %793 = vmatpush1.bf16.msra.mxu0 0
        %794 = vmatprep.subr.bf16.mxu0 0
        %795 = vmatpush1.bf16.msra.mxu0 0
        %796 = vmatprep.subr.bf16.mxu0 0
        %797 = vmatpush1.bf16.msra.mxu0 0
        %798 = vmatprep.subr.bf16.mxu0 0
        %799 = vmatpush1.bf16.msra.mxu0 0
        %800 = vmatprep.subr.bf16.mxu0 0
        %801 = vmatpush1.bf16.msra.mxu0 0
        %802 = vmatprep.subr.bf16.mxu0 0
        %803 = vmatpush1.bf16.msra.mxu0 0
        %804 = vmatprep.subr.bf16.mxu0 0
        %805 = vmatpush1.bf16.msra.mxu0 0
        %806 = vmatprep.subr.bf16.mxu0 0
        %807 = vmatpush1.bf16.msra.mxu0 0
        %808 = vmatprep.subr.bf16.mxu0 0
        %809 = vmatpush1.bf16.msra.mxu0 0
        %810 = vmatprep.subr.bf16.mxu0 0
        %811 = vmatpush1.bf16.msra.mxu0 0
        %812 = vmatprep.subr.bf16.mxu0 0
        %813 = vmatpush1.bf16.msra.mxu0 0
        %814 = vmatprep.mubr.bf16.mxu0 0
        %815 = vmatmul.mubr.bf16.gmra.mrb[0].mxu0 %v696
        %v816 = vpop.f32.mrb[0].mxu0
        %v817 = vadd.f32 0.0, %v816
        %v818 = vpop.f32.mrb[0].mxu0
        %v819 = vpop.f32.mrb[0].mxu0
        %v820 = vadd.f32 0.0, %v819
        %v821 = vpop.f32.mrb[0].mxu0
        %822 = vdwg.mxu0
        %v823 = vmul.f32 %v776, 2.0
        %v824 = vmul.f32 %v779, 2.0
        %v825 = vmul.f32 %v817, 2.0
        %v826 = vmul.f32 %v820, 2.0
        %v827 = vsub.f32 %v823, %v644
        %v828 = vsub.f32 %v824, %v645
        %v829 = vsub.f32 %v825, %v646
        %v830 = vsub.f32 %v826, %v647
        %835 = vrot.lane.b32.xlu0 %v689, 36
        %v836 = vpop.permute.xlu0 %835
        %837 = vrot.lane.b32.xlu0 %v692, 36
        %v838 = vpop.permute.xlu0 %837
        %839 = vrot.lane.b32.xlu0 %v733, 36
        %v840 = vpop.permute.xlu0 %839
        %841 = vrot.lane.b32.xlu0 %v736, 36
        %v842 = vpop.permute.xlu0 %841
        %851 = vrot.lane.b32.xlu0 %v827, 72
        %v852 = vpop.permute.xlu0 %851
        %853 = vrot.lane.b32.xlu0 %v828, 72
        %v854 = vpop.permute.xlu0 %853
        %855 = vrot.lane.b32.xlu0 %v829, 72
        %v856 = vpop.permute.xlu0 %855
        %857 = vrot.lane.b32.xlu0 %v830, 72
        %v858 = vpop.permute.xlu0 %857
        %vm863 = vcmask 293888
        %v864 = vsel %vm863, %v644, %v836
        %v865 = vsel %vm863, %v645, %v838
        %v866 = vsel %vm863, %v646, %v840
        %v867 = vsel %vm863, %v647, %v842
        %vm868 = vcmask 588800
        %v869 = vsel %vm868, %v864, %v852
        %v870 = vsel %vm868, %v865, %v854
        %v871 = vsel %vm868, %v866, %v856
        %v872 = vsel %vm868, %v867, %v858
        %v873 = vpack.c.bf16 %v870, %v869
        %v874 = vpack.c.bf16 %v872, %v871
        %v876 = vlaneseq
        %v877 = vshrl.u32 %v876, 7
        %v878 = vsub.s32 0, %v877
        %v879 = vrot.slane %v622, %v878
        %v895 = vunpack.c.l.b16 %v596
        %v896 = vunpack.c.l.b16 %v597
        %v897 = vunpack.c.l.b16 %v598
        %v898 = vunpack.c.l.b16 %v599
        %v899 = vunpack.c.l.b16 %v600
        %v900 = vunpack.c.l.b16 %v601
        %v901 = vunpack.c.l.b16 %v602
        %v902 = vunpack.c.l.b16 %v603
        %v903 = vunpack.c.l.b16 %v604
        %v904 = vunpack.c.l.b16 %v605
        %v905 = vunpack.c.l.b16 %v606
        %v906 = vunpack.c.l.b16 %v607
        %v907 = vunpack.c.l.b16 %v608
        %v908 = vunpack.c.l.b16 %v609
        %v909 = vpack.c.b16 %v896, %v895
        %v910 = vpack.c.b16 %v898, %v897
        %v911 = vpack.c.b16 %v900, %v899
        %v912 = vpack.c.b16 %v902, %v901
        %v913 = vpack.c.b16 %v904, %v903
        %v914 = vpack.c.b16 %v906, %v905
        %v915 = vpack.c.b16 %v908, %v907
        %vm922 = vcmask 883712
        %v924 = vsel %vm922, %v873, 0
        %v927 = vsel %vm922, %v874, 0
        %vm929 = vcmask 1045504
        %v931 = vsel %vm929, %v915, 0
        %933 = vmatprep.subr.bf16.mxu0 0
        %934 = vmatpush1.bf16.msra.mxu0 %v909
        %935 = vmatprep.subr.bf16.mxu0 0
        %936 = vmatpush1.bf16.msra.mxu0 %v910
        %937 = vmatprep.subr.bf16.mxu0 0
        %938 = vmatpush1.bf16.msra.mxu0 %v911
        %939 = vmatprep.subr.bf16.mxu0 0
        %940 = vmatpush1.bf16.msra.mxu0 %v912
        %941 = vmatprep.subr.bf16.mxu0 0
        %942 = vmatpush1.bf16.msra.mxu0 %v913
        %943 = vmatprep.subr.bf16.mxu0 0
        %944 = vmatpush1.bf16.msra.mxu0 %v914
        %945 = vmatprep.subr.bf16.mxu0 0
        %946 = vmatpush1.bf16.msra.mxu0 %v931
        %947 = vmatprep.subr.bf16.mxu0 0
        %948 = vmatpush1.bf16.msra.mxu0 0
        %949 = vmatprep.subr.bf16.mxu0 0
        %950 = vmatpush1.bf16.msra.mxu0 0
        %951 = vmatprep.subr.bf16.mxu0 0
        %952 = vmatpush1.bf16.msra.mxu0 0
        %953 = vmatprep.subr.bf16.mxu0 0
        %954 = vmatpush1.bf16.msra.mxu0 0
        %955 = vmatprep.subr.bf16.mxu0 0
        %956 = vmatpush1.bf16.msra.mxu0 0
        %957 = vmatprep.subr.bf16.mxu0 0
        %958 = vmatpush1.bf16.msra.mxu0 0
        %959 = vmatprep.subr.bf16.mxu0 0
        %960 = vmatpush1.bf16.msra.mxu0 0
        %961 = vmatprep.subr.bf16.mxu0 0
        %962 = vmatpush1.bf16.msra.mxu0 0
        %963 = vmatprep.subr.bf16.mxu0 0
        %964 = vmatpush1.bf16.msra.mxu0 0
        %965 = vmatprep.mubr.bf16.mxu0 0
        %966 = vmatmul.mubr.bf16.gmra.mrb[0].mxu0 %v924
        %v967 = vpop.f32.mrb[0].mxu0
        %v968 = vadd.f32 %v879, %v967
        %v969 = vpop.f32.mrb[0].mxu0
        %v970 = vpop.f32.mrb[0].mxu0
        %v971 = vadd.f32 %v879, %v970
        %v972 = vpop.f32.mrb[0].mxu0
        %973 = vmatprep.mubr.bf16.mxu0 0
        %974 = vmatmul.mubr.bf16.gmra.mrb[0].mxu0 %v927
        %v975 = vpop.f32.mrb[0].mxu0
        %v976 = vadd.f32 %v879, %v975
        %v977 = vpop.f32.mrb[0].mxu0
        %v978 = vpop.f32.mrb[0].mxu0
        %v979 = vadd.f32 %v879, %v978
        %v980 = vpop.f32.mrb[0].mxu0
        %981 = vdwg.mxu0
        %v982 = vxor.u32 %v968, 2147483648
        %v983 = vxor.u32 %v971, 2147483648
        %v984 = vxor.u32 %v976, 2147483648
        %v985 = vxor.u32 %v979, 2147483648
        %v986 = vmul.f32 %v982, 1.442695
        %v987 = vpow.pop %v986
        %v988 = vmul.f32 %v983, 1.442695
        %v989 = vpow.pop %v988
        %v990 = vmul.f32 %v984, 1.442695
        %v991 = vpow.pop %v990
        %v992 = vmul.f32 %v985, 1.442695
        %v993 = vpow.pop %v992
        %v994 = vadd.f32 %v987, 1.0
        %v995 = vadd.f32 %v989, 1.0
        %v996 = vadd.f32 %v991, 1.0
        %v997 = vadd.f32 %v993, 1.0
        %v998 = vrcp.pop %v994
        %v999 = vmul.f32 1.0, %v998
        %v1000 = vrcp.pop %v995
        %v1001 = vmul.f32 1.0, %v1000
        %v1002 = vrcp.pop %v996
        %v1003 = vmul.f32 1.0, %v1002
        %v1004 = vrcp.pop %v997
        %v1005 = vmul.f32 1.0, %v1004
        %v1006 = vmul.f32 %v999, %v623
        %v1007 = vmul.f32 %v1001, %v624
        %v1008 = vmul.f32 %v1003, %v625
        %v1009 = vmul.f32 %v1005, %v626
        %v1010 = vpack.c.bf16 %v1007, %v1006
        %v1011 = vpack.c.bf16 %v1009, %v1008
        %1012 = vmatprep.subr.bf16.mxu0 0
        %1013 = vmatpush1.bf16.msra.mxu0 %v1010
        %1014 = vmatprep.subr.bf16.mxu0 0
        %1015 = vmatpush1.bf16.msra.mxu0 0
        %1016 = vmatprep.subr.bf16.mxu0 0
        %1017 = vmatpush1.bf16.msra.mxu0 0
        %1018 = vmatprep.subr.bf16.mxu0 0
        %1019 = vmatpush1.bf16.msra.mxu0 0
        %1020 = vmatprep.subr.bf16.mxu0 0
        %1021 = vmatpush1.bf16.msra.mxu0 0
        %1022 = vmatprep.subr.bf16.mxu0 0
        %1023 = vmatpush1.bf16.msra.mxu0 0
        %1024 = vmatprep.subr.bf16.mxu0 0
        %1025 = vmatpush1.bf16.msra.mxu0 0
        %1026 = vmatprep.subr.bf16.mxu0 0
        %1027 = vmatpush1.bf16.msra.mxu0 0
        %1028 = vmatprep.subr.bf16.mxu0 0
        %1029 = vmatpush1.bf16.msra.mxu0 0
        %1030 = vmatprep.subr.bf16.mxu0 0
        %1031 = vmatpush1.bf16.msra.mxu0 0
        %1032 = vmatprep.subr.bf16.mxu0 0
        %1033 = vmatpush1.bf16.msra.mxu0 0
        %1034 = vmatprep.subr.bf16.mxu0 0
        %1035 = vmatpush1.bf16.msra.mxu0 0
        %1036 = vmatprep.subr.bf16.mxu0 0
        %1037 = vmatpush1.bf16.msra.mxu0 0
        %1038 = vmatprep.subr.bf16.mxu0 0
        %1039 = vmatpush1.bf16.msra.mxu0 0
        %1040 = vmatprep.subr.bf16.mxu0 0
        %1041 = vmatpush1.bf16.msra.mxu0 0
        %1042 = vmatprep.subr.bf16.mxu0 0
        %1043 = vmatpush1.bf16.msra.mxu0 0
        %1044 = vmatprep.mubr.bf16.mxu0 0
        %1045 = vmatmul.mubr.bf16.gmra.mrb[0].mxu0 %v652
        %v1046 = vpop.f32.mrb[0].mxu0
        %v1047 = vadd.f32 0.0, %v1046
        %v1048 = vpop.f32.mrb[0].mxu0
        %v1049 = vpop.f32.mrb[0].mxu0
        %v1050 = vadd.f32 0.0, %v1049
        %v1051 = vpop.f32.mrb[0].mxu0
        %1052 = vdwg.mxu0
        %1053 = vmatprep.subr.bf16.mxu0 0
        %1054 = vmatpush1.bf16.msra.mxu0 %v1011
        %1055 = vmatprep.subr.bf16.mxu0 0
        %1056 = vmatpush1.bf16.msra.mxu0 0
        %1057 = vmatprep.subr.bf16.mxu0 0
        %1058 = vmatpush1.bf16.msra.mxu0 0
        %1059 = vmatprep.subr.bf16.mxu0 0
        %1060 = vmatpush1.bf16.msra.mxu0 0
        %1061 = vmatprep.subr.bf16.mxu0 0
        %1062 = vmatpush1.bf16.msra.mxu0 0
        %1063 = vmatprep.subr.bf16.mxu0 0
        %1064 = vmatpush1.bf16.msra.mxu0 0
        %1065 = vmatprep.subr.bf16.mxu0 0
        %1066 = vmatpush1.bf16.msra.mxu0 0
        %1067 = vmatprep.subr.bf16.mxu0 0
        %1068 = vmatpush1.bf16.msra.mxu0 0
        %1069 = vmatprep.subr.bf16.mxu0 0
        %1070 = vmatpush1.bf16.msra.mxu0 0
        %1071 = vmatprep.subr.bf16.mxu0 0
        %1072 = vmatpush1.bf16.msra.mxu0 0
        %1073 = vmatprep.subr.bf16.mxu0 0
        %1074 = vmatpush1.bf16.msra.mxu0 0
        %1075 = vmatprep.subr.bf16.mxu0 0
        %1076 = vmatpush1.bf16.msra.mxu0 0
        %1077 = vmatprep.subr.bf16.mxu0 0
        %1078 = vmatpush1.bf16.msra.mxu0 0
        %1079 = vmatprep.subr.bf16.mxu0 0
        %1080 = vmatpush1.bf16.msra.mxu0 0
        %1081 = vmatprep.subr.bf16.mxu0 0
        %1082 = vmatpush1.bf16.msra.mxu0 0
        %1083 = vmatprep.subr.bf16.mxu0 0
        %1084 = vmatpush1.bf16.msra.mxu0 0
        %1085 = vmatprep.mubr.bf16.mxu0 0
        %1086 = vmatmul.mubr.bf16.gmra.mrb[0].mxu0 %v696
        %v1087 = vpop.f32.mrb[0].mxu0
        %v1088 = vadd.f32 0.0, %v1087
        %v1089 = vpop.f32.mrb[0].mxu0
        %v1090 = vpop.f32.mrb[0].mxu0
        %v1091 = vadd.f32 0.0, %v1090
        %v1092 = vpop.f32.mrb[0].mxu0
        %1093 = vdwg.mxu0
        %v1094 = vpack.c.bf16 %v1050, %v1047
        %v1095 = vpack.c.bf16 %v1091, %v1088
        %1096 = vmatprep.subr.bf16.mxu0 0
        %1097 = vmatpush1.bf16.msra.mxu0 %v1094
        %1098 = vmatprep.subr.bf16.mxu0 0
        %1099 = vmatpush1.bf16.msra.mxu0 0
        %1100 = vmatprep.subr.bf16.mxu0 0
        %1101 = vmatpush1.bf16.msra.mxu0 0
        %1102 = vmatprep.subr.bf16.mxu0 0
        %1103 = vmatpush1.bf16.msra.mxu0 0
        %1104 = vmatprep.subr.bf16.mxu0 0
        %1105 = vmatpush1.bf16.msra.mxu0 0
        %1106 = vmatprep.subr.bf16.mxu0 0
        %1107 = vmatpush1.bf16.msra.mxu0 0
        %1108 = vmatprep.subr.bf16.mxu0 0
        %1109 = vmatpush1.bf16.msra.mxu0 0
        %1110 = vmatprep.subr.bf16.mxu0 0
        %1111 = vmatpush1.bf16.msra.mxu0 0
        %1112 = vmatprep.subr.bf16.mxu0 0
        %1113 = vmatpush1.bf16.msra.mxu0 0
        %1114 = vmatprep.subr.bf16.mxu0 0
        %1115 = vmatpush1.bf16.msra.mxu0 0
        %1116 = vmatprep.subr.bf16.mxu0 0
        %1117 = vmatpush1.bf16.msra.mxu0 0
        %1118 = vmatprep.subr.bf16.mxu0 0
        %1119 = vmatpush1.bf16.msra.mxu0 0
        %1120 = vmatprep.subr.bf16.mxu0 0
        %1121 = vmatpush1.bf16.msra.mxu0 0
        %1122 = vmatprep.subr.bf16.mxu0 0
        %1123 = vmatpush1.bf16.msra.mxu0 0
        %1124 = vmatprep.subr.bf16.mxu0 0
        %1125 = vmatpush1.bf16.msra.mxu0 0
        %1126 = vmatprep.subr.bf16.mxu0 0
        %1127 = vmatpush1.bf16.msra.mxu0 0
        %1128 = vmatprep.mubr.bf16.mxu0 0
        %1129 = vmatmul.mubr.bf16.gmra.mrb[0].mxu0 %v652
        %v1130 = vpop.f32.mrb[0].mxu0
        %v1131 = vadd.f32 0.0, %v1130
        %v1132 = vpop.f32.mrb[0].mxu0
        %v1133 = vpop.f32.mrb[0].mxu0
        %v1134 = vadd.f32 0.0, %v1133
        %v1135 = vpop.f32.mrb[0].mxu0
        %1136 = vdwg.mxu0
        %1137 = vmatprep.subr.bf16.mxu0 0
        %1138 = vmatpush1.bf16.msra.mxu0 %v1095
        %1139 = vmatprep.subr.bf16.mxu0 0
        %1140 = vmatpush1.bf16.msra.mxu0 0
        %1141 = vmatprep.subr.bf16.mxu0 0
        %1142 = vmatpush1.bf16.msra.mxu0 0
        %1143 = vmatprep.subr.bf16.mxu0 0
        %1144 = vmatpush1.bf16.msra.mxu0 0
        %1145 = vmatprep.subr.bf16.mxu0 0
        %1146 = vmatpush1.bf16.msra.mxu0 0
        %1147 = vmatprep.subr.bf16.mxu0 0
        %1148 = vmatpush1.bf16.msra.mxu0 0
        %1149 = vmatprep.subr.bf16.mxu0 0
        %1150 = vmatpush1.bf16.msra.mxu0 0
        %1151 = vmatprep.subr.bf16.mxu0 0
        %1152 = vmatpush1.bf16.msra.mxu0 0
        %1153 = vmatprep.subr.bf16.mxu0 0
        %1154 = vmatpush1.bf16.msra.mxu0 0
        %1155 = vmatprep.subr.bf16.mxu0 0
        %1156 = vmatpush1.bf16.msra.mxu0 0
        %1157 = vmatprep.subr.bf16.mxu0 0
        %1158 = vmatpush1.bf16.msra.mxu0 0
        %1159 = vmatprep.subr.bf16.mxu0 0
        %1160 = vmatpush1.bf16.msra.mxu0 0
        %1161 = vmatprep.subr.bf16.mxu0 0
        %1162 = vmatpush1.bf16.msra.mxu0 0
        %1163 = vmatprep.subr.bf16.mxu0 0
        %1164 = vmatpush1.bf16.msra.mxu0 0
        %1165 = vmatprep.subr.bf16.mxu0 0
        %1166 = vmatpush1.bf16.msra.mxu0 0
        %1167 = vmatprep.subr.bf16.mxu0 0
        %1168 = vmatpush1.bf16.msra.mxu0 0
        %1169 = vmatprep.mubr.bf16.mxu0 0
        %1170 = vmatmul.mubr.bf16.gmra.mrb[0].mxu0 %v696
        %v1171 = vpop.f32.mrb[0].mxu0
        %v1172 = vadd.f32 0.0, %v1171
        %v1173 = vpop.f32.mrb[0].mxu0
        %v1174 = vpop.f32.mrb[0].mxu0
        %v1175 = vadd.f32 0.0, %v1174
        %v1176 = vpop.f32.mrb[0].mxu0
        %1177 = vdwg.mxu0
        %v1178 = vmul.f32 %v1131, 2.0
        %v1179 = vmul.f32 %v1134, 2.0
        %v1180 = vmul.f32 %v1172, 2.0
        %v1181 = vmul.f32 %v1175, 2.0
        %v1182 = vsub.f32 %v1178, %v1006
        %v1183 = vsub.f32 %v1179, %v1007
        %v1184 = vsub.f32 %v1180, %v1008
        %v1185 = vsub.f32 %v1181, %v1009
        %1190 = vrot.lane.b32.xlu0 %v1047, 32
        %v1191 = vpop.permute.xlu0 %1190
        %1192 = vrot.lane.b32.xlu0 %v1050, 32
        %v1193 = vpop.permute.xlu0 %1192
        %1194 = vrot.lane.b32.xlu0 %v1088, 32
        %v1195 = vpop.permute.xlu0 %1194
        %1196 = vrot.lane.b32.xlu0 %v1091, 32
        %v1197 = vpop.permute.xlu0 %1196
        %1206 = vrot.lane.b32.xlu0 %v1182, 64
        %v1207 = vpop.permute.xlu0 %1206
        %1208 = vrot.lane.b32.xlu0 %v1183, 64
        %v1209 = vpop.permute.xlu0 %1208
        %1210 = vrot.lane.b32.xlu0 %v1184, 64
        %v1211 = vpop.permute.xlu0 %1210
        %1212 = vrot.lane.b32.xlu0 %v1185, 64
        %v1213 = vpop.permute.xlu0 %1212
        %vm1218 = vcmask 261120
        %v1219 = vsel %vm1218, %v1006, %v1191
        %v1220 = vsel %vm1218, %v1007, %v1193
        %v1221 = vsel %vm1218, %v1008, %v1195
        %v1222 = vsel %vm1218, %v1009, %v1197
        %vm1223 = vcmask 523264
        %v1224 = vsel %vm1223, %v1219, %v1207
        %v1225 = vsel %vm1223, %v1220, %v1209
        %v1226 = vsel %vm1223, %v1221, %v1211
        %v1227 = vsel %vm1223, %v1222, %v1213
        %v1228 = vpack.c.bf16 %v1225, %v1224
        %v1229 = vpack.c.bf16 %v1227, %v1226
        %v1242 = vunpack.c.l.b16 %v610
        %v1243 = vunpack.c.l.b16 %v611
        %v1244 = vunpack.c.l.b16 %v612
        %v1245 = vunpack.c.l.b16 %v613
        %v1246 = vunpack.c.l.b16 %v614
        %v1247 = vunpack.c.l.b16 %v615
        %v1248 = vunpack.c.l.b16 %v616
        %v1249 = vunpack.c.l.b16 %v617
        %v1250 = vunpack.c.l.b16 %v618
        %v1251 = vunpack.c.l.b16 %v619
        %v1252 = vunpack.c.l.b16 %v620
        %v1253 = vunpack.c.l.b16 %v621
        %v1254 = vpack.c.b16 %v1243, %v1242
        %v1255 = vpack.c.b16 %v1245, %v1244
        %v1256 = vpack.c.b16 %v1247, %v1246
        %v1257 = vpack.c.b16 %v1249, %v1248
        %v1258 = vpack.c.b16 %v1251, %v1250
        %v1259 = vpack.c.b16 %v1253, %v1252
        %vm1266 = vcmask 785408
        %v1268 = vsel %vm1266, %v1228, 0
        %v1271 = vsel %vm1266, %v1229, 0
        %1273 = vmatprep.subr.bf16.mxu0 0
        %1274 = vmatpush1.bf16.msra.mxu0 %v1254
        %1275 = vmatprep.subr.bf16.mxu0 0
        %1276 = vmatpush1.bf16.msra.mxu0 %v1255
        %1277 = vmatprep.subr.bf16.mxu0 0
        %1278 = vmatpush1.bf16.msra.mxu0 %v1256
        %1279 = vmatprep.subr.bf16.mxu0 0
        %1280 = vmatpush1.bf16.msra.mxu0 %v1257
        %1281 = vmatprep.subr.bf16.mxu0 0
        %1282 = vmatpush1.bf16.msra.mxu0 %v1258
        %1283 = vmatprep.subr.bf16.mxu0 0
        %1284 = vmatpush1.bf16.msra.mxu0 %v1259
        %1285 = vmatprep.subr.bf16.mxu0 0
        %1286 = vmatpush1.bf16.msra.mxu0 0
        %1287 = vmatprep.subr.bf16.mxu0 0
        %1288 = vmatpush1.bf16.msra.mxu0 0
        %1289 = vmatprep.subr.bf16.mxu0 0
        %1290 = vmatpush1.bf16.msra.mxu0 0
        %1291 = vmatprep.subr.bf16.mxu0 0
        %1292 = vmatpush1.bf16.msra.mxu0 0
        %1293 = vmatprep.subr.bf16.mxu0 0
        %1294 = vmatpush1.bf16.msra.mxu0 0
        %1295 = vmatprep.subr.bf16.mxu0 0
        %1296 = vmatpush1.bf16.msra.mxu0 0
        %1297 = vmatprep.subr.bf16.mxu0 0
        %1298 = vmatpush1.bf16.msra.mxu0 0
        %1299 = vmatprep.subr.bf16.mxu0 0
        %1300 = vmatpush1.bf16.msra.mxu0 0
        %1301 = vmatprep.subr.bf16.mxu0 0
        %1302 = vmatpush1.bf16.msra.mxu0 0
        %1303 = vmatprep.subr.bf16.mxu0 0
        %1304 = vmatpush1.bf16.msra.mxu0 0
        %1305 = vmatprep.mubr.bf16.mxu0 0
        %1306 = vmatmul.mubr.bf16.gmra.mrb[0].mxu0 %v1268
        %v1307 = vpop.f32.mrb[0].mxu0
        %v1308 = vadd.f32 0.0, %v1307
        %v1309 = vpop.f32.mrb[0].mxu0
        %v1310 = vpop.f32.mrb[0].mxu0
        %v1311 = vadd.f32 0.0, %v1310
        %v1312 = vpop.f32.mrb[0].mxu0
        %1313 = vmatprep.mubr.bf16.mxu0 0
        %1314 = vmatmul.mubr.bf16.gmra.mrb[0].mxu0 %v1271
        %v1315 = vpop.f32.mrb[0].mxu0
        %v1316 = vadd.f32 0.0, %v1315
        %v1317 = vpop.f32.mrb[0].mxu0
        %v1318 = vpop.f32.mrb[0].mxu0
        %v1319 = vadd.f32 0.0, %v1318
        %v1320 = vpop.f32.mrb[0].mxu0
        %1321 = vdwg.mxu0
        %1326 = vrot.lane.b32.xlu0 %v1308, 64
        %v1327 = vpop.permute.xlu0 %1326
        %1328 = vrot.lane.b32.xlu0 %v1311, 64
        %v1329 = vpop.permute.xlu0 %1328
        %1330 = vrot.lane.b32.xlu0 %v1316, 64
        %v1331 = vpop.permute.xlu0 %1330
        %1332 = vrot.lane.b32.xlu0 %v1319, 64
        %v1333 = vpop.permute.xlu0 %1332
        %v1338 = vadd.f32 %v968, %v1327
        %v1339 = vadd.f32 %v971, %v1329
        %v1340 = vadd.f32 %v976, %v1331
        %v1341 = vadd.f32 %v979, %v1333
        %v1342 = vtanh.pop %v1338
        %v1343 = vtanh.pop %v1339
        %v1344 = vtanh.pop %v1340
        %v1345 = vtanh.pop %v1341
        %1346 = vrot.lane.b32.xlu0 %v623, 32
        %v1347 = vpop.permute.xlu0 %1346
        %1348 = vrot.lane.b32.xlu0 %v624, 32
        %v1349 = vpop.permute.xlu0 %1348
        %1350 = vrot.lane.b32.xlu0 %v625, 32
        %v1351 = vpop.permute.xlu0 %1350
        %1352 = vrot.lane.b32.xlu0 %v626, 32
        %v1353 = vpop.permute.xlu0 %1352
        %v1358 = vmul.f32 %v999, %v1347
        %v1359 = vmul.f32 %v1001, %v1349
        %v1360 = vmul.f32 %v1003, %v1351
        %v1361 = vmul.f32 %v1005, %v1353
        %v1362 = vsub.f32 1.0, %v999
        %v1363 = vsub.f32 1.0, %v1001
        %v1364 = vsub.f32 1.0, %v1003
        %v1365 = vsub.f32 1.0, %v1005
        %1370 = vrot.lane.b32.xlu0 %v1342, 96
        %v1371 = vpop.permute.xlu0 %1370
        %1372 = vrot.lane.b32.xlu0 %v1343, 96
        %v1373 = vpop.permute.xlu0 %1372
        %1374 = vrot.lane.b32.xlu0 %v1344, 96
        %v1375 = vpop.permute.xlu0 %1374
        %1376 = vrot.lane.b32.xlu0 %v1345, 96
        %v1377 = vpop.permute.xlu0 %1376
        %v1382 = vmul.f32 %v1362, %v1371
        %v1383 = vmul.f32 %v1363, %v1373
        %v1384 = vmul.f32 %v1364, %v1375
        %v1385 = vmul.f32 %v1365, %v1377
        %v1386 = vadd.f32 %v1358, %v1382
        %v1387 = vadd.f32 %v1359, %v1383
        %v1388 = vadd.f32 %v1360, %v1384
        %v1389 = vadd.f32 %v1361, %v1385
        %1394 = vrot.lane.b32.xlu0 %v1386, 96
        %v1395 = vpop.permute.xlu0 %1394
        %1396 = vrot.lane.b32.xlu0 %v1387, 96
        %v1397 = vpop.permute.xlu0 %1396
        %1398 = vrot.lane.b32.xlu0 %v1388, 96
        %v1399 = vpop.permute.xlu0 %1398
        %1400 = vrot.lane.b32.xlu0 %v1389, 96
        %v1401 = vpop.permute.xlu0 %1400
        %1406 = vst.msk [vmem:[#allocation2] sm:$0xff] %vm1218, %v1395
        %1407 = vst.msk [vmem:[#allocation2 + $0x8] sm:$0xff] %vm1218, %v1397
        %1408 = vst.msk [vmem:[#allocation2 + $0x10] sm:$0xff] %vm1218, %v1399
        %1409 = vst.msk [vmem:[#allocation2 + $0x18] sm:$0xff] %vm1218, %v1401
        %v1410 = vld [vmem:[#allocation13] sm:$0xf]
        %v1411 = vld [vmem:[#allocation13 + $0x4] sm:$0xf]
        %v1412 = vld [vmem:[#allocation13 + $0x8] sm:$0xf]
        %v1413 = vld [vmem:[#allocation13 + $0xc] sm:$0xf]
        %v1414 = vld [vmem:[#allocation13 + $0x10] sm:$0xf]
        %v1415 = vld [vmem:[#allocation13 + $0x14] sm:$0xf]
        %v1416 = vld [vmem:[#allocation13 + $0x18] sm:$0xf]
        %v1417 = vld [vmem:[#allocation13 + $0x1c] sm:$0xf]
        %v1418 = vld [vmem:[#allocation13 + $0x20] sm:$0xf]
        %v1419 = vld [vmem:[#allocation13 + $0x24] sm:$0xf]
        %v1420 = vld [vmem:[#allocation13 + $0x28] sm:$0xf]
        %v1421 = vld [vmem:[#allocation13 + $0x2c] sm:$0xf]
        %v1422 = vld [vmem:[#allocation13 + $0x30] sm:$0xf]
        %v1423 = vld [vmem:[#allocation13 + $0x34] sm:$0xf]
        %v1424 = vld [vmem:[#allocation13 + $0x38] sm:$0xf]
        %v1425 = vld [vmem:[#allocation13 + $0x3c] sm:$0xf]
        %v1426 = vld [vmem:[#allocation13 + $0x40] sm:$0xf]
        %v1427 = vld [vmem:[#allocation13 + $0x44] sm:$0xf]
        %v1428 = vld [vmem:[#allocation13 + $0x48] sm:$0xf]
        %v1429 = vld [vmem:[#allocation13 + $0x4c] sm:$0xf]
        %v1430 = vld [vmem:[#allocation13 + $0x50] sm:$0xf]
        %v1431 = vld [vmem:[#allocation13 + $0x54] sm:$0xf]
        %v1432 = vld [vmem:[#allocation13 + $0x58] sm:$0xf]
        %v1433 = vld [vmem:[#allocation13 + $0x5c] sm:$0xf]
        %v1434 = vld [vmem:[#allocation15] sm:$0xf]
        %v1435 = vld [vmem:[#allocation15 + $0x4] sm:$0xf]
        %v1436 = vld [vmem:[#allocation15 + $0x8] sm:$0xf]
        %v1437 = vld [vmem:[#allocation15 + $0xc] sm:$0xf]
        %v1438 = vld [vmem:[#allocation15 + $0x10] sm:$0xf]
        %v1439 = vld [vmem:[#allocation15 + $0x14] sm:$0xf]
        %v1440 = vld [vmem:[#allocation15 + $0x18] sm:$0xf]
        %v1441 = vld [vmem:[#allocation15 + $0x1c] sm:$0xf]
        %v1442 = vld [vmem:[#allocation15 + $0x20] sm:$0xf]
        %v1443 = vld [vmem:[#allocation15 + $0x24] sm:$0xf]
        %v1444 = vld [vmem:[#allocation15 + $0x28] sm:$0xf]
        %v1445 = vld [vmem:[#allocation15 + $0x2c] sm:$0xf]
        %v1446 = vld [vmem:[#allocation16] sm:$0x1]
        %s1447 = scalar_lea.vmem [#allocation2], 32
        %v1448 = vld [vmem:[%s1447] sm:$0xff]
        %v1449 = vld [vmem:[%s1447 + $0x8] sm:$0xff]
        %v1450 = vld [vmem:[%s1447 + $0x10] sm:$0xff]
        %v1451 = vld [vmem:[%s1447 + $0x18] sm:$0xff]
        %1456 = vrot.lane.b32.xlu0 %v1448, 32
        %v1457 = vpop.permute.xlu0 %1456
        %1458 = vrot.lane.b32.xlu0 %v1449, 32
        %v1459 = vpop.permute.xlu0 %1458
        %1460 = vrot.lane.b32.xlu0 %v1450, 32
        %v1461 = vpop.permute.xlu0 %1460
        %1462 = vrot.lane.b32.xlu0 %v1451, 32
        %v1463 = vpop.permute.xlu0 %1462
        %v1468 = vsel %vm1218, %v1395, %v1457
        %v1469 = vsel %vm1218, %v1397, %v1459
        %v1470 = vsel %vm1218, %v1399, %v1461
        %v1471 = vsel %vm1218, %v1401, %v1463
        %v1472 = vpack.c.bf16 %v1469, %v1468
        %v1473 = vpack.c.bf16 %v1471, %v1470
        %1474 = vmatprep.subr.bf16.mxu0 0
        %1475 = vmatpush1.bf16.msra.mxu0 %v1472
        %1476 = vmatprep.subr.bf16.mxu0 0
        %1477 = vmatpush1.bf16.msra.mxu0 0
        %1478 = vmatprep.subr.bf16.mxu0 0
        %1479 = vmatpush1.bf16.msra.mxu0 0
        %1480 = vmatprep.subr.bf16.mxu0 0
        %1481 = vmatpush1.bf16.msra.mxu0 0
        %1482 = vmatprep.subr.bf16.mxu0 0
        %1483 = vmatpush1.bf16.msra.mxu0 0
        %1484 = vmatprep.subr.bf16.mxu0 0
        %1485 = vmatpush1.bf16.msra.mxu0 0
        %1486 = vmatprep.subr.bf16.mxu0 0
        %1487 = vmatpush1.bf16.msra.mxu0 0
        %1488 = vmatprep.subr.bf16.mxu0 0
        %1489 = vmatpush1.bf16.msra.mxu0 0
        %1490 = vmatprep.subr.bf16.mxu0 0
        %1491 = vmatpush1.bf16.msra.mxu0 0
        %1492 = vmatprep.subr.bf16.mxu0 0
        %1493 = vmatpush1.bf16.msra.mxu0 0
        %1494 = vmatprep.subr.bf16.mxu0 0
        %1495 = vmatpush1.bf16.msra.mxu0 0
        %1496 = vmatprep.subr.bf16.mxu0 0
        %1497 = vmatpush1.bf16.msra.mxu0 0
        %1498 = vmatprep.subr.bf16.mxu0 0
        %1499 = vmatpush1.bf16.msra.mxu0 0
        %1500 = vmatprep.subr.bf16.mxu0 0
        %1501 = vmatpush1.bf16.msra.mxu0 0
        %1502 = vmatprep.subr.bf16.mxu0 0
        %1503 = vmatpush1.bf16.msra.mxu0 0
        %1504 = vmatprep.subr.bf16.mxu0 0
        %1505 = vmatpush1.bf16.msra.mxu0 0
        %1506 = vmatprep.mubr.bf16.mxu0 0
        %1507 = vmatmul.mubr.bf16.gmra.mrb[0].mxu0 %v652
        %v1508 = vpop.f32.mrb[0].mxu0
        %v1509 = vadd.f32 0.0, %v1508
        %v1510 = vpop.f32.mrb[0].mxu0
        %v1511 = vpop.f32.mrb[0].mxu0
        %v1512 = vadd.f32 0.0, %v1511
        %v1513 = vpop.f32.mrb[0].mxu0
        %1514 = vdwg.mxu0
        %1515 = vmatprep.subr.bf16.mxu0 0
        %1516 = vmatpush1.bf16.msra.mxu0 %v1473
        %1517 = vmatprep.subr.bf16.mxu0 0
        %1518 = vmatpush1.bf16.msra.mxu0 0
        %1519 = vmatprep.subr.bf16.mxu0 0
        %1520 = vmatpush1.bf16.msra.mxu0 0
        %1521 = vmatprep.subr.bf16.mxu0 0
        %1522 = vmatpush1.bf16.msra.mxu0 0
        %1523 = vmatprep.subr.bf16.mxu0 0
        %1524 = vmatpush1.bf16.msra.mxu0 0
        %1525 = vmatprep.subr.bf16.mxu0 0
        %1526 = vmatpush1.bf16.msra.mxu0 0
        %1527 = vmatprep.subr.bf16.mxu0 0
        %1528 = vmatpush1.bf16.msra.mxu0 0
        %1529 = vmatprep.subr.bf16.mxu0 0
        %1530 = vmatpush1.bf16.msra.mxu0 0
        %1531 = vmatprep.subr.bf16.mxu0 0
        %1532 = vmatpush1.bf16.msra.mxu0 0
        %1533 = vmatprep.subr.bf16.mxu0 0
        %1534 = vmatpush1.bf16.msra.mxu0 0
        %1535 = vmatprep.subr.bf16.mxu0 0
        %1536 = vmatpush1.bf16.msra.mxu0 0
        %1537 = vmatprep.subr.bf16.mxu0 0
        %1538 = vmatpush1.bf16.msra.mxu0 0
        %1539 = vmatprep.subr.bf16.mxu0 0
        %1540 = vmatpush1.bf16.msra.mxu0 0
        %1541 = vmatprep.subr.bf16.mxu0 0
        %1542 = vmatpush1.bf16.msra.mxu0 0
        %1543 = vmatprep.subr.bf16.mxu0 0
        %1544 = vmatpush1.bf16.msra.mxu0 0
        %1545 = vmatprep.subr.bf16.mxu0 0
        %1546 = vmatpush1.bf16.msra.mxu0 0
        %1547 = vmatprep.mubr.bf16.mxu0 0
        %1548 = vmatmul.mubr.bf16.gmra.mrb[0].mxu0 %v696
        %v1549 = vpop.f32.mrb[0].mxu0
        %v1550 = vadd.f32 0.0, %v1549
        %v1551 = vpop.f32.mrb[0].mxu0
        %v1552 = vpop.f32.mrb[0].mxu0
        %v1553 = vadd.f32 0.0, %v1552
        %v1554 = vpop.f32.mrb[0].mxu0
        %1555 = vdwg.mxu0
        %v1556 = vpack.c.bf16 %v1512, %v1509
        %v1557 = vpack.c.bf16 %v1553, %v1550
        %1558 = vmatprep.subr.bf16.mxu0 0
        %1559 = vmatpush1.bf16.msra.mxu0 %v1556
        %1560 = vmatprep.subr.bf16.mxu0 0
        %1561 = vmatpush1.bf16.msra.mxu0 0
        %1562 = vmatprep.subr.bf16.mxu0 0
        %1563 = vmatpush1.bf16.msra.mxu0 0
        %1564 = vmatprep.subr.bf16.mxu0 0
        %1565 = vmatpush1.bf16.msra.mxu0 0
        %1566 = vmatprep.subr.bf16.mxu0 0
        %1567 = vmatpush1.bf16.msra.mxu0 0
        %1568 = vmatprep.subr.bf16.mxu0 0
        %1569 = vmatpush1.bf16.msra.mxu0 0
        %1570 = vmatprep.subr.bf16.mxu0 0
        %1571 = vmatpush1.bf16.msra.mxu0 0
        %1572 = vmatprep.subr.bf16.mxu0 0
        %1573 = vmatpush1.bf16.msra.mxu0 0
        %1574 = vmatprep.subr.bf16.mxu0 0
        %1575 = vmatpush1.bf16.msra.mxu0 0
        %1576 = vmatprep.subr.bf16.mxu0 0
        %1577 = vmatpush1.bf16.msra.mxu0 0
        %1578 = vmatprep.subr.bf16.mxu0 0
        %1579 = vmatpush1.bf16.msra.mxu0 0
        %1580 = vmatprep.subr.bf16.mxu0 0
        %1581 = vmatpush1.bf16.msra.mxu0 0
        %1582 = vmatprep.subr.bf16.mxu0 0
        %1583 = vmatpush1.bf16.msra.mxu0 0
        %1584 = vmatprep.subr.bf16.mxu0 0
        %1585 = vmatpush1.bf16.msra.mxu0 0
        %1586 = vmatprep.subr.bf16.mxu0 0
        %1587 = vmatpush1.bf16.msra.mxu0 0
        %1588 = vmatprep.subr.bf16.mxu0 0
        %1589 = vmatpush1.bf16.msra.mxu0 0
        %1590 = vmatprep.mubr.bf16.mxu0 0
        %1591 = vmatmul.mubr.bf16.gmra.mrb[0].mxu0 %v652
        %v1592 = vpop.f32.mrb[0].mxu0
        %v1593 = vadd.f32 0.0, %v1592
        %v1594 = vpop.f32.mrb[0].mxu0
        %v1595 = vpop.f32.mrb[0].mxu0
        %v1596 = vadd.f32 0.0, %v1595
        %v1597 = vpop.f32.mrb[0].mxu0
        %1598 = vdwg.mxu0
        %1599 = vmatprep.subr.bf16.mxu0 0
        %1600 = vmatpush1.bf16.msra.mxu0 %v1557
        %1601 = vmatprep.subr.bf16.mxu0 0
        %1602 = vmatpush1.bf16.msra.mxu0 0
        %1603 = vmatprep.subr.bf16.mxu0 0
        %1604 = vmatpush1.bf16.msra.mxu0 0
        %1605 = vmatprep.subr.bf16.mxu0 0
        %1606 = vmatpush1.bf16.msra.mxu0 0
        %1607 = vmatprep.subr.bf16.mxu0 0
        %1608 = vmatpush1.bf16.msra.mxu0 0
        %1609 = vmatprep.subr.bf16.mxu0 0
        %1610 = vmatpush1.bf16.msra.mxu0 0
        %1611 = vmatprep.subr.bf16.mxu0 0
        %1612 = vmatpush1.bf16.msra.mxu0 0
        %1613 = vmatprep.subr.bf16.mxu0 0
        %1614 = vmatpush1.bf16.msra.mxu0 0
        %1615 = vmatprep.subr.bf16.mxu0 0
        %1616 = vmatpush1.bf16.msra.mxu0 0
        %1617 = vmatprep.subr.bf16.mxu0 0
        %1618 = vmatpush1.bf16.msra.mxu0 0
        %1619 = vmatprep.subr.bf16.mxu0 0
        %1620 = vmatpush1.bf16.msra.mxu0 0
        %1621 = vmatprep.subr.bf16.mxu0 0
        %1622 = vmatpush1.bf16.msra.mxu0 0
        %1623 = vmatprep.subr.bf16.mxu0 0
        %1624 = vmatpush1.bf16.msra.mxu0 0
        %1625 = vmatprep.subr.bf16.mxu0 0
        %1626 = vmatpush1.bf16.msra.mxu0 0
        %1627 = vmatprep.subr.bf16.mxu0 0
        %1628 = vmatpush1.bf16.msra.mxu0 0
        %1629 = vmatprep.subr.bf16.mxu0 0
        %1630 = vmatpush1.bf16.msra.mxu0 0
        %1631 = vmatprep.mubr.bf16.mxu0 0
        %1632 = vmatmul.mubr.bf16.gmra.mrb[0].mxu0 %v696
        %v1633 = vpop.f32.mrb[0].mxu0
        %v1634 = vadd.f32 0.0, %v1633
        %v1635 = vpop.f32.mrb[0].mxu0
        %v1636 = vpop.f32.mrb[0].mxu0
        %v1637 = vadd.f32 0.0, %v1636
        %v1638 = vpop.f32.mrb[0].mxu0
        %1639 = vdwg.mxu0
        %v1640 = vmul.f32 %v1593, 2.0
        %v1641 = vmul.f32 %v1596, 2.0
        %v1642 = vmul.f32 %v1634, 2.0
        %v1643 = vmul.f32 %v1637, 2.0
        %v1644 = vsub.f32 %v1640, %v1468
        %v1645 = vsub.f32 %v1641, %v1469
        %v1646 = vsub.f32 %v1642, %v1470
        %v1647 = vsub.f32 %v1643, %v1471
        %1652 = vrot.lane.b32.xlu0 %v1509, 64
        %v1653 = vpop.permute.xlu0 %1652
        %1654 = vrot.lane.b32.xlu0 %v1512, 64
        %v1655 = vpop.permute.xlu0 %1654
        %1656 = vrot.lane.b32.xlu0 %v1550, 64
        %v1657 = vpop.permute.xlu0 %1656
        %1658 = vrot.lane.b32.xlu0 %v1553, 64
        %v1659 = vpop.permute.xlu0 %1658
        %v1664 = vsel %vm1223, %v1468, %v1653
        %v1665 = vsel %vm1223, %v1469, %v1655
        %v1666 = vsel %vm1223, %v1470, %v1657
        %v1667 = vsel %vm1223, %v1471, %v1659
        %v1668 = vpack.c.bf16 %v1665, %v1664
        %v1669 = vpack.c.bf16 %v1645, %v1644
        %v1670 = vpack.c.bf16 %v1667, %v1666
        %v1671 = vpack.c.bf16 %v1647, %v1646
        %v1673 = vlaneseq
        %v1674 = vshrl.u32 %v1673, 7
        %v1675 = vsub.s32 0, %v1674
        %v1676 = vrot.slane %v1446, %v1675
        %v1702 = vunpack.c.l.b16 %v1410
        %v1703 = vunpack.c.l.b16 %v1411
        %v1704 = vunpack.c.l.b16 %v1412
        %v1705 = vunpack.c.l.b16 %v1413
        %v1706 = vunpack.c.l.b16 %v1414
        %v1707 = vunpack.c.l.b16 %v1415
        %v1708 = vunpack.c.l.b16 %v1416
        %v1709 = vunpack.c.l.b16 %v1417
        %v1710 = vunpack.c.l.b16 %v1418
        %v1711 = vunpack.c.l.b16 %v1419
        %v1712 = vunpack.c.l.b16 %v1420
        %v1713 = vunpack.c.l.b16 %v1421
        %v1714 = vunpack.c.l.b16 %v1422
        %v1715 = vunpack.c.l.b16 %v1423
        %v1716 = vunpack.c.l.b16 %v1424
        %v1717 = vunpack.c.l.b16 %v1425
        %v1718 = vunpack.c.l.b16 %v1426
        %v1719 = vunpack.c.l.b16 %v1427
        %v1720 = vunpack.c.l.b16 %v1428
        %v1721 = vunpack.c.l.b16 %v1429
        %v1722 = vunpack.c.l.b16 %v1430
        %v1723 = vunpack.c.l.b16 %v1431
        %v1724 = vunpack.c.l.b16 %v1432
        %v1725 = vunpack.c.l.b16 %v1433
        %v1726 = vpack.c.b16 %v1703, %v1702
        %v1727 = vpack.c.b16 %v1705, %v1704
        %v1728 = vpack.c.b16 %v1707, %v1706
        %v1729 = vpack.c.b16 %v1709, %v1708
        %v1730 = vpack.c.b16 %v1711, %v1710
        %v1731 = vpack.c.b16 %v1713, %v1712
        %v1732 = vpack.c.b16 %v1715, %v1714
        %v1733 = vpack.c.b16 %v1717, %v1716
        %v1734 = vpack.c.b16 %v1719, %v1718
        %v1735 = vpack.c.b16 %v1721, %v1720
        %v1736 = vpack.c.b16 %v1723, %v1722
        %v1737 = vpack.c.b16 %v1725, %v1724
        %v1751 = vsel %vm1223, %v1669, 0
        %v1754 = vsel %vm1223, %v1671, 0
        %1756 = vmatprep.subr.bf16.mxu0 0
        %1757 = vmatpush1.bf16.msra.mxu0 %v1726
        %1758 = vmatprep.subr.bf16.mxu0 0
        %1759 = vmatpush1.bf16.msra.mxu0 %v1727
        %1760 = vmatprep.subr.bf16.mxu0 0
        %1761 = vmatpush1.bf16.msra.mxu0 %v1728
        %1762 = vmatprep.subr.bf16.mxu0 0
        %1763 = vmatpush1.bf16.msra.mxu0 %v1729
        %1764 = vmatprep.subr.bf16.mxu0 0
        %1765 = vmatpush1.bf16.msra.mxu0 %v1730
        %1766 = vmatprep.subr.bf16.mxu0 0
        %1767 = vmatpush1.bf16.msra.mxu0 %v1731
        %1768 = vmatprep.subr.bf16.mxu0 0
        %1769 = vmatpush1.bf16.msra.mxu0 %v1732
        %1770 = vmatprep.subr.bf16.mxu0 0
        %1771 = vmatpush1.bf16.msra.mxu0 %v1733
        %1772 = vmatprep.subr.bf16.mxu0 0
        %1773 = vmatpush1.bf16.msra.mxu0 %v1734
        %1774 = vmatprep.subr.bf16.mxu0 0
        %1775 = vmatpush1.bf16.msra.mxu0 %v1735
        %1776 = vmatprep.subr.bf16.mxu0 0
        %1777 = vmatpush1.bf16.msra.mxu0 %v1736
        %1778 = vmatprep.subr.bf16.mxu0 0
        %1779 = vmatpush1.bf16.msra.mxu0 %v1737
        %1780 = vmatprep.subr.bf16.mxu0 0
        %1781 = vmatpush1.bf16.msra.mxu0 0
        %1782 = vmatprep.subr.bf16.mxu0 0
        %1783 = vmatpush1.bf16.msra.mxu0 0
        %1784 = vmatprep.subr.bf16.mxu0 0
        %1785 = vmatpush1.bf16.msra.mxu0 0
        %1786 = vmatprep.subr.bf16.mxu0 0
        %1787 = vmatpush1.bf16.msra.mxu0 0
        %1788 = vmatprep.mubr.bf16.mxu0 %v1751
        %1789 = vmatmul.mubr.bf16.gmra.mrb[0].mxu0 %v1668
        %v1790 = vpop.f32.mrb[0].mxu0
        %v1791 = vadd.f32 %v1676, %v1790
        %v1792 = vpop.f32.mrb[0].mxu0
        %v1793 = vpop.f32.mrb[0].mxu0
        %v1794 = vadd.f32 %v1676, %v1793
        %v1795 = vpop.f32.mrb[0].mxu0
        %1796 = vmatprep.mubr.bf16.mxu0 %v1754
        %1797 = vmatmul.mubr.bf16.gmra.mrb[0].mxu0 %v1670
        %v1798 = vpop.f32.mrb[0].mxu0
        %v1799 = vadd.f32 %v1676, %v1798
        %v1800 = vpop.f32.mrb[0].mxu0
        %v1801 = vpop.f32.mrb[0].mxu0
        %v1802 = vadd.f32 %v1676, %v1801
        %v1803 = vpop.f32.mrb[0].mxu0
        %1804 = vdwg.mxu0
        %v1805 = vxor.u32 %v1791, 2147483648
        %v1806 = vxor.u32 %v1794, 2147483648
        %v1807 = vxor.u32 %v1799, 2147483648
        %v1808 = vxor.u32 %v1802, 2147483648
        %v1809 = vmul.f32 %v1805, 1.442695
        %v1810 = vpow.pop %v1809
        %v1811 = vmul.f32 %v1806, 1.442695
        %v1812 = vpow.pop %v1811
        %v1813 = vmul.f32 %v1807, 1.442695
        %v1814 = vpow.pop %v1813
        %v1815 = vmul.f32 %v1808, 1.442695
        %v1816 = vpow.pop %v1815
        %v1817 = vadd.f32 %v1810, 1.0
        %v1818 = vadd.f32 %v1812, 1.0
        %v1819 = vadd.f32 %v1814, 1.0
        %v1820 = vadd.f32 %v1816, 1.0
        %v1821 = vrcp.pop %v1817
        %v1822 = vmul.f32 1.0, %v1821
        %v1823 = vrcp.pop %v1818
        %v1824 = vmul.f32 1.0, %v1823
        %v1825 = vrcp.pop %v1819
        %v1826 = vmul.f32 1.0, %v1825
        %v1827 = vrcp.pop %v1820
        %v1828 = vmul.f32 1.0, %v1827
        %v1829 = vmul.f32 %v1822, %v1448
        %v1830 = vmul.f32 %v1824, %v1449
        %v1831 = vmul.f32 %v1826, %v1450
        %v1832 = vmul.f32 %v1828, %v1451
        %v1833 = vpack.c.bf16 %v1830, %v1829
        %v1834 = vpack.c.bf16 %v1832, %v1831
        %1835 = vmatprep.subr.bf16.mxu0 0
        %1836 = vmatpush1.bf16.msra.mxu0 %v1833
        %1837 = vmatprep.subr.bf16.mxu0 0
        %1838 = vmatpush1.bf16.msra.mxu0 0
        %1839 = vmatprep.subr.bf16.mxu0 0
        %1840 = vmatpush1.bf16.msra.mxu0 0
        %1841 = vmatprep.subr.bf16.mxu0 0
        %1842 = vmatpush1.bf16.msra.mxu0 0
        %1843 = vmatprep.subr.bf16.mxu0 0
        %1844 = vmatpush1.bf16.msra.mxu0 0
        %1845 = vmatprep.subr.bf16.mxu0 0
        %1846 = vmatpush1.bf16.msra.mxu0 0
        %1847 = vmatprep.subr.bf16.mxu0 0
        %1848 = vmatpush1.bf16.msra.mxu0 0
        %1849 = vmatprep.subr.bf16.mxu0 0
        %1850 = vmatpush1.bf16.msra.mxu0 0
        %1851 = vmatprep.subr.bf16.mxu0 0
        %1852 = vmatpush1.bf16.msra.mxu0 0
        %1853 = vmatprep.subr.bf16.mxu0 0
        %1854 = vmatpush1.bf16.msra.mxu0 0
        %1855 = vmatprep.subr.bf16.mxu0 0
        %1856 = vmatpush1.bf16.msra.mxu0 0
        %1857 = vmatprep.subr.bf16.mxu0 0
        %1858 = vmatpush1.bf16.msra.mxu0 0
        %1859 = vmatprep.subr.bf16.mxu0 0
        %1860 = vmatpush1.bf16.msra.mxu0 0
        %1861 = vmatprep.subr.bf16.mxu0 0
        %1862 = vmatpush1.bf16.msra.mxu0 0
        %1863 = vmatprep.subr.bf16.mxu0 0
        %1864 = vmatpush1.bf16.msra.mxu0 0
        %1865 = vmatprep.subr.bf16.mxu0 0
        %1866 = vmatpush1.bf16.msra.mxu0 0
        %1867 = vmatprep.mubr.bf16.mxu0 0
        %1868 = vmatmul.mubr.bf16.gmra.mrb[0].mxu0 %v652
        %v1869 = vpop.f32.mrb[0].mxu0
        %v1870 = vadd.f32 0.0, %v1869
        %v1871 = vpop.f32.mrb[0].mxu0
        %v1872 = vpop.f32.mrb[0].mxu0
        %v1873 = vadd.f32 0.0, %v1872
        %v1874 = vpop.f32.mrb[0].mxu0
        %1875 = vdwg.mxu0
        %1876 = vmatprep.subr.bf16.mxu0 0
        %1877 = vmatpush1.bf16.msra.mxu0 %v1834
        %1878 = vmatprep.subr.bf16.mxu0 0
        %1879 = vmatpush1.bf16.msra.mxu0 0
        %1880 = vmatprep.subr.bf16.mxu0 0
        %1881 = vmatpush1.bf16.msra.mxu0 0
        %1882 = vmatprep.subr.bf16.mxu0 0
        %1883 = vmatpush1.bf16.msra.mxu0 0
        %1884 = vmatprep.subr.bf16.mxu0 0
        %1885 = vmatpush1.bf16.msra.mxu0 0
        %1886 = vmatprep.subr.bf16.mxu0 0
        %1887 = vmatpush1.bf16.msra.mxu0 0
        %1888 = vmatprep.subr.bf16.mxu0 0
        %1889 = vmatpush1.bf16.msra.mxu0 0
        %1890 = vmatprep.subr.bf16.mxu0 0
        %1891 = vmatpush1.bf16.msra.mxu0 0
        %1892 = vmatprep.subr.bf16.mxu0 0
        %1893 = vmatpush1.bf16.msra.mxu0 0
        %1894 = vmatprep.subr.bf16.mxu0 0
        %1895 = vmatpush1.bf16.msra.mxu0 0
        %1896 = vmatprep.subr.bf16.mxu0 0
        %1897 = vmatpush1.bf16.msra.mxu0 0
        %1898 = vmatprep.subr.bf16.mxu0 0
        %1899 = vmatpush1.bf16.msra.mxu0 0
        %1900 = vmatprep.subr.bf16.mxu0 0
        %1901 = vmatpush1.bf16.msra.mxu0 0
        %1902 = vmatprep.subr.bf16.mxu0 0
        %1903 = vmatpush1.bf16.msra.mxu0 0
        %1904 = vmatprep.subr.bf16.mxu0 0
        %1905 = vmatpush1.bf16.msra.mxu0 0
        %1906 = vmatprep.subr.bf16.mxu0 0
        %1907 = vmatpush1.bf16.msra.mxu0 0
        %1908 = vmatprep.mubr.bf16.mxu0 0
        %1909 = vmatmul.mubr.bf16.gmra.mrb[0].mxu0 %v696
        %v1910 = vpop.f32.mrb[0].mxu0
        %v1911 = vadd.f32 0.0, %v1910
        %v1912 = vpop.f32.mrb[0].mxu0
        %v1913 = vpop.f32.mrb[0].mxu0
        %v1914 = vadd.f32 0.0, %v1913
        %v1915 = vpop.f32.mrb[0].mxu0
        %1916 = vdwg.mxu0
        %v1917 = vpack.c.bf16 %v1873, %v1870
        %v1918 = vpack.c.bf16 %v1914, %v1911
        %1919 = vmatprep.subr.bf16.mxu0 0
        %1920 = vmatpush1.bf16.msra.mxu0 %v1917
        %1921 = vmatprep.subr.bf16.mxu0 0
        %1922 = vmatpush1.bf16.msra.mxu0 0
        %1923 = vmatprep.subr.bf16.mxu0 0
        %1924 = vmatpush1.bf16.msra.mxu0 0
        %1925 = vmatprep.subr.bf16.mxu0 0
        %1926 = vmatpush1.bf16.msra.mxu0 0
        %1927 = vmatprep.subr.bf16.mxu0 0
        %1928 = vmatpush1.bf16.msra.mxu0 0
        %1929 = vmatprep.subr.bf16.mxu0 0
        %1930 = vmatpush1.bf16.msra.mxu0 0
        %1931 = vmatprep.subr.bf16.mxu0 0
        %1932 = vmatpush1.bf16.msra.mxu0 0
        %1933 = vmatprep.subr.bf16.mxu0 0
        %1934 = vmatpush1.bf16.msra.mxu0 0
        %1935 = vmatprep.subr.bf16.mxu0 0
        %1936 = vmatpush1.bf16.msra.mxu0 0
        %1937 = vmatprep.subr.bf16.mxu0 0
        %1938 = vmatpush1.bf16.msra.mxu0 0
        %1939 = vmatprep.subr.bf16.mxu0 0
        %1940 = vmatpush1.bf16.msra.mxu0 0
        %1941 = vmatprep.subr.bf16.mxu0 0
        %1942 = vmatpush1.bf16.msra.mxu0 0
        %1943 = vmatprep.subr.bf16.mxu0 0
        %1944 = vmatpush1.bf16.msra.mxu0 0
        %1945 = vmatprep.subr.bf16.mxu0 0
        %1946 = vmatpush1.bf16.msra.mxu0 0
        %1947 = vmatprep.subr.bf16.mxu0 0
        %1948 = vmatpush1.bf16.msra.mxu0 0
        %1949 = vmatprep.subr.bf16.mxu0 0
        %1950 = vmatpush1.bf16.msra.mxu0 0
        %1951 = vmatprep.mubr.bf16.mxu0 0
        %1952 = vmatmul.mubr.bf16.gmra.mrb[0].mxu0 %v652
        %v1953 = vpop.f32.mrb[0].mxu0
        %v1954 = vadd.f32 0.0, %v1953
        %v1955 = vpop.f32.mrb[0].mxu0
        %v1956 = vpop.f32.mrb[0].mxu0
        %v1957 = vadd.f32 0.0, %v1956
        %v1958 = vpop.f32.mrb[0].mxu0
        %1959 = vdwg.mxu0
        %1960 = vmatprep.subr.bf16.mxu0 0
        %1961 = vmatpush1.bf16.msra.mxu0 %v1918
        %1962 = vmatprep.subr.bf16.mxu0 0
        %1963 = vmatpush1.bf16.msra.mxu0 0
        %1964 = vmatprep.subr.bf16.mxu0 0
        %1965 = vmatpush1.bf16.msra.mxu0 0
        %1966 = vmatprep.subr.bf16.mxu0 0
        %1967 = vmatpush1.bf16.msra.mxu0 0
        %1968 = vmatprep.subr.bf16.mxu0 0
        %1969 = vmatpush1.bf16.msra.mxu0 0
        %1970 = vmatprep.subr.bf16.mxu0 0
        %1971 = vmatpush1.bf16.msra.mxu0 0
        %1972 = vmatprep.subr.bf16.mxu0 0
        %1973 = vmatpush1.bf16.msra.mxu0 0
        %1974 = vmatprep.subr.bf16.mxu0 0
        %1975 = vmatpush1.bf16.msra.mxu0 0
        %1976 = vmatprep.subr.bf16.mxu0 0
        %1977 = vmatpush1.bf16.msra.mxu0 0
        %1978 = vmatprep.subr.bf16.mxu0 0
        %1979 = vmatpush1.bf16.msra.mxu0 0
        %1980 = vmatprep.subr.bf16.mxu0 0
        %1981 = vmatpush1.bf16.msra.mxu0 0
        %1982 = vmatprep.subr.bf16.mxu0 0
        %1983 = vmatpush1.bf16.msra.mxu0 0
        %1984 = vmatprep.subr.bf16.mxu0 0
        %1985 = vmatpush1.bf16.msra.mxu0 0
        %1986 = vmatprep.subr.bf16.mxu0 0
        %1987 = vmatpush1.bf16.msra.mxu0 0
        %1988 = vmatprep.subr.bf16.mxu0 0
        %1989 = vmatpush1.bf16.msra.mxu0 0
        %1990 = vmatprep.subr.bf16.mxu0 0
        %1991 = vmatpush1.bf16.msra.mxu0 0
        %1992 = vmatprep.mubr.bf16.mxu0 0
        %1993 = vmatmul.mubr.bf16.gmra.mrb[0].mxu0 %v696
        %v1994 = vpop.f32.mrb[0].mxu0
        %v1995 = vadd.f32 0.0, %v1994
        %v1996 = vpop.f32.mrb[0].mxu0
        %v1997 = vpop.f32.mrb[0].mxu0
        %v1998 = vadd.f32 0.0, %v1997
        %v1999 = vpop.f32.mrb[0].mxu0
        %2000 = vdwg.mxu0
        %v2001 = vmul.f32 %v1954, 2.0
        %v2002 = vmul.f32 %v1957, 2.0
        %v2003 = vmul.f32 %v1995, 2.0
        %v2004 = vmul.f32 %v1998, 2.0
        %v2005 = vsub.f32 %v2001, %v1829
        %v2006 = vsub.f32 %v2002, %v1830
        %v2007 = vsub.f32 %v2003, %v1831
        %v2008 = vsub.f32 %v2004, %v1832
        %2013 = vrot.lane.b32.xlu0 %v1870, 32
        %v2014 = vpop.permute.xlu0 %2013
        %2015 = vrot.lane.b32.xlu0 %v1873, 32
        %v2016 = vpop.permute.xlu0 %2015
        %2017 = vrot.lane.b32.xlu0 %v1911, 32
        %v2018 = vpop.permute.xlu0 %2017
        %2019 = vrot.lane.b32.xlu0 %v1914, 32
        %v2020 = vpop.permute.xlu0 %2019
        %2029 = vrot.lane.b32.xlu0 %v2005, 64
        %v2030 = vpop.permute.xlu0 %2029
        %2031 = vrot.lane.b32.xlu0 %v2006, 64
        %v2032 = vpop.permute.xlu0 %2031
        %2033 = vrot.lane.b32.xlu0 %v2007, 64
        %v2034 = vpop.permute.xlu0 %2033
        %2035 = vrot.lane.b32.xlu0 %v2008, 64
        %v2036 = vpop.permute.xlu0 %2035
        %v2041 = vsel %vm1218, %v1829, %v2014
        %v2042 = vsel %vm1218, %v1830, %v2016
        %v2043 = vsel %vm1218, %v1831, %v2018
        %v2044 = vsel %vm1218, %v1832, %v2020
        %v2045 = vsel %vm1223, %v2041, %v2030
        %v2046 = vsel %vm1223, %v2042, %v2032
        %v2047 = vsel %vm1223, %v2043, %v2034
        %v2048 = vsel %vm1223, %v2044, %v2036
        %v2049 = vpack.c.bf16 %v2046, %v2045
        %v2050 = vpack.c.bf16 %v2048, %v2047
        %v2063 = vunpack.c.l.b16 %v1434
        %v2064 = vunpack.c.l.b16 %v1435
        %v2065 = vunpack.c.l.b16 %v1436
        %v2066 = vunpack.c.l.b16 %v1437
        %v2067 = vunpack.c.l.b16 %v1438
        %v2068 = vunpack.c.l.b16 %v1439
        %v2069 = vunpack.c.l.b16 %v1440
        %v2070 = vunpack.c.l.b16 %v1441
        %v2071 = vunpack.c.l.b16 %v1442
        %v2072 = vunpack.c.l.b16 %v1443
        %v2073 = vunpack.c.l.b16 %v1444
        %v2074 = vunpack.c.l.b16 %v1445
        %v2075 = vpack.c.b16 %v2064, %v2063
        %v2076 = vpack.c.b16 %v2066, %v2065
        %v2077 = vpack.c.b16 %v2068, %v2067
        %v2078 = vpack.c.b16 %v2070, %v2069
        %v2079 = vpack.c.b16 %v2072, %v2071
        %v2080 = vpack.c.b16 %v2074, %v2073
        %v2088 = vsel %vm1266, %v2049, 0
        %v2091 = vsel %vm1266, %v2050, 0
        %2093 = vmatprep.subr.bf16.mxu0 0
        %2094 = vmatpush1.bf16.msra.mxu0 %v2075
        %2095 = vmatprep.subr.bf16.mxu0 0
        %2096 = vmatpush1.bf16.msra.mxu0 %v2076
        %2097 = vmatprep.subr.bf16.mxu0 0
        %2098 = vmatpush1.bf16.msra.mxu0 %v2077
        %2099 = vmatprep.subr.bf16.mxu0 0
        %2100 = vmatpush1.bf16.msra.mxu0 %v2078
        %2101 = vmatprep.subr.bf16.mxu0 0
        %2102 = vmatpush1.bf16.msra.mxu0 %v2079
        %2103 = vmatprep.subr.bf16.mxu0 0
        %2104 = vmatpush1.bf16.msra.mxu0 %v2080
        %2105 = vmatprep.subr.bf16.mxu0 0
        %2106 = vmatpush1.bf16.msra.mxu0 0
        %2107 = vmatprep.subr.bf16.mxu0 0
        %2108 = vmatpush1.bf16.msra.mxu0 0
        %2109 = vmatprep.subr.bf16.mxu0 0
        %2110 = vmatpush1.bf16.msra.mxu0 0
        %2111 = vmatprep.subr.bf16.mxu0 0
        %2112 = vmatpush1.bf16.msra.mxu0 0
        %2113 = vmatprep.subr.bf16.mxu0 0
        %2114 = vmatpush1.bf16.msra.mxu0 0
        %2115 = vmatprep.subr.bf16.mxu0 0
        %2116 = vmatpush1.bf16.msra.mxu0 0
        %2117 = vmatprep.subr.bf16.mxu0 0
        %2118 = vmatpush1.bf16.msra.mxu0 0
        %2119 = vmatprep.subr.bf16.mxu0 0
        %2120 = vmatpush1.bf16.msra.mxu0 0
        %2121 = vmatprep.subr.bf16.mxu0 0
        %2122 = vmatpush1.bf16.msra.mxu0 0
        %2123 = vmatprep.subr.bf16.mxu0 0
        %2124 = vmatpush1.bf16.msra.mxu0 0
        %2125 = vmatprep.mubr.bf16.mxu0 0
        %2126 = vmatmul.mubr.bf16.gmra.mrb[0].mxu0 %v2088
        %v2127 = vpop.f32.mrb[0].mxu0
        %v2128 = vadd.f32 0.0, %v2127
        %v2129 = vpop.f32.mrb[0].mxu0
        %v2130 = vpop.f32.mrb[0].mxu0
        %v2131 = vadd.f32 0.0, %v2130
        %v2132 = vpop.f32.mrb[0].mxu0
        %2133 = vmatprep.mubr.bf16.mxu0 0
        %2134 = vmatmul.mubr.bf16.gmra.mrb[0].mxu0 %v2091
        %v2135 = vpop.f32.mrb[0].mxu0
        %v2136 = vadd.f32 0.0, %v2135
        %v2137 = vpop.f32.mrb[0].mxu0
        %v2138 = vpop.f32.mrb[0].mxu0
        %v2139 = vadd.f32 0.0, %v2138
        %v2140 = vpop.f32.mrb[0].mxu0
        %2141 = vdwg.mxu0
        %2146 = vrot.lane.b32.xlu0 %v2128, 64
        %v2147 = vpop.permute.xlu0 %2146
        %2148 = vrot.lane.b32.xlu0 %v2131, 64
        %v2149 = vpop.permute.xlu0 %2148
        %2150 = vrot.lane.b32.xlu0 %v2136, 64
        %v2151 = vpop.permute.xlu0 %2150
        %2152 = vrot.lane.b32.xlu0 %v2139, 64
        %v2153 = vpop.permute.xlu0 %2152
        %v2158 = vadd.f32 %v1791, %v2147
        %v2159 = vadd.f32 %v1794, %v2149
        %v2160 = vadd.f32 %v1799, %v2151
        %v2161 = vadd.f32 %v1802, %v2153
        %v2162 = vtanh.pop %v2158
        %v2163 = vtanh.pop %v2159
        %v2164 = vtanh.pop %v2160
        %v2165 = vtanh.pop %v2161
        %v2166 = vmul.f32 %v1822, %v1457
        %v2167 = vmul.f32 %v1824, %v1459
        %v2168 = vmul.f32 %v1826, %v1461
        %v2169 = vmul.f32 %v1828, %v1463
        %v2170 = vsub.f32 1.0, %v1822
        %v2171 = vsub.f32 1.0, %v1824
        %v2172 = vsub.f32 1.0, %v1826
        %v2173 = vsub.f32 1.0, %v1828
        %2178 = vrot.lane.b32.xlu0 %v2162, 96
        %v2179 = vpop.permute.xlu0 %2178
        %2180 = vrot.lane.b32.xlu0 %v2163, 96
        %v2181 = vpop.permute.xlu0 %2180
        %2182 = vrot.lane.b32.xlu0 %v2164, 96
        %v2183 = vpop.permute.xlu0 %2182
        %2184 = vrot.lane.b32.xlu0 %v2165, 96
        %v2185 = vpop.permute.xlu0 %2184
        %v2190 = vmul.f32 %v2170, %v2179
        %v2191 = vmul.f32 %v2171, %v2181
        %v2192 = vmul.f32 %v2172, %v2183
        %v2193 = vmul.f32 %v2173, %v2185
        %v2194 = vadd.f32 %v2166, %v2190
        %v2195 = vadd.f32 %v2167, %v2191
        %v2196 = vadd.f32 %v2168, %v2192
        %v2197 = vadd.f32 %v2169, %v2193
        %2202 = vrot.lane.b32.xlu0 %v2194, 96
        %v2203 = vpop.permute.xlu0 %2202
        %2204 = vrot.lane.b32.xlu0 %v2195, 96
        %v2205 = vpop.permute.xlu0 %2204
        %2206 = vrot.lane.b32.xlu0 %v2196, 96
        %v2207 = vpop.permute.xlu0 %2206
        %2208 = vrot.lane.b32.xlu0 %v2197, 96
        %v2209 = vpop.permute.xlu0 %2208
        %2214 = vst.msk [vmem:[%s1447] sm:$0xff] %vm1218, %v2203
        %2215 = vst.msk [vmem:[%s1447 + $0x8] sm:$0xff] %vm1218, %v2205
        %2216 = vst.msk [vmem:[%s1447 + $0x10] sm:$0xff] %vm1218, %v2207
        %2217 = vst.msk [vmem:[%s1447 + $0x18] sm:$0xff] %vm1218, %v2209
        %v2218 = vpack.c.bf16 %v2195, %v2194
        %v2219 = vpack.c.bf16 %v2197, %v2196
        %v2220 = vld [vmem:[#allocation18] sm:$0xf]
        %v2221 = vld [vmem:[#allocation18 + $0x4] sm:$0xf]
        %v2222 = vld [vmem:[#allocation18 + $0x8] sm:$0xf]
        %v2223 = vld [vmem:[#allocation18 + $0xc] sm:$0xf]
        %v2224 = vld [vmem:[#allocation19] sm:$0x1]
        %v2226 = vlaneseq
        %v2227 = vshrl.u32 %v2226, 7
        %v2228 = vsub.s32 0, %v2227
        %v2229 = vrot.slane %v2224, %v2228
        %2233 = vrot.lane.b32.xlu0 %v2218, 96
        %v2234 = vpop.permute.xlu0 %2233
        %2235 = vrot.lane.b32.xlu0 %v2219, 96
        %v2236 = vpop.permute.xlu0 %2235
        %v2241 = vunpack.c.l.b16 %v2220
        %v2242 = vunpack.c.l.b16 %v2221
        %v2243 = vunpack.c.l.b16 %v2222
        %v2244 = vunpack.c.l.b16 %v2223
        %v2245 = vpack.c.b16 %v2242, %v2241
        %v2246 = vpack.c.b16 %v2244, %v2243
        %v2250 = vsel %vm1218, %v2234, 0
        %v2253 = vsel %vm1218, %v2236, 0
        %2255 = vmatprep.subr.bf16.mxu0 0
        %2256 = vmatpush1.bf16.msra.mxu0 %v2245
        %2257 = vmatprep.subr.bf16.mxu0 0
        %2258 = vmatpush1.bf16.msra.mxu0 %v2246
        %2259 = vmatprep.subr.bf16.mxu0 0
        %2260 = vmatpush1.bf16.msra.mxu0 0
        %2261 = vmatprep.subr.bf16.mxu0 0
        %2262 = vmatpush1.bf16.msra.mxu0 0
        %2263 = vmatprep.subr.bf16.mxu0 0
        %2264 = vmatpush1.bf16.msra.mxu0 0
        %2265 = vmatprep.subr.bf16.mxu0 0
        %2266 = vmatpush1.bf16.msra.mxu0 0
        %2267 = vmatprep.subr.bf16.mxu0 0
        %2268 = vmatpush1.bf16.msra.mxu0 0
        %2269 = vmatprep.subr.bf16.mxu0 0
        %2270 = vmatpush1.bf16.msra.mxu0 0
        %2271 = vmatprep.subr.bf16.mxu0 0
        %2272 = vmatpush1.bf16.msra.mxu0 0
        %2273 = vmatprep.subr.bf16.mxu0 0
        %2274 = vmatpush1.bf16.msra.mxu0 0
        %2275 = vmatprep.subr.bf16.mxu0 0
        %2276 = vmatpush1.bf16.msra.mxu0 0
        %2277 = vmatprep.subr.bf16.mxu0 0
        %2278 = vmatpush1.bf16.msra.mxu0 0
        %2279 = vmatprep.subr.bf16.mxu0 0
        %2280 = vmatpush1.bf16.msra.mxu0 0
        %2281 = vmatprep.subr.bf16.mxu0 0
        %2282 = vmatpush1.bf16.msra.mxu0 0
        %2283 = vmatprep.subr.bf16.mxu0 0
        %2284 = vmatpush1.bf16.msra.mxu0 0
        %2285 = vmatprep.subr.bf16.mxu0 0
        %2286 = vmatpush1.bf16.msra.mxu0 0
        %2287 = vmatprep.mubr.bf16.mxu0 0
        %2288 = vmatmul.mubr.bf16.gmra.mrb[0].mxu0 %v2250
        %v2289 = vpop.f32.mrb[0].mxu0
        %v2290 = vadd.f32 %v2229, %v2289
        %v2291 = vpop.f32.mrb[0].mxu0
        %v2292 = vpop.f32.mrb[0].mxu0
        %v2293 = vadd.f32 %v2229, %v2292
        %v2294 = vpop.f32.mrb[0].mxu0
        %2295 = vmatprep.mubr.bf16.mxu0 0
        %2296 = vmatmul.mubr.bf16.gmra.mrb[0].mxu0 %v2253
        %v2297 = vpop.f32.mrb[0].mxu0
        %v2298 = vadd.f32 %v2229, %v2297
        %v2299 = vpop.f32.mrb[0].mxu0
        %v2300 = vpop.f32.mrb[0].mxu0
        %v2301 = vadd.f32 %v2229, %v2300
        %v2302 = vpop.f32.mrb[0].mxu0
        %2303 = vdwg.mxu0
        %2304 = vst.msk [vmem:[%s555] sm:$0xff] %vm643, %v2290
        %2305 = vst.msk [vmem:[%s555 + $0x8] sm:$0xff] %vm643, %v2293
        %2306 = vst.msk [vmem:[%s555 + $0x10] sm:$0xff] %vm643, %v2298
        %2307 = vst.msk [vmem:[%s555 + $0x18] sm:$0xff] %vm643, %v2301
        %2308 = vst.msk [vmem:[#allocation3] sm:$0xff] %vm643, %v2290
        %2309 = vst.msk [vmem:[#allocation3 + $0x8] sm:$0xff] %vm643, %v2293
        %2310 = vst.msk [vmem:[#allocation3 + $0x10] sm:$0xff] %vm643, %v2298
        %2311 = vst.msk [vmem:[#allocation3 + $0x18] sm:$0xff] %vm643, %v2301
        %s2312 = sand.u32 %s276, 1
        %s2313 = scalar_lea.sflag [#allocation6], %s2312
        %s2314 = sand.u32 %s276, 1
        %s2315 = smul.addr %s2314, 32
        %s2316 = scalar_lea.vmem [#allocation21], %s2315
        // Predicated region
        $region105: #{dcrnn_next_time_pred.3} parent=59 // pred_check
          %p2317 = pneg %p286
        $region106: #{dcrnn_next_time_pred.3} parent=59 // pred_check_branch
          %2319 = sbr.rel (%p2317) target = $region108
        $region107: #{dcrnn_next_time_pred.3} parent=59 // pred_region
          #allocation25 [shape = 'u32[6]{0}', space=smem, size = 0x18, scoped, tag = 'DMA stride descriptor']
          %s2320 = smul.u32 2, %s36
          %s2322 = ssub.s32 512, 512
          %2323 = vsyncadd %s2313, %s2322
          %s2324 = smul.addr %s37, 2
          %s2325 = smul.addr %s2320, 16
          %s2326 = sadd.s32 %s2324, %s2325
          %s2327 = smul.addr %s2326, 128
          %s2328 = scalar_lea.hbm %s10, %s2327
          %s2330 = sshll.u32 1, 14
          %s2331 = sxor.u32 4294967295, %s2330
          %s2334 = sshll.u32 7, 18
          %s2335 = sxor.u32 4294967295, %s2334
          %s2336 = sand.u32 0, %s2335
          %s2338 = sor.u32 %s2336, 0
          %s2340 = sshll.u32 3, 24
          %s2341 = sxor.u32 4294967295, %s2340
          %s2342 = sand.u32 %s2338, %s2341
          %s2344 = sor.u32 %s2342, 0
          %s2345 = sshll.u32 %s2316, 4
          %s2346 = int_to_ptr.vmem [resolvable:$true] %s2345
          %2352 = sst [smem:[#allocation25]] 256
          %s2353 = scalar_lea.smem [#allocation25], 1
          %2354 = sst [smem:[%s2353]] 2048
          %s2355 = scalar_lea.smem [#allocation25], 2
          %2356 = sst [smem:[%s2355]] 2
          %s2357 = scalar_lea.smem [#allocation25], 3
          %2358 = sst [smem:[%s2357]] 128
          %s2359 = scalar_lea.smem [#allocation25], 4
          %2360 = sst [smem:[%s2359]] 128
          %s2361 = scalar_lea.smem [#allocation25], 5
          %2362 = sst [smem:[%s2361]] 8
          %2364 = dma.general %s2346, 512, %s2328, %s2313, [#allocation24], [#allocation25], %s2344, 0
        $region108: #{dcrnn_next_time_pred.3} parent=59 // pred_fallthru
          _
      $region60: #{dcrnn_next_time_pred.3} parent=5 // pred_fallthru
        _
      %p2365 = scmp.le.s32.totalorder 2, %s27
      // Predicated region
      $region109: #{dcrnn_next_time_pred.3} parent=5 // pred_check
        %p2366 = pneg %p2365
      $region110: #{dcrnn_next_time_pred.3} parent=5 // pred_check_branch
        %2368 = sbr.rel (%p2366) target = $region112
      $region111: #{dcrnn_next_time_pred.3} parent=5 // pred_region
        %s2369 = ssub.s32 %s27, 2
        // Predicated region
        $region113: #{dcrnn_next_time_pred.3} parent=111 // pred_check
          %p2370 = pneg %p292
        $region114: #{dcrnn_next_time_pred.3} parent=111 // pred_check_branch
          %2372 = sbr.rel (%p2370) target = $region116
        $region115: #{dcrnn_next_time_pred.3} parent=111 // pred_region
          %s2373 = sand.u32 %s277, 1
          %s2374 = scalar_lea.sflag [#allocation6], %s2373
          %s2375 = sand.u32 %s277, 1
          %s2376 = smul.addr %s2375, 32
          %s2377 = scalar_lea.vmem [#allocation21], %s2376
          %2378 = dma.done %s2374, 512
        $region116: #{dcrnn_next_time_pred.3} parent=111 // pred_fallthru
          _
      $region112: #{dcrnn_next_time_pred.3} parent=5 // pred_fallthru
        _
    $region6: #{dcrnn_next_time_pred.3} parent=1 // loop_footer
      %s31 = sadd.s32 1, %s27
    $region7: #{dcrnn_next_time_pred.3} parent=1 // loop_footer_branch
      %26 = sbr.rel target = $region3
    $region8: #{dcrnn_next_time_pred.3} parent=1 // loop_exit
      _
    %2379 = vsyncpa [#allocation5], 1
    %s2380 = scalar_lea.sflag [#allocation5], 1
    %2381 = vsyncpa %s2380, 1
    %2382 = vsyncpa [#allocation8], 1
    %2383 = vsyncpa [#allocation11], 1
    %2384 = vsyncpa [#allocation14], 1
    %2385 = vsyncpa [#allocation17], 1
    %2386 = vsyncpa [#allocation20], 1
    %2387 = vsyncpa [#allocation6], 1
    %s2388 = scalar_lea.sflag [#allocation6], 1
    %2389 = vsyncpa %s2388, 1

</llo_original>
